<compile_context>
chip_gen: v5e
topology: v5e:2x2
jax: 0.10.0
libtpu: 0.0.40
codegen_flags: <defaults>
</compile_context>

<pallas_src>
import functools

import jax
import jax.numpy as jnp
from jax import lax
from jax.experimental import pallas as pl
from jax.experimental.pallas import tpu as pltpu


# -------------------------------- fused kernel ------------------------------ #

def _sppf_kernel(x_ref, w1_ref, s1_ref, b1_ref, w2_ref, s2_ref, b2_ref,
                 o_ref, pad_ref, *, H, W, K):
    """Whole SPPF block for one batch element, fully VMEM-resident.

    x_ref  : (1, H, W, C1)        bf16 input (NHWC)
    w1_ref : (C1, C_)             bf16 cv1 weight (1x1 conv as channel matmul)
    s1/b1  : (1, C_)              f32 folded-BN scale / bias for cv1
    w2_ref : (4*C_, C2)           bf16 cv2 weight
    s2/b2  : (1, C2)              f32 folded-BN scale / bias for cv2
    o_ref  : (1, H, W, C2)        f32 output
    pad_ref: (H+2P, W+2P, C_)     f32 VMEM scratch (-inf halo for the maxpools)
    """
    C1 = x_ref.shape[-1]
    Cm = w1_ref.shape[-1]
    C2 = w2_ref.shape[-1]
    P = K // 2

    # ---- cv1: 1x1 conv (bf16 MXU matmul, f32 accumulate) + BN + SiLU --------
    x = x_ref[0].reshape(H * W, C1)
    y = jnp.dot(x, w1_ref[...], preferred_element_type=jnp.float32)
    y = y * s1_ref[...] + b1_ref[...]
    x1 = (y * jax.nn.sigmoid(y)).reshape(H, W, Cm)                # f32

    # ---- m: KxK, stride-1, pad K//2 max-pool (PyTorch pads with -inf) -------
    def maxpool(t):
        pad_ref[...] = jnp.full(pad_ref.shape, -jnp.inf, jnp.float32)
        pad_ref[P:P + H, P:P + W, :] = t
        xp = pad_ref[...]
        # separable max: rows first (untiled axis), then columns (sublanes)
        r = xp[0:H, :, :]
        for dy in range(1, K):
            r = jnp.maximum(r, xp[dy:dy + H, :, :])
        c = r[:, 0:W, :]
        for dx in range(1, K):
            c = jnp.maximum(c, r[:, dx:dx + W, :])
        return c

    y1 = maxpool(x1)
    y2 = maxpool(y1)
    y3 = maxpool(y2)

    # ---- cv2 on concat([x, y1, y2, y3], C): ONE deep-K MXU matmul -----------
    cat = jnp.concatenate([x1, y1, y2, y3], axis=-1).reshape(H * W, 4 * Cm)
    z = jnp.dot(cat.astype(jnp.bfloat16), w2_ref[...],
                preferred_element_type=jnp.float32)
    z = z * s2_ref[...] + b2_ref[...]
    z = z * jax.nn.sigmoid(z)
    o_ref[...] = z.reshape(1, H, W, C2).astype(o_ref.dtype)


# --------------------------------- wrapper ---------------------------------- #

def sppf_forward(x_nchw, params, k=5):
    """x_nchw: (N, C1, H, W) f32 -> (N, C2, H, W) f32.  One fused Pallas call."""
    w1, s1, b1 = params["w1"], params["s1"], params["b1"]
    w2, s2, b2 = params["w2"], params["s2"], params["b2"]
    N, C1, H, W = x_nchw.shape
    Cm = w1.shape[-1]
    C2 = w2.shape[-1]
    P = k // 2

    x = jnp.transpose(x_nchw, (0, 2, 3, 1)).astype(jnp.bfloat16)   # NCHW -> NHWC
    kern = functools.partial(_sppf_kernel, H=H, W=W, K=k)
    out = pl.pallas_call(
        kern,
        out_shape=jax.ShapeDtypeStruct((N, H, W, C2), jnp.float32),
        grid=(N,),
        in_specs=[
            pl.BlockSpec((1, H, W, C1), lambda n: (n, 0, 0, 0)),
            pl.BlockSpec((C1, Cm), lambda n: (0, 0)),
            pl.BlockSpec((1, Cm), lambda n: (0, 0)),
            pl.BlockSpec((1, Cm), lambda n: (0, 0)),
            pl.BlockSpec((4 * Cm, C2), lambda n: (0, 0)),
            pl.BlockSpec((1, C2), lambda n: (0, 0)),
            pl.BlockSpec((1, C2), lambda n: (0, 0)),
        ],
        out_specs=pl.BlockSpec((1, H, W, C2), lambda n: (n, 0, 0, 0)),
        scratch_shapes=[pltpu.VMEM((H + 2 * P, W + 2 * P, Cm), jnp.float32)],
        compiler_params=pltpu.CompilerParams(
            dimension_semantics=("parallel",)),
    )(x,
      w1.astype(jnp.bfloat16), s1.reshape(1, -1), b1.reshape(1, -1),
      w2.astype(jnp.bfloat16), s2.reshape(1, -1), b2.reshape(1, -1))
    return jnp.transpose(out, (0, 3, 1, 2))                        # NHWC -> NCHW


# ------------------------ deterministic parameters --------------------------- #

class _KeyGen:
    def __init__(self, seed):
        self._key = jax.random.PRNGKey(seed)

    def __call__(self):
        self._key, sub = jax.random.split(self._key)
        return sub


def _bn_fold(kg, c, eps=1e-3):
    gamma = jax.random.uniform(kg(), (c,), minval=0.8, maxval=1.2)
    beta = jax.random.normal(kg(), (c,)) * 0.05
    mean = jax.random.normal(kg(), (c,)) * 0.05
    var = jax.random.uniform(kg(), (c,), minval=0.8, maxval=1.2)
    scale = gamma / jnp.sqrt(var + eps)
    bias = beta - mean * scale
    return scale.astype(jnp.float32), bias.astype(jnp.float32)


def init_sppf_params(seed, c1, c2):
    c_ = c1 // 2
    kg = _KeyGen(seed)
    w1 = jax.random.normal(kg(), (c1, c_), jnp.float32) / jnp.sqrt(c1)
    s1, b1 = _bn_fold(kg, c_)
    w2 = jax.random.normal(kg(), (4 * c_, c2), jnp.float32) / jnp.sqrt(4 * c_)
    s2, b2 = _bn_fold(kg, c2)
    return dict(w1=w1, s1=s1, b1=b1, w2=w2, s2=s2, b2=b2)


# ----------------------------- pure-JAX reference ---------------------------- #
# Same precision policy as the kernel (bf16 matmul operands, f32 accumulation /
# epilogue) so the comparison isolates structural correctness of the Pallas code.

def sppf_forward_ref(x_nchw, params, k=5):
    w1, s1, b1 = params["w1"], params["s1"], params["b1"]
    w2, s2, b2 = params["w2"], params["s2"], params["b2"]
    x = jnp.transpose(x_nchw, (0, 2, 3, 1)).astype(jnp.float32)

    def conv1x1(t, w, s, b):
        y = jnp.einsum("nhwc,cd->nhwd", t.astype(jnp.bfloat16),
                       w.astype(jnp.bfloat16),
                       preferred_element_type=jnp.float32)
        y = y * s + b
        return y * jax.nn.sigmoid(y)

    x1 = conv1x1(x, w1, s1, b1)
    p = k // 2
    mp = lambda t: lax.reduce_window(t, -jnp.inf, lax.max,
                                     (1, k, k, 1), (1, 1, 1, 1),
                                     ((0, 0), (p, p), (p, p), (0, 0)))
    y1 = mp(x1)
    y2 = mp(y1)
    y3 = mp(y2)
    out = conv1x1(jnp.concatenate([x1, y1, y2, y3], axis=-1), w2, s2, b2)
    return jnp.transpose(out, (0, 3, 1, 2))


# ------------------------------------ main ----------------------------------- #

if __name__ == "__main__":
    N, C1, C2, H, W, K = 2, 64, 128, 16, 16, 5

    key = jax.random.PRNGKey(0)
    x = jax.random.normal(key, (N, C1, H, W), jnp.float32)

    params = init_sppf_params(seed=42, c1=C1, c2=C2)

    out = sppf_forward(x, params, k=K)
    out = jax.block_until_ready(out)

    # shape check: (N, c2, H, W)
    assert out.shape == (N, C2, H, W), out.shape

    # numerical check against a pure-JAX reference with the same precision policy
    ref = sppf_forward_ref(x, params, k=K)
    err = float(jnp.max(jnp.abs(out - ref)))
    assert err < 2e-3, f"mismatch: max abs err {err}"

    print("KERNEL_OK")
</pallas_src>

<mosaic_0001>
module attributes {stable_mosaic.version = 11 : i64} {
  func.func @_sppf_kernel(%arg0: i32, %arg1: memref<1x16x16x64xbf16, #tpu.memory_space<vmem>>, %arg2: memref<64x32xbf16, #tpu.memory_space<vmem>>, %arg3: memref<1x32xf32, #tpu.memory_space<vmem>>, %arg4: memref<1x32xf32, #tpu.memory_space<vmem>>, %arg5: memref<128x128xbf16, #tpu.memory_space<vmem>>, %arg6: memref<1x128xf32, #tpu.memory_space<vmem>>, %arg7: memref<1x128xf32, #tpu.memory_space<vmem>>, %arg8: memref<1x16x16x128xf32, #tpu.memory_space<vmem>>, %arg9: memref<20x20x32xf32, #tpu.memory_space<vmem>>) attributes {dimension_semantics = [#tpu.dimension_semantics<parallel>], iteration_bounds = array<i64: 2>, scalar_prefetch = 0 : i64, scratch_operands = 1 : i64, tpu.core_type = #tpu.core_type<tc>, window_params = [{transform_indices = @transform_0, window_bounds = array<i64: 1, 16, 16, 64>}, {pipeline_mode = #tpu.pipeline_mode<synchronous>, transform_indices = @transform_1, window_bounds = array<i64: 64, 32>}, {pipeline_mode = #tpu.pipeline_mode<synchronous>, transform_indices = @transform_2, window_bounds = array<i64: 1, 32>}, {pipeline_mode = #tpu.pipeline_mode<synchronous>, transform_indices = @transform_3, window_bounds = array<i64: 1, 32>}, {pipeline_mode = #tpu.pipeline_mode<synchronous>, transform_indices = @transform_4, window_bounds = array<i64: 128, 128>}, {pipeline_mode = #tpu.pipeline_mode<synchronous>, transform_indices = @transform_5, window_bounds = array<i64: 1, 128>}, {pipeline_mode = #tpu.pipeline_mode<synchronous>, transform_indices = @transform_6, window_bounds = array<i64: 1, 128>}, {transform_indices = @transform_7, window_bounds = array<i64: 1, 16, 16, 128>}]} {
    %c0 = arith.constant 0 : index
    %c0_0 = arith.constant 0 : index
    %c0_1 = arith.constant 0 : index
    %c0_2 = arith.constant 0 : index
    %0 = vector.load %arg1[%c0, %c0_0, %c0_1, %c0_2] : memref<1x16x16x64xbf16, #tpu.memory_space<vmem>>, vector<1x16x16x64xbf16>
    %1 = vector.shape_cast %0 : vector<1x16x16x64xbf16> to vector<16x16x64xbf16>
    %2 = vector.shape_cast %1 : vector<16x16x64xbf16> to vector<256x64xbf16>
    %c0_3 = arith.constant 0 : index
    %c0_4 = arith.constant 0 : index
    %3 = vector.load %arg2[%c0_3, %c0_4] : memref<64x32xbf16, #tpu.memory_space<vmem>>, vector<64x32xbf16>
    %cst = arith.constant dense<0.000000e+00> : vector<256x32xf32>
    %4 = tpu.matmul %2, %3, %cst {dimension_numbers = #tpu.dot_dimension_numbers<[1], [0], [0], [1], [0, 0, 1, 1], [], []>} : vector<256x64xbf16>, vector<64x32xbf16>, vector<256x32xf32> -> vector<256x32xf32>
    %c0_5 = arith.constant 0 : index
    %c0_6 = arith.constant 0 : index
    %5 = vector.load %arg3[%c0_5, %c0_6] : memref<1x32xf32, #tpu.memory_space<vmem>>, vector<1x32xf32>
    %6 = vector.broadcast %5 : vector<1x32xf32> to vector<256x32xf32>
    %7 = arith.mulf %4, %6 : vector<256x32xf32>
    %c0_7 = arith.constant 0 : index
    %c0_8 = arith.constant 0 : index
    %8 = vector.load %arg4[%c0_7, %c0_8] : memref<1x32xf32, #tpu.memory_space<vmem>>, vector<1x32xf32>
    %9 = vector.broadcast %8 : vector<1x32xf32> to vector<256x32xf32>
    %10 = arith.addf %7, %9 : vector<256x32xf32>
    %11 = arith.negf %10 : vector<256x32xf32>
    %12 = math.exp %11 : vector<256x32xf32>
    %cst_9 = arith.constant 1.000000e+00 : f32
    %13 = vector.broadcast %cst_9 : f32 to vector<256x32xf32>
    %14 = arith.addf %13, %12 : vector<256x32xf32>
    %15 = arith.divf %13, %14 : vector<256x32xf32>
    %16 = arith.mulf %10, %15 : vector<256x32xf32>
    %17 = vector.shape_cast %16 : vector<256x32xf32> to vector<16x16x32xf32>
    %cst_10 = arith.constant 0xFF800000 : f32
    %18 = vector.broadcast %cst_10 : f32 to vector<20x20x32xf32>
    %c0_11 = arith.constant 0 : index
    %c0_12 = arith.constant 0 : index
    %c0_13 = arith.constant 0 : index
    %19 = vector.load %arg9[%c0_11, %c0_12, %c0_13] : memref<20x20x32xf32, #tpu.memory_space<vmem>>, vector<20x20x32xf32>
    tpu.vector_store %arg9[%c0_11, %c0_12, %c0_13], %18 {strides = array<i32>} : memref<20x20x32xf32, #tpu.memory_space<vmem>>, vector<20x20x32xf32>,
    %c2 = arith.constant 2 : index
    %c2_14 = arith.constant 2 : index
    %c0_15 = arith.constant 0 : index
    %20 = vector.load %arg9[%c2, %c2_14, %c0_15] : memref<20x20x32xf32, #tpu.memory_space<vmem>>, vector<16x16x32xf32>
    tpu.vector_store %arg9[%c2, %c2_14, %c0_15], %17 {strides = array<i32>} : memref<20x20x32xf32, #tpu.memory_space<vmem>>, vector<16x16x32xf32>,
    %c0_16 = arith.constant 0 : index
    %c0_17 = arith.constant 0 : index
    %c0_18 = arith.constant 0 : index
    %21 = vector.load %arg9[%c0_16, %c0_17, %c0_18] : memref<20x20x32xf32, #tpu.memory_space<vmem>>, vector<20x20x32xf32>
    %22 = vector.extract_strided_slice %21 {offsets = [0, 0, 0], sizes = [16, 20, 32], strides = [1, 1, 1]} : vector<20x20x32xf32> to vector<16x20x32xf32>
    %23 = vector.extract_strided_slice %21 {offsets = [1, 0, 0], sizes = [16, 20, 32], strides = [1, 1, 1]} : vector<20x20x32xf32> to vector<16x20x32xf32>
    %24 = arith.maximumf %22, %23 : vector<16x20x32xf32>
    %25 = vector.extract_strided_slice %21 {offsets = [2, 0, 0], sizes = [16, 20, 32], strides = [1, 1, 1]} : vector<20x20x32xf32> to vector<16x20x32xf32>
    %26 = arith.maximumf %24, %25 : vector<16x20x32xf32>
    %27 = vector.extract_strided_slice %21 {offsets = [3, 0, 0], sizes = [16, 20, 32], strides = [1, 1, 1]} : vector<20x20x32xf32> to vector<16x20x32xf32>
    %28 = arith.maximumf %26, %27 : vector<16x20x32xf32>
    %29 = vector.extract_strided_slice %21 {offsets = [4, 0, 0], sizes = [16, 20, 32], strides = [1, 1, 1]} : vector<20x20x32xf32> to vector<16x20x32xf32>
    %30 = arith.maximumf %28, %29 : vector<16x20x32xf32>
    %31 = vector.extract_strided_slice %30 {offsets = [0, 0, 0], sizes = [16, 16, 32], strides = [1, 1, 1]} : vector<16x20x32xf32> to vector<16x16x32xf32>
    %32 = vector.extract_strided_slice %30 {offsets = [0, 1, 0], sizes = [16, 16, 32], strides = [1, 1, 1]} : vector<16x20x32xf32> to vector<16x16x32xf32>
    %33 = arith.maximumf %31, %32 : vector<16x16x32xf32>
    %34 = vector.extract_strided_slice %30 {offsets = [0, 2, 0], sizes = [16, 16, 32], strides = [1, 1, 1]} : vector<16x20x32xf32> to vector<16x16x32xf32>
    %35 = arith.maximumf %33, %34 : vector<16x16x32xf32>
    %36 = vector.extract_strided_slice %30 {offsets = [0, 3, 0], sizes = [16, 16, 32], strides = [1, 1, 1]} : vector<16x20x32xf32> to vector<16x16x32xf32>
    %37 = arith.maximumf %35, %36 : vector<16x16x32xf32>
    %38 = vector.extract_strided_slice %30 {offsets = [0, 4, 0], sizes = [16, 16, 32], strides = [1, 1, 1]} : vector<16x20x32xf32> to vector<16x16x32xf32>
    %39 = arith.maximumf %37, %38 : vector<16x16x32xf32>
    %cst_19 = arith.constant 0xFF800000 : f32
    %40 = vector.broadcast %cst_19 : f32 to vector<20x20x32xf32>
    %c0_20 = arith.constant 0 : index
    %c0_21 = arith.constant 0 : index
    %c0_22 = arith.constant 0 : index
    %41 = vector.load %arg9[%c0_20, %c0_21, %c0_22] : memref<20x20x32xf32, #tpu.memory_space<vmem>>, vector<20x20x32xf32>
    tpu.vector_store %arg9[%c0_20, %c0_21, %c0_22], %40 {strides = array<i32>} : memref<20x20x32xf32, #tpu.memory_space<vmem>>, vector<20x20x32xf32>,
    %c2_23 = arith.constant 2 : index
    %c2_24 = arith.constant 2 : index
    %c0_25 = arith.constant 0 : index
    %42 = vector.load %arg9[%c2_23, %c2_24, %c0_25] : memref<20x20x32xf32, #tpu.memory_space<vmem>>, vector<16x16x32xf32>
    tpu.vector_store %arg9[%c2_23, %c2_24, %c0_25], %39 {strides = array<i32>} : memref<20x20x32xf32, #tpu.memory_space<vmem>>, vector<16x16x32xf32>,
    %c0_26 = arith.constant 0 : index
    %c0_27 = arith.constant 0 : index
    %c0_28 = arith.constant 0 : index
    %43 = vector.load %arg9[%c0_26, %c0_27, %c0_28] : memref<20x20x32xf32, #tpu.memory_space<vmem>>, vector<20x20x32xf32>
    %44 = vector.extract_strided_slice %43 {offsets = [0, 0, 0], sizes = [16, 20, 32], strides = [1, 1, 1]} : vector<20x20x32xf32> to vector<16x20x32xf32>
    %45 = vector.extract_strided_slice %43 {offsets = [1, 0, 0], sizes = [16, 20, 32], strides = [1, 1, 1]} : vector<20x20x32xf32> to vector<16x20x32xf32>
    %46 = arith.maximumf %44, %45 : vector<16x20x32xf32>
    %47 = vector.extract_strided_slice %43 {offsets = [2, 0, 0], sizes = [16, 20, 32], strides = [1, 1, 1]} : vector<20x20x32xf32> to vector<16x20x32xf32>
    %48 = arith.maximumf %46, %47 : vector<16x20x32xf32>
    %49 = vector.extract_strided_slice %43 {offsets = [3, 0, 0], sizes = [16, 20, 32], strides = [1, 1, 1]} : vector<20x20x32xf32> to vector<16x20x32xf32>
    %50 = arith.maximumf %48, %49 : vector<16x20x32xf32>
    %51 = vector.extract_strided_slice %43 {offsets = [4, 0, 0], sizes = [16, 20, 32], strides = [1, 1, 1]} : vector<20x20x32xf32> to vector<16x20x32xf32>
    %52 = arith.maximumf %50, %51 : vector<16x20x32xf32>
    %53 = vector.extract_strided_slice %52 {offsets = [0, 0, 0], sizes = [16, 16, 32], strides = [1, 1, 1]} : vector<16x20x32xf32> to vector<16x16x32xf32>
    %54 = vector.extract_strided_slice %52 {offsets = [0, 1, 0], sizes = [16, 16, 32], strides = [1, 1, 1]} : vector<16x20x32xf32> to vector<16x16x32xf32>
    %55 = arith.maximumf %53, %54 : vector<16x16x32xf32>
    %56 = vector.extract_strided_slice %52 {offsets = [0, 2, 0], sizes = [16, 16, 32], strides = [1, 1, 1]} : vector<16x20x32xf32> to vector<16x16x32xf32>
    %57 = arith.maximumf %55, %56 : vector<16x16x32xf32>
    %58 = vector.extract_strided_slice %52 {offsets = [0, 3, 0], sizes = [16, 16, 32], strides = [1, 1, 1]} : vector<16x20x32xf32> to vector<16x16x32xf32>
    %59 = arith.maximumf %57, %58 : vector<16x16x32xf32>
    %60 = vector.extract_strided_slice %52 {offsets = [0, 4, 0], sizes = [16, 16, 32], strides = [1, 1, 1]} : vector<16x20x32xf32> to vector<16x16x32xf32>
    %61 = arith.maximumf %59, %60 : vector<16x16x32xf32>
    %cst_29 = arith.constant 0xFF800000 : f32
    %62 = vector.broadcast %cst_29 : f32 to vector<20x20x32xf32>
    %c0_30 = arith.constant 0 : index
    %c0_31 = arith.constant 0 : index
    %c0_32 = arith.constant 0 : index
    %63 = vector.load %arg9[%c0_30, %c0_31, %c0_32] : memref<20x20x32xf32, #tpu.memory_space<vmem>>, vector<20x20x32xf32>
    tpu.vector_store %arg9[%c0_30, %c0_31, %c0_32], %62 {strides = array<i32>} : memref<20x20x32xf32, #tpu.memory_space<vmem>>, vector<20x20x32xf32>,
    %c2_33 = arith.constant 2 : index
    %c2_34 = arith.constant 2 : index
    %c0_35 = arith.constant 0 : index
    %64 = vector.load %arg9[%c2_33, %c2_34, %c0_35] : memref<20x20x32xf32, #tpu.memory_space<vmem>>, vector<16x16x32xf32>
    tpu.vector_store %arg9[%c2_33, %c2_34, %c0_35], %61 {strides = array<i32>} : memref<20x20x32xf32, #tpu.memory_space<vmem>>, vector<16x16x32xf32>,
    %c0_36 = arith.constant 0 : index
    %c0_37 = arith.constant 0 : index
    %c0_38 = arith.constant 0 : index
    %65 = vector.load %arg9[%c0_36, %c0_37, %c0_38] : memref<20x20x32xf32, #tpu.memory_space<vmem>>, vector<20x20x32xf32>
    %66 = vector.extract_strided_slice %65 {offsets = [0, 0, 0], sizes = [16, 20, 32], strides = [1, 1, 1]} : vector<20x20x32xf32> to vector<16x20x32xf32>
    %67 = vector.extract_strided_slice %65 {offsets = [1, 0, 0], sizes = [16, 20, 32], strides = [1, 1, 1]} : vector<20x20x32xf32> to vector<16x20x32xf32>
    %68 = arith.maximumf %66, %67 : vector<16x20x32xf32>
    %69 = vector.extract_strided_slice %65 {offsets = [2, 0, 0], sizes = [16, 20, 32], strides = [1, 1, 1]} : vector<20x20x32xf32> to vector<16x20x32xf32>
    %70 = arith.maximumf %68, %69 : vector<16x20x32xf32>
    %71 = vector.extract_strided_slice %65 {offsets = [3, 0, 0], sizes = [16, 20, 32], strides = [1, 1, 1]} : vector<20x20x32xf32> to vector<16x20x32xf32>
    %72 = arith.maximumf %70, %71 : vector<16x20x32xf32>
    %73 = vector.extract_strided_slice %65 {offsets = [4, 0, 0], sizes = [16, 20, 32], strides = [1, 1, 1]} : vector<20x20x32xf32> to vector<16x20x32xf32>
    %74 = arith.maximumf %72, %73 : vector<16x20x32xf32>
    %75 = vector.extract_strided_slice %74 {offsets = [0, 0, 0], sizes = [16, 16, 32], strides = [1, 1, 1]} : vector<16x20x32xf32> to vector<16x16x32xf32>
    %76 = vector.extract_strided_slice %74 {offsets = [0, 1, 0], sizes = [16, 16, 32], strides = [1, 1, 1]} : vector<16x20x32xf32> to vector<16x16x32xf32>
    %77 = arith.maximumf %75, %76 : vector<16x16x32xf32>
    %78 = vector.extract_strided_slice %74 {offsets = [0, 2, 0], sizes = [16, 16, 32], strides = [1, 1, 1]} : vector<16x20x32xf32> to vector<16x16x32xf32>
    %79 = arith.maximumf %77, %78 : vector<16x16x32xf32>
    %80 = vector.extract_strided_slice %74 {offsets = [0, 3, 0], sizes = [16, 16, 32], strides = [1, 1, 1]} : vector<16x20x32xf32> to vector<16x16x32xf32>
    %81 = arith.maximumf %79, %80 : vector<16x16x32xf32>
    %82 = vector.extract_strided_slice %74 {offsets = [0, 4, 0], sizes = [16, 16, 32], strides = [1, 1, 1]} : vector<16x20x32xf32> to vector<16x16x32xf32>
    %83 = arith.maximumf %81, %82 : vector<16x16x32xf32>
    %84 = tpu.concatenate %17, %39, %61, %83 in 2 : vector<16x16x32xf32>, vector<16x16x32xf32>, vector<16x16x32xf32>, vector<16x16x32xf32> -> vector<16x16x128xf32>
    %85 = vector.shape_cast %84 : vector<16x16x128xf32> to vector<256x128xf32>
    %86 = arith.truncf %85 : vector<256x128xf32> to vector<256x128xbf16>
    %c0_39 = arith.constant 0 : index
    %c0_40 = arith.constant 0 : index
    %87 = vector.load %arg5[%c0_39, %c0_40] : memref<128x128xbf16, #tpu.memory_space<vmem>>, vector<128x128xbf16>
    %cst_41 = arith.constant dense<0.000000e+00> : vector<256x128xf32>
    %88 = tpu.matmul %86, %87, %cst_41 {dimension_numbers = #tpu.dot_dimension_numbers<[1], [0], [0], [1], [0, 0, 1, 1], [], []>} : vector<256x128xbf16>, vector<128x128xbf16>, vector<256x128xf32> -> vector<256x128xf32>
    %c0_42 = arith.constant 0 : index
    %c0_43 = arith.constant 0 : index
    %89 = vector.load %arg6[%c0_42, %c0_43] : memref<1x128xf32, #tpu.memory_space<vmem>>, vector<1x128xf32>
    %90 = vector.broadcast %89 : vector<1x128xf32> to vector<256x128xf32>
    %91 = arith.mulf %88, %90 : vector<256x128xf32>
    %c0_44 = arith.constant 0 : index
    %c0_45 = arith.constant 0 : index
    %92 = vector.load %arg7[%c0_44, %c0_45] : memref<1x128xf32, #tpu.memory_space<vmem>>, vector<1x128xf32>
    %93 = vector.broadcast %92 : vector<1x128xf32> to vector<256x128xf32>
    %94 = arith.addf %91, %93 : vector<256x128xf32>
    %95 = arith.negf %94 : vector<256x128xf32>
    %96 = math.exp %95 : vector<256x128xf32>
    %cst_46 = arith.constant 1.000000e+00 : f32
    %97 = vector.broadcast %cst_46 : f32 to vector<256x128xf32>
    %98 = arith.addf %97, %96 : vector<256x128xf32>
    %99 = arith.divf %97, %98 : vector<256x128xf32>
    %100 = arith.mulf %94, %99 : vector<256x128xf32>
    %101 = vector.shape_cast %100 : vector<256x128xf32> to vector<1x16x16x128xf32>
    %c0_47 = arith.constant 0 : index
    %c0_48 = arith.constant 0 : index
    %c0_49 = arith.constant 0 : index
    %c0_50 = arith.constant 0 : index
    %102 = vector.load %arg8[%c0_47, %c0_48, %c0_49, %c0_50] : memref<1x16x16x128xf32, #tpu.memory_space<vmem>>, vector<1x16x16x128xf32>
    tpu.vector_store %arg8[%c0_47, %c0_48, %c0_49, %c0_50], %101 {strides = array<i32>} : memref<1x16x16x128xf32, #tpu.memory_space<vmem>>, vector<1x16x16x128xf32>,
    return
  }
  func.func @transform_0(%arg0: i32) -> (i32, i32, i32, i32) {
    %c0_i32 = arith.constant 0 : i32
    %c0_i32_0 = arith.constant 0 : i32
    %c0_i32_1 = arith.constant 0 : i32
    %c0_i32_2 = arith.constant 0 : i32
    return %arg0, %c0_i32, %c0_i32_0, %c0_i32_1 : i32, i32, i32, i32
  }
  func.func @transform_1(%arg0: i32) -> (i32, i32) {
    %c0_i32 = arith.constant 0 : i32
    %c0_i32_0 = arith.constant 0 : i32
    %c0_i32_1 = arith.constant 0 : i32
    return %c0_i32, %c0_i32_0 : i32, i32
  }
  func.func @transform_2(%arg0: i32) -> (i32, i32) {
    %c0_i32 = arith.constant 0 : i32
    %c0_i32_0 = arith.constant 0 : i32
    %c0_i32_1 = arith.constant 0 : i32
    return %c0_i32, %c0_i32_0 : i32, i32
  }
  func.func @transform_3(%arg0: i32) -> (i32, i32) {
    %c0_i32 = arith.constant 0 : i32
    %c0_i32_0 = arith.constant 0 : i32
    %c0_i32_1 = arith.constant 0 : i32
    return %c0_i32, %c0_i32_0 : i32, i32
  }
  func.func @transform_4(%arg0: i32) -> (i32, i32) {
    %c0_i32 = arith.constant 0 : i32
    %c0_i32_0 = arith.constant 0 : i32
    %c0_i32_1 = arith.constant 0 : i32
    return %c0_i32, %c0_i32_0 : i32, i32
  }
  func.func @transform_5(%arg0: i32) -> (i32, i32) {
    %c0_i32 = arith.constant 0 : i32
    %c0_i32_0 = arith.constant 0 : i32
    %c0_i32_1 = arith.constant 0 : i32
    return %c0_i32, %c0_i32_0 : i32, i32
  }
  func.func @transform_6(%arg0: i32) -> (i32, i32) {
    %c0_i32 = arith.constant 0 : i32
    %c0_i32_0 = arith.constant 0 : i32
    %c0_i32_1 = arith.constant 0 : i32
    return %c0_i32, %c0_i32_0 : i32, i32
  }
  func.func @transform_7(%arg0: i32) -> (i32, i32, i32, i32) {
    %c0_i32 = arith.constant 0 : i32
    %c0_i32_0 = arith.constant 0 : i32
    %c0_i32_1 = arith.constant 0 : i32
    %c0_i32_2 = arith.constant 0 : i32
    return %arg0, %c0_i32, %c0_i32_0, %c0_i32_1 : i32, i32, i32, i32
  }
}

</mosaic_0001>

<llo_original>
// kernel: tpu_custom_call.1
$region0: #{tpu_custom_call.1}
  #allocation0 [shape = 'u32[]', space=smem, size = 0x4, offset = 0x4, fixed_abs, tag = 'smem constant byte address 0x4 - core index']
  #allocation1 [shape = 'u32[72,128]{1,0:T(1,128)}', space=vmem, size = 0x9000, scoped, tag = 'internal scratch']
  #allocation2 [shape = 'f32[20,20,32]{2,1,0:T(8,128)}', space=vmem, size = 0x3c000, scoped, tag = 'scratch operand']
  %s0 = inlined_call_operand.hbm [shape: bf16[2,16,16,64], index: 0, kind: input, shape index: {}]
  %s1 = inlined_call_operand.vmem [shape: bf16[64,32], index: 1, kind: input, shape index: {}]
  %s2 = inlined_call_operand.vmem [shape: f32[1,32], index: 2, kind: input, shape index: {}]
  %s3 = inlined_call_operand.vmem [shape: f32[1,32], index: 3, kind: input, shape index: {}]
  %s4 = inlined_call_operand.hbm [shape: bf16[128,128], index: 4, kind: input, shape index: {}]
  %s5 = inlined_call_operand.vmem [shape: f32[1,128], index: 5, kind: input, shape index: {}]
  %s6 = inlined_call_operand.vmem [shape: f32[1,128], index: 6, kind: input, shape index: {}]
  %s7 = inlined_call_operand.hbm [shape: f32[2,16,16,128], index: 7, kind: output, shape index: {}]
  %s8 = sld [smem:[#allocation0]]
  $region69: #{tpu_custom_call.1} parent=0
    _
  %s10 = ssub.s32 1, %s8
  %s11 = scalar_select 0, %s10, %s8
  $region1: #{tpu_custom_call.1} parent=0
    #allocation3 [shape = 'u8[131072]{0}', space=vmem, size = 0x20000, scoped, tag = 'input window, operand 0']
    #allocation4 [shape = 's32[2]{0}', space=sflag, size = 0x8, scoped, tag = 'scoped memory for tpu_custom_call.1']
    #allocation5 [shape = 's32[2]{0}', space=sflag, size = 0x8, scoped, tag = 'scoped memory for tpu_custom_call.1']
    #allocation6 [shape = 'u8[32768]{0}', space=vmem, size = 0x8000, scoped, tag = 'input window, operand 4, single buffered']
    #allocation7 [shape = 's32[1]{0}', space=sflag, size = 0x4, scoped, tag = 'scoped memory for tpu_custom_call.1']
    #allocation8 [shape = 'u8[262144]{0}', space=vmem, size = 0x40000, scoped, tag = 'output window, operand 0']
    %12 = vsyncpa [#allocation4], 0
    %s13 = scalar_lea.sflag [#allocation4], 1
    %14 = vsyncpa %s13, 0
    %15 = vsyncpa [#allocation7], 0
    %16 = vsyncpa [#allocation5], 0
    %s17 = scalar_lea.sflag [#allocation5], 1
    %18 = vsyncpa %s17, 0
    loop: start=0, step=1, limit=4
    $region2: #{tpu_custom_call.1} parent=1 // loop_pre_header
      _
    $region3: #{tpu_custom_call.1} parent=1 // loop_header
      %s20 = sphi 0, %s24
      %p21 = scmp.ge.s32.totalorder %s20, 4
      %s30 = sphi 0, %s32
      %s33 = sphi 0, %s30
      %s34 = sphi 0, %s33
      %s50 = sphi 0, %s34
      %s54 = sphi 0, %s54
      %s56 = sphi 0, %s54
      %s57 = sphi 0, %s56
      %s71 = sphi 0, %s57
      %s75 = sphi 0, %s75
      %s77 = sphi 0, %s75
      %s78 = sphi 0, %s77
      %s92 = sphi 0, %s78
      %s96 = sphi 0, %s96
      %s98 = sphi 0, %s96
      %s99 = sphi 0, %s98
      %s113 = sphi 0, %s99
      %s117 = sphi 0, %s117
      %s119 = sphi 0, %s117
      %s120 = sphi 0, %s119
      %s134 = sphi 0, %s120
      %s138 = sphi 0, %s138
      %s140 = sphi 0, %s138
      %s141 = sphi 0, %s140
      %s155 = sphi 0, %s141
      %s159 = sphi 0, %s159
      %s161 = sphi 0, %s159
      %s162 = sphi 0, %s161
      %s176 = sphi 0, %s162
      %s182 = sphi 0, %s184
      %s185 = sphi 0, %s182
      %s186 = sphi 0, %s185
      %s202 = sphi 0, %s186
    $region4: #{tpu_custom_call.1} parent=1 // loop_header_branch
      %23 = sbr.rel (%p21) target = $region8
    $region5: #{tpu_custom_call.1} parent=1 // loop_body
      %s25 = ssub.s32 %s20, 1
      %s26 = ssub.s32 %s20, 2
      %s27 = sadd.s32 %s20, 1
      %s28 = ssub.s32 %s20, %s27
      %p29 = scmp.eq.s32.totalorder %s28, 0
      %s31 = sadd.s32 %s30, 1
      %s32 = scalar_select %p29, %s30, %s31
      %p35 = pneg %p29
      %p36 = scmp.eq.s32.totalorder %s20, 1
      %p37 = por %p35, %p36
      %p38 = scmp.ne.s32.totalorder %s30, %s33
      %p39 = scmp.eq.s32.totalorder %s20, 0
      %p40 = por %p38, %p39
      %p41 = scmp.ne.s32.totalorder %s30, %s33
      %p42 = scmp.eq.s32.totalorder %s25, 1
      %p43 = por %p41, %p42
      %p44 = scmp.ne.s32.totalorder %s33, %s34
      %p45 = scmp.eq.s32.totalorder %s25, 0
      %p46 = por %p44, %p45
      %p47 = scmp.ne.s32.totalorder %s33, %s34
      %p48 = scmp.eq.s32.totalorder %s26, 1
      %p49 = por %p47, %p48
      %p51 = scmp.ne.s32.totalorder %s34, %s50
      %p52 = scmp.eq.s32.totalorder %s26, 0
      %p53 = por %p51, %p52
      %s55 = sadd.s32 %s54, 1
      %p58 = scmp.eq.s32.totalorder %s20, 1
      %p59 = scmp.ne.s32.totalorder %s54, %s56
      %p60 = scmp.eq.s32.totalorder %s20, 0
      %p61 = por %p59, %p60
      %p62 = scmp.ne.s32.totalorder %s54, %s56
      %p63 = scmp.eq.s32.totalorder %s25, 1
      %p64 = por %p62, %p63
      %p65 = scmp.ne.s32.totalorder %s56, %s57
      %p66 = scmp.eq.s32.totalorder %s25, 0
      %p67 = por %p65, %p66
      %p68 = scmp.ne.s32.totalorder %s56, %s57
      %p69 = scmp.eq.s32.totalorder %s26, 1
      %p70 = por %p68, %p69
      %p72 = scmp.ne.s32.totalorder %s57, %s71
      %p73 = scmp.eq.s32.totalorder %s26, 0
      %p74 = por %p72, %p73
      %s76 = sadd.s32 %s75, 1
      %p79 = scmp.eq.s32.totalorder %s20, 1
      %p80 = scmp.ne.s32.totalorder %s75, %s77
      %p81 = scmp.eq.s32.totalorder %s20, 0
      %p82 = por %p80, %p81
      %p83 = scmp.ne.s32.totalorder %s75, %s77
      %p84 = scmp.eq.s32.totalorder %s25, 1
      %p85 = por %p83, %p84
      %p86 = scmp.ne.s32.totalorder %s77, %s78
      %p87 = scmp.eq.s32.totalorder %s25, 0
      %p88 = por %p86, %p87
      %p89 = scmp.ne.s32.totalorder %s77, %s78
      %p90 = scmp.eq.s32.totalorder %s26, 1
      %p91 = por %p89, %p90
      %p93 = scmp.ne.s32.totalorder %s78, %s92
      %p94 = scmp.eq.s32.totalorder %s26, 0
      %p95 = por %p93, %p94
      %s97 = sadd.s32 %s96, 1
      %p100 = scmp.eq.s32.totalorder %s20, 1
      %p101 = scmp.ne.s32.totalorder %s96, %s98
      %p102 = scmp.eq.s32.totalorder %s20, 0
      %p103 = por %p101, %p102
      %p104 = scmp.ne.s32.totalorder %s96, %s98
      %p105 = scmp.eq.s32.totalorder %s25, 1
      %p106 = por %p104, %p105
      %p107 = scmp.ne.s32.totalorder %s98, %s99
      %p108 = scmp.eq.s32.totalorder %s25, 0
      %p109 = por %p107, %p108
      %p110 = scmp.ne.s32.totalorder %s98, %s99
      %p111 = scmp.eq.s32.totalorder %s26, 1
      %p112 = por %p110, %p111
      %p114 = scmp.ne.s32.totalorder %s99, %s113
      %p115 = scmp.eq.s32.totalorder %s26, 0
      %p116 = por %p114, %p115
      %s118 = sadd.s32 %s117, 1
      %p121 = scmp.eq.s32.totalorder %s20, 1
      %p122 = scmp.ne.s32.totalorder %s117, %s119
      %p123 = scmp.eq.s32.totalorder %s20, 0
      %p124 = por %p122, %p123
      %p125 = scmp.ne.s32.totalorder %s117, %s119
      %p126 = scmp.eq.s32.totalorder %s25, 1
      %p127 = por %p125, %p126
      %p128 = scmp.ne.s32.totalorder %s119, %s120
      %p129 = scmp.eq.s32.totalorder %s25, 0
      %p130 = por %p128, %p129
      %p131 = scmp.ne.s32.totalorder %s119, %s120
      %p132 = scmp.eq.s32.totalorder %s26, 1
      %p133 = por %p131, %p132
      %p135 = scmp.ne.s32.totalorder %s120, %s134
      %p136 = scmp.eq.s32.totalorder %s26, 0
      %p137 = por %p135, %p136
      %s139 = sadd.s32 %s138, 1
      %p142 = scmp.eq.s32.totalorder %s20, 1
      %p143 = scmp.ne.s32.totalorder %s138, %s140
      %p144 = scmp.eq.s32.totalorder %s20, 0
      %p145 = por %p143, %p144
      %p146 = scmp.ne.s32.totalorder %s138, %s140
      %p147 = scmp.eq.s32.totalorder %s25, 1
      %p148 = por %p146, %p147
      %p149 = scmp.ne.s32.totalorder %s140, %s141
      %p150 = scmp.eq.s32.totalorder %s25, 0
      %p151 = por %p149, %p150
      %p152 = scmp.ne.s32.totalorder %s140, %s141
      %p153 = scmp.eq.s32.totalorder %s26, 1
      %p154 = por %p152, %p153
      %p156 = scmp.ne.s32.totalorder %s141, %s155
      %p157 = scmp.eq.s32.totalorder %s26, 0
      %p158 = por %p156, %p157
      %s160 = sadd.s32 %s159, 1
      %p163 = scmp.eq.s32.totalorder %s20, 1
      %p164 = scmp.ne.s32.totalorder %s159, %s161
      %p165 = scmp.eq.s32.totalorder %s20, 0
      %p166 = por %p164, %p165
      %p167 = scmp.ne.s32.totalorder %s159, %s161
      %p168 = scmp.eq.s32.totalorder %s25, 1
      %p169 = por %p167, %p168
      %p170 = scmp.ne.s32.totalorder %s161, %s162
      %p171 = scmp.eq.s32.totalorder %s25, 0
      %p172 = por %p170, %p171
      %p173 = scmp.ne.s32.totalorder %s161, %s162
      %p174 = scmp.eq.s32.totalorder %s26, 1
      %p175 = por %p173, %p174
      %p177 = scmp.ne.s32.totalorder %s162, %s176
      %p178 = scmp.eq.s32.totalorder %s26, 0
      %p179 = por %p177, %p178
      %s180 = ssub.s32 %s20, %s27
      %p181 = scmp.eq.s32.totalorder %s180, 0
      %s183 = sadd.s32 %s182, 1
      %s184 = scalar_select %p181, %s182, %s183
      %p187 = pneg %p181
      %p188 = scmp.eq.s32.totalorder %s20, 1
      %p189 = por %p187, %p188
      %p190 = scmp.ne.s32.totalorder %s182, %s185
      %p191 = scmp.eq.s32.totalorder %s20, 0
      %p192 = por %p190, %p191
      %p193 = scmp.ne.s32.totalorder %s182, %s185
      %p194 = scmp.eq.s32.totalorder %s25, 1
      %p195 = por %p193, %p194
      %p196 = scmp.ne.s32.totalorder %s185, %s186
      %p197 = scmp.eq.s32.totalorder %s25, 0
      %p198 = por %p196, %p197
      %p199 = scmp.ne.s32.totalorder %s185, %s186
      %p200 = scmp.eq.s32.totalorder %s26, 1
      %p201 = por %p199, %p200
      %p203 = scmp.ne.s32.totalorder %s186, %s202
      %p204 = scmp.eq.s32.totalorder %s26, 0
      %p205 = por %p203, %p204
      %p206 = scmp.le.s32.totalorder 1, %s20
      %p207 = scmp.lt.s32.totalorder %s20, 3
      %p208 = pnand %p206, %p207
      %p209 = pneg %p208
      // Predicated region
      $region9: #{tpu_custom_call.1} parent=5 // pred_check
        _
      $region10: #{tpu_custom_call.1} parent=5 // pred_check_branch
        %211 = sbr.rel (%p208) target = $region12
      $region11: #{tpu_custom_call.1} parent=5 // pred_region
        %s212 = ssub.s32 %s20, 1
        // Predicated region
        $region13: #{tpu_custom_call.1} parent=11 // pred_check
          %p213 = pneg %p67
        $region14: #{tpu_custom_call.1} parent=11 // pred_check_branch
          %215 = sbr.rel (%p213) target = $region16
        $region15: #{tpu_custom_call.1} parent=11 // pred_region
          _
        $region16: #{tpu_custom_call.1} parent=11 // pred_fallthru
          _
        // Predicated region
        $region17: #{tpu_custom_call.1} parent=11 // pred_check
          %p216 = pneg %p88
        $region18: #{tpu_custom_call.1} parent=11 // pred_check_branch
          %218 = sbr.rel (%p216) target = $region20
        $region19: #{tpu_custom_call.1} parent=11 // pred_region
          _
        $region20: #{tpu_custom_call.1} parent=11 // pred_fallthru
          _
        // Predicated region
        $region21: #{tpu_custom_call.1} parent=11 // pred_check
          %p219 = pneg %p109
        $region22: #{tpu_custom_call.1} parent=11 // pred_check_branch
          %221 = sbr.rel (%p219) target = $region24
        $region23: #{tpu_custom_call.1} parent=11 // pred_region
          _
        $region24: #{tpu_custom_call.1} parent=11 // pred_fallthru
          _
        // Predicated region
        $region25: #{tpu_custom_call.1} parent=11 // pred_check
          %p222 = pneg %p130
        $region26: #{tpu_custom_call.1} parent=11 // pred_check_branch
          %224 = sbr.rel (%p222) target = $region28
        $region27: #{tpu_custom_call.1} parent=11 // pred_region
          %226 = vsyncadd [#allocation7], 0
          %s227 = sshll.u32 %s4, 4
          %s228 = int_to_ptr.hbm [resolvable:$true] %s227
          %s229 = sshll.u32 [#allocation6], 4
          %s230 = int_to_ptr.vmem [resolvable:$true] %s229
          %235 = dma.hbm_to_vmem [thread:$0]  %s228, 1024, %s230, [#allocation7], 64, 64, 4
        $region28: #{tpu_custom_call.1} parent=11 // pred_fallthru
          _
        // Predicated region
        $region29: #{tpu_custom_call.1} parent=11 // pred_check
          %p236 = pneg %p151
        $region30: #{tpu_custom_call.1} parent=11 // pred_check_branch
          %238 = sbr.rel (%p236) target = $region32
        $region31: #{tpu_custom_call.1} parent=11 // pred_region
          _
        $region32: #{tpu_custom_call.1} parent=11 // pred_fallthru
          _
        // Predicated region
        $region33: #{tpu_custom_call.1} parent=11 // pred_check
          %p239 = pneg %p172
        $region34: #{tpu_custom_call.1} parent=11 // pred_check_branch
          %241 = sbr.rel (%p239) target = $region36
        $region35: #{tpu_custom_call.1} parent=11 // pred_region
          _
        $region36: #{tpu_custom_call.1} parent=11 // pred_fallthru
          _
      $region12: #{tpu_custom_call.1} parent=5 // pred_fallthru
        _
      %p242 = scmp.lt.s32.totalorder %s20, 2
      // Predicated region
      $region37: #{tpu_custom_call.1} parent=5 // pred_check
        %p243 = pneg %p242
      $region38: #{tpu_custom_call.1} parent=5 // pred_check_branch
        %245 = sbr.rel (%p243) target = $region40
      $region39: #{tpu_custom_call.1} parent=5 // pred_region
        // Predicated region
        $region41: #{tpu_custom_call.1} parent=39 // pred_check
          %p246 = pneg %p40
        $region42: #{tpu_custom_call.1} parent=39 // pred_check_branch
          %248 = sbr.rel (%p246) target = $region44
        $region43: #{tpu_custom_call.1} parent=39 // pred_region
          %s249 = sand.u32 %s30, 1
          %s250 = scalar_lea.sflag [#allocation4], %s249
          %s251 = sand.u32 %s30, 1
          %s252 = smul.addr %s251, 128
          %s253 = scalar_lea.vmem [#allocation3], %s252
          %255 = vsyncadd %s250, 0
          %s256 = smul.addr %s20, 32
          %s257 = smul.addr %s256, 4
          %s258 = scalar_lea.hbm %s0, %s257
          %s259 = sshll.u32 %s258, 4
          %s260 = int_to_ptr.hbm [resolvable:$true] %s259
          %s261 = sshll.u32 %s253, 4
          %s262 = int_to_ptr.vmem [resolvable:$true] %s261
          %267 = dma.hbm_to_vmem [thread:$0]  %s260, 2048, %s262, %s250, 64, 64, 4
        $region44: #{tpu_custom_call.1} parent=39 // pred_fallthru
          _
      $region40: #{tpu_custom_call.1} parent=5 // pred_fallthru
        _
      %p268 = scmp.le.s32.totalorder 1, %s20
      %p269 = scmp.lt.s32.totalorder %s20, 3
      %p270 = pnand %p268, %p269
      %p271 = pneg %p270
      // Predicated region
      $region45: #{tpu_custom_call.1} parent=5 // pred_check
        _
      $region46: #{tpu_custom_call.1} parent=5 // pred_check_branch
        %273 = sbr.rel (%p270) target = $region48
      $region47: #{tpu_custom_call.1} parent=5 // pred_region
        %s274 = ssub.s32 %s20, 1
        %s275 = sand.u32 %s33, 1
        %s276 = scalar_lea.sflag [#allocation4], %s275
        %s277 = sand.u32 %s33, 1
        %s278 = smul.addr %s277, 128
        %s279 = scalar_lea.vmem [#allocation3], %s278
        // Predicated region
        $region49: #{tpu_custom_call.1} parent=47 // pred_check
          %p280 = pneg %p46
        $region50: #{tpu_custom_call.1} parent=47 // pred_check_branch
          %282 = sbr.rel (%p280) target = $region52
        $region51: #{tpu_custom_call.1} parent=47 // pred_region
          %284 = dma.done %s276, 2048
        $region52: #{tpu_custom_call.1} parent=47 // pred_fallthru
          _
        // Predicated region
        $region53: #{tpu_custom_call.1} parent=47 // pred_check
          %p285 = pneg %p130
        $region54: #{tpu_custom_call.1} parent=47 // pred_check_branch
          %287 = sbr.rel (%p285) target = $region56
        $region55: #{tpu_custom_call.1} parent=47 // pred_region
          %289 = dma.done [#allocation7], 1024
        $region56: #{tpu_custom_call.1} parent=47 // pred_fallthru
          _
        %s290 = sand.u32 %s33, 1
        %s291 = scalar_lea.sflag [#allocation4], %s290
        %s292 = sand.u32 %s33, 1
        %s293 = smul.addr %s292, 128
        %s294 = scalar_lea.vmem [#allocation3], %s293
        %p295 = pneg %p46
        %p296 = pneg %p43
        %p297 = pneg %p67
        %p298 = pneg %p64
        %p299 = pneg %p88
        %p300 = pneg %p85
        %p301 = pneg %p109
        %p302 = pneg %p106
        %p303 = pneg %p130
        %p304 = pneg %p127
        %p305 = pneg %p151
        %p306 = pneg %p148
        %p307 = pneg %p172
        %p308 = pneg %p169
        %p309 = pneg %p198
        %p310 = pneg %p195
        %s311 = sand.u32 %s185, 1
        %s312 = scalar_lea.sflag [#allocation5], %s311
        %s313 = sand.u32 %s185, 1
        %s314 = smul.addr %s313, 256
        %s315 = scalar_lea.vmem [#allocation8], %s314
        %v317 = vld [vmem:[%s279] sm:$0xf]
        %v318 = vld [vmem:[%s279 + $0x4] sm:$0xf]
        %v319 = vld [vmem:[%s279 + $0x8] sm:$0xf]
        %v320 = vld [vmem:[%s279 + $0xc] sm:$0xf]
        %v321 = vld [vmem:[%s279 + $0x10] sm:$0xf]
        %v322 = vld [vmem:[%s279 + $0x14] sm:$0xf]
        %v323 = vld [vmem:[%s279 + $0x18] sm:$0xf]
        %v324 = vld [vmem:[%s279 + $0x1c] sm:$0xf]
        %v325 = vld [vmem:[%s279 + $0x20] sm:$0xf]
        %v326 = vld [vmem:[%s279 + $0x24] sm:$0xf]
        %v327 = vld [vmem:[%s279 + $0x28] sm:$0xf]
        %v328 = vld [vmem:[%s279 + $0x2c] sm:$0xf]
        %v329 = vld [vmem:[%s279 + $0x30] sm:$0xf]
        %v330 = vld [vmem:[%s279 + $0x34] sm:$0xf]
        %v331 = vld [vmem:[%s279 + $0x38] sm:$0xf]
        %v332 = vld [vmem:[%s279 + $0x3c] sm:$0xf]
        %v333 = vld [vmem:[%s279 + $0x40] sm:$0xf]
        %v334 = vld [vmem:[%s279 + $0x44] sm:$0xf]
        %v335 = vld [vmem:[%s279 + $0x48] sm:$0xf]
        %v336 = vld [vmem:[%s279 + $0x4c] sm:$0xf]
        %v337 = vld [vmem:[%s279 + $0x50] sm:$0xf]
        %v338 = vld [vmem:[%s279 + $0x54] sm:$0xf]
        %v339 = vld [vmem:[%s279 + $0x58] sm:$0xf]
        %v340 = vld [vmem:[%s279 + $0x5c] sm:$0xf]
        %v341 = vld [vmem:[%s279 + $0x60] sm:$0xf]
        %v342 = vld [vmem:[%s279 + $0x64] sm:$0xf]
        %v343 = vld [vmem:[%s279 + $0x68] sm:$0xf]
        %v344 = vld [vmem:[%s279 + $0x6c] sm:$0xf]
        %v345 = vld [vmem:[%s279 + $0x70] sm:$0xf]
        %v346 = vld [vmem:[%s279 + $0x74] sm:$0xf]
        %v347 = vld [vmem:[%s279 + $0x78] sm:$0xf]
        %v348 = vld [vmem:[%s279 + $0x7c] sm:$0xf]
        %v349 = vld [vmem:[%s1] sm:$0xf]
        %v350 = vld [vmem:[%s1 + $0x4] sm:$0xf]
        %v351 = vld [vmem:[%s1 + $0x8] sm:$0xf]
        %v352 = vld [vmem:[%s1 + $0xc] sm:$0xf]
        %v353 = vld [vmem:[%s1 + $0x10] sm:$0xf]
        %v354 = vld [vmem:[%s1 + $0x14] sm:$0xf]
        %v355 = vld [vmem:[%s1 + $0x18] sm:$0xf]
        %v356 = vld [vmem:[%s1 + $0x1c] sm:$0xf]
        %v389 = vunpack.c.l.b16 %v317
        %v390 = vunpack.c.l.b16 %v318
        %v391 = vunpack.c.l.b16 %v319
        %v392 = vunpack.c.l.b16 %v320
        %v393 = vunpack.c.l.b16 %v321
        %v394 = vunpack.c.l.b16 %v322
        %v395 = vunpack.c.l.b16 %v323
        %v396 = vunpack.c.l.b16 %v324
        %v397 = vunpack.c.l.b16 %v325
        %v398 = vunpack.c.l.b16 %v326
        %v399 = vunpack.c.l.b16 %v327
        %v400 = vunpack.c.l.b16 %v328
        %v401 = vunpack.c.l.b16 %v329
        %v402 = vunpack.c.l.b16 %v330
        %v403 = vunpack.c.l.b16 %v331
        %v404 = vunpack.c.l.b16 %v332
        %v405 = vunpack.c.l.b16 %v333
        %v406 = vunpack.c.l.b16 %v334
        %v407 = vunpack.c.l.b16 %v335
        %v408 = vunpack.c.l.b16 %v336
        %v409 = vunpack.c.l.b16 %v337
        %v410 = vunpack.c.l.b16 %v338
        %v411 = vunpack.c.l.b16 %v339
        %v412 = vunpack.c.l.b16 %v340
        %v413 = vunpack.c.l.b16 %v341
        %v414 = vunpack.c.l.b16 %v342
        %v415 = vunpack.c.l.b16 %v343
        %v416 = vunpack.c.l.b16 %v344
        %v417 = vunpack.c.l.b16 %v345
        %v418 = vunpack.c.l.b16 %v346
        %v419 = vunpack.c.l.b16 %v347
        %v420 = vunpack.c.l.b16 %v348
        %v421 = vpack.c.b16 %v390, %v389
        %v422 = vpack.c.b16 %v392, %v391
        %v423 = vpack.c.b16 %v394, %v393
        %v424 = vpack.c.b16 %v396, %v395
        %v425 = vpack.c.b16 %v398, %v397
        %v426 = vpack.c.b16 %v400, %v399
        %v427 = vpack.c.b16 %v402, %v401
        %v428 = vpack.c.b16 %v404, %v403
        %v429 = vpack.c.b16 %v406, %v405
        %v430 = vpack.c.b16 %v408, %v407
        %v431 = vpack.c.b16 %v410, %v409
        %v432 = vpack.c.b16 %v412, %v411
        %v433 = vpack.c.b16 %v414, %v413
        %v434 = vpack.c.b16 %v416, %v415
        %v435 = vpack.c.b16 %v418, %v417
        %v436 = vpack.c.b16 %v420, %v419
        %v445 = vunpack.c.l.b16 %v349
        %v446 = vunpack.c.l.b16 %v350
        %v447 = vunpack.c.l.b16 %v351
        %v448 = vunpack.c.l.b16 %v352
        %v449 = vunpack.c.l.b16 %v353
        %v450 = vunpack.c.l.b16 %v354
        %v451 = vunpack.c.l.b16 %v355
        %v452 = vunpack.c.l.b16 %v356
        %v453 = vpack.c.b16 %v446, %v445
        %v454 = vpack.c.b16 %v448, %v447
        %v455 = vpack.c.b16 %v450, %v449
        %v456 = vpack.c.b16 %v452, %v451
        %vm461 = vcmask 523264
        %v463 = vsel %vm461, %v421, 0
        %v466 = vsel %vm461, %v422, 0
        %v469 = vsel %vm461, %v423, 0
        %v472 = vsel %vm461, %v424, 0
        %v475 = vsel %vm461, %v425, 0
        %v478 = vsel %vm461, %v426, 0
        %v481 = vsel %vm461, %v427, 0
        %v484 = vsel %vm461, %v428, 0
        %v487 = vsel %vm461, %v429, 0
        %v490 = vsel %vm461, %v430, 0
        %v493 = vsel %vm461, %v431, 0
        %v496 = vsel %vm461, %v432, 0
        %v499 = vsel %vm461, %v433, 0
        %v502 = vsel %vm461, %v434, 0
        %v505 = vsel %vm461, %v435, 0
        %v508 = vsel %vm461, %v436, 0
        %510 = vmatpush.bf16.msra.mxu0 0
        %511 = vmatpush.bf16.msra.mxu0 0
        %512 = vmatpush.bf16.msra.mxu0 0
        %513 = vmatpush.bf16.msra.mxu0 0
        %514 = vmatpush.bf16.msra.mxu0 %v456
        %515 = vmatpush.bf16.msra.mxu0 %v455
        %516 = vmatpush.bf16.msra.mxu0 %v454
        %517 = vmatpush.bf16.msra.mxu0 %v453
        %518 = vmatmul.bf16.gmra.mxu0 %v463
        %v519 = vpop.f32.mrf.mxu0
        %v520 = vadd.f32 0.0, %v519
        %v521 = vpop.f32.mrf.mxu0
        %v522 = vadd.f32 0.0, %v521
        %523 = vmatmul.bf16.gmra.mxu0 %v466
        %v524 = vpop.f32.mrf.mxu0
        %v525 = vadd.f32 0.0, %v524
        %v526 = vpop.f32.mrf.mxu0
        %v527 = vadd.f32 0.0, %v526
        %528 = vmatmul.bf16.gmra.mxu0 %v469
        %v529 = vpop.f32.mrf.mxu0
        %v530 = vadd.f32 0.0, %v529
        %v531 = vpop.f32.mrf.mxu0
        %v532 = vadd.f32 0.0, %v531
        %533 = vmatmul.bf16.gmra.mxu0 %v472
        %v534 = vpop.f32.mrf.mxu0
        %v535 = vadd.f32 0.0, %v534
        %v536 = vpop.f32.mrf.mxu0
        %v537 = vadd.f32 0.0, %v536
        %538 = vmatmul.bf16.gmra.mxu0 %v475
        %v539 = vpop.f32.mrf.mxu0
        %v540 = vadd.f32 0.0, %v539
        %v541 = vpop.f32.mrf.mxu0
        %v542 = vadd.f32 0.0, %v541
        %543 = vmatmul.bf16.gmra.mxu0 %v478
        %v544 = vpop.f32.mrf.mxu0
        %v545 = vadd.f32 0.0, %v544
        %v546 = vpop.f32.mrf.mxu0
        %v547 = vadd.f32 0.0, %v546
        %548 = vmatmul.bf16.gmra.mxu0 %v481
        %v549 = vpop.f32.mrf.mxu0
        %v550 = vadd.f32 0.0, %v549
        %v551 = vpop.f32.mrf.mxu0
        %v552 = vadd.f32 0.0, %v551
        %553 = vmatmul.bf16.gmra.mxu0 %v484
        %v554 = vpop.f32.mrf.mxu0
        %v555 = vadd.f32 0.0, %v554
        %v556 = vpop.f32.mrf.mxu0
        %v557 = vadd.f32 0.0, %v556
        %558 = vmatmul.bf16.gmra.mxu0 %v487
        %v559 = vpop.f32.mrf.mxu0
        %v560 = vadd.f32 0.0, %v559
        %v561 = vpop.f32.mrf.mxu0
        %v562 = vadd.f32 0.0, %v561
        %563 = vmatmul.bf16.gmra.mxu0 %v490
        %v564 = vpop.f32.mrf.mxu0
        %v565 = vadd.f32 0.0, %v564
        %v566 = vpop.f32.mrf.mxu0
        %v567 = vadd.f32 0.0, %v566
        %568 = vmatmul.bf16.gmra.mxu0 %v493
        %v569 = vpop.f32.mrf.mxu0
        %v570 = vadd.f32 0.0, %v569
        %v571 = vpop.f32.mrf.mxu0
        %v572 = vadd.f32 0.0, %v571
        %573 = vmatmul.bf16.gmra.mxu0 %v496
        %v574 = vpop.f32.mrf.mxu0
        %v575 = vadd.f32 0.0, %v574
        %v576 = vpop.f32.mrf.mxu0
        %v577 = vadd.f32 0.0, %v576
        %578 = vmatmul.bf16.gmra.mxu0 %v499
        %v579 = vpop.f32.mrf.mxu0
        %v580 = vadd.f32 0.0, %v579
        %v581 = vpop.f32.mrf.mxu0
        %v582 = vadd.f32 0.0, %v581
        %583 = vmatmul.bf16.gmra.mxu0 %v502
        %v584 = vpop.f32.mrf.mxu0
        %v585 = vadd.f32 0.0, %v584
        %v586 = vpop.f32.mrf.mxu0
        %v587 = vadd.f32 0.0, %v586
        %588 = vmatmul.bf16.gmra.mxu0 %v505
        %v589 = vpop.f32.mrf.mxu0
        %v590 = vadd.f32 0.0, %v589
        %v591 = vpop.f32.mrf.mxu0
        %v592 = vadd.f32 0.0, %v591
        %593 = vmatmul.bf16.gmra.mxu0 %v508
        %v594 = vpop.f32.mrf.mxu0
        %v595 = vadd.f32 0.0, %v594
        %v596 = vpop.f32.mrf.mxu0
        %v597 = vadd.f32 0.0, %v596
        %598 = vdwg.mxu0
        %v599 = vld [vmem:[%s2] sm:$0x1]
        %v601 = vperm.slane %v599, 0
        %v603 = vmul.f32 %v520, %v601
        %v604 = vmul.f32 %v522, %v601
        %v605 = vmul.f32 %v525, %v601
        %v606 = vmul.f32 %v527, %v601
        %v607 = vmul.f32 %v530, %v601
        %v608 = vmul.f32 %v532, %v601
        %v609 = vmul.f32 %v535, %v601
        %v610 = vmul.f32 %v537, %v601
        %v611 = vmul.f32 %v540, %v601
        %v612 = vmul.f32 %v542, %v601
        %v613 = vmul.f32 %v545, %v601
        %v614 = vmul.f32 %v547, %v601
        %v615 = vmul.f32 %v550, %v601
        %v616 = vmul.f32 %v552, %v601
        %v617 = vmul.f32 %v555, %v601
        %v618 = vmul.f32 %v557, %v601
        %v619 = vmul.f32 %v560, %v601
        %v620 = vmul.f32 %v562, %v601
        %v621 = vmul.f32 %v565, %v601
        %v622 = vmul.f32 %v567, %v601
        %v623 = vmul.f32 %v570, %v601
        %v624 = vmul.f32 %v572, %v601
        %v625 = vmul.f32 %v575, %v601
        %v626 = vmul.f32 %v577, %v601
        %v627 = vmul.f32 %v580, %v601
        %v628 = vmul.f32 %v582, %v601
        %v629 = vmul.f32 %v585, %v601
        %v630 = vmul.f32 %v587, %v601
        %v631 = vmul.f32 %v590, %v601
        %v632 = vmul.f32 %v592, %v601
        %v633 = vmul.f32 %v595, %v601
        %v634 = vmul.f32 %v597, %v601
        %v635 = vld [vmem:[%s3] sm:$0x1]
        %v637 = vperm.slane %v635, 0
        %v639 = vadd.f32 %v603, %v637
        %v640 = vadd.f32 %v604, %v637
        %v641 = vadd.f32 %v605, %v637
        %v642 = vadd.f32 %v606, %v637
        %v643 = vadd.f32 %v607, %v637
        %v644 = vadd.f32 %v608, %v637
        %v645 = vadd.f32 %v609, %v637
        %v646 = vadd.f32 %v610, %v637
        %v647 = vadd.f32 %v611, %v637
        %v648 = vadd.f32 %v612, %v637
        %v649 = vadd.f32 %v613, %v637
        %v650 = vadd.f32 %v614, %v637
        %v651 = vadd.f32 %v615, %v637
        %v652 = vadd.f32 %v616, %v637
        %v653 = vadd.f32 %v617, %v637
        %v654 = vadd.f32 %v618, %v637
        %v655 = vadd.f32 %v619, %v637
        %v656 = vadd.f32 %v620, %v637
        %v657 = vadd.f32 %v621, %v637
        %v658 = vadd.f32 %v622, %v637
        %v659 = vadd.f32 %v623, %v637
        %v660 = vadd.f32 %v624, %v637
        %v661 = vadd.f32 %v625, %v637
        %v662 = vadd.f32 %v626, %v637
        %v663 = vadd.f32 %v627, %v637
        %v664 = vadd.f32 %v628, %v637
        %v665 = vadd.f32 %v629, %v637
        %v666 = vadd.f32 %v630, %v637
        %v667 = vadd.f32 %v631, %v637
        %v668 = vadd.f32 %v632, %v637
        %v669 = vadd.f32 %v633, %v637
        %v670 = vadd.f32 %v634, %v637
        %v671 = vxor.u32 %v639, 2147483648
        %v672 = vxor.u32 %v640, 2147483648
        %v673 = vxor.u32 %v641, 2147483648
        %v674 = vxor.u32 %v642, 2147483648
        %v675 = vxor.u32 %v643, 2147483648
        %v676 = vxor.u32 %v644, 2147483648
        %v677 = vxor.u32 %v645, 2147483648
        %v678 = vxor.u32 %v646, 2147483648
        %v679 = vxor.u32 %v647, 2147483648
        %v680 = vxor.u32 %v648, 2147483648
        %v681 = vxor.u32 %v649, 2147483648
        %v682 = vxor.u32 %v650, 2147483648
        %v683 = vxor.u32 %v651, 2147483648
        %v684 = vxor.u32 %v652, 2147483648
        %v685 = vxor.u32 %v653, 2147483648
        %v686 = vxor.u32 %v654, 2147483648
        %v687 = vxor.u32 %v655, 2147483648
        %v688 = vxor.u32 %v656, 2147483648
        %v689 = vxor.u32 %v657, 2147483648
        %v690 = vxor.u32 %v658, 2147483648
        %v691 = vxor.u32 %v659, 2147483648
        %v692 = vxor.u32 %v660, 2147483648
        %v693 = vxor.u32 %v661, 2147483648
        %v694 = vxor.u32 %v662, 2147483648
        %v695 = vxor.u32 %v663, 2147483648
        %v696 = vxor.u32 %v664, 2147483648
        %v697 = vxor.u32 %v665, 2147483648
        %v698 = vxor.u32 %v666, 2147483648
        %v699 = vxor.u32 %v667, 2147483648
        %v700 = vxor.u32 %v668, 2147483648
        %v701 = vxor.u32 %v669, 2147483648
        %v702 = vxor.u32 %v670, 2147483648
        %v703 = vmul.f32 %v671, 1.442695
        %v704 = vpow.pop %v703
        %v705 = vmul.f32 %v672, 1.442695
        %v706 = vpow.pop %v705
        %v707 = vmul.f32 %v673, 1.442695
        %v708 = vpow.pop %v707
        %v709 = vmul.f32 %v674, 1.442695
        %v710 = vpow.pop %v709
        %v711 = vmul.f32 %v675, 1.442695
        %v712 = vpow.pop %v711
        %v713 = vmul.f32 %v676, 1.442695
        %v714 = vpow.pop %v713
        %v715 = vmul.f32 %v677, 1.442695
        %v716 = vpow.pop %v715
        %v717 = vmul.f32 %v678, 1.442695
        %v718 = vpow.pop %v717
        %v719 = vmul.f32 %v679, 1.442695
        %v720 = vpow.pop %v719
        %v721 = vmul.f32 %v680, 1.442695
        %v722 = vpow.pop %v721
        %v723 = vmul.f32 %v681, 1.442695
        %v724 = vpow.pop %v723
        %v725 = vmul.f32 %v682, 1.442695
        %v726 = vpow.pop %v725
        %v727 = vmul.f32 %v683, 1.442695
        %v728 = vpow.pop %v727
        %v729 = vmul.f32 %v684, 1.442695
        %v730 = vpow.pop %v729
        %v731 = vmul.f32 %v685, 1.442695
        %v732 = vpow.pop %v731
        %v733 = vmul.f32 %v686, 1.442695
        %v734 = vpow.pop %v733
        %v735 = vmul.f32 %v687, 1.442695
        %v736 = vpow.pop %v735
        %v737 = vmul.f32 %v688, 1.442695
        %v738 = vpow.pop %v737
        %v739 = vmul.f32 %v689, 1.442695
        %v740 = vpow.pop %v739
        %v741 = vmul.f32 %v690, 1.442695
        %v742 = vpow.pop %v741
        %v743 = vmul.f32 %v691, 1.442695
        %v744 = vpow.pop %v743
        %v745 = vmul.f32 %v692, 1.442695
        %v746 = vpow.pop %v745
        %v747 = vmul.f32 %v693, 1.442695
        %v748 = vpow.pop %v747
        %v749 = vmul.f32 %v694, 1.442695
        %v750 = vpow.pop %v749
        %v751 = vmul.f32 %v695, 1.442695
        %v752 = vpow.pop %v751
        %v753 = vmul.f32 %v696, 1.442695
        %v754 = vpow.pop %v753
        %v755 = vmul.f32 %v697, 1.442695
        %v756 = vpow.pop %v755
        %v757 = vmul.f32 %v698, 1.442695
        %v758 = vpow.pop %v757
        %v759 = vmul.f32 %v699, 1.442695
        %v760 = vpow.pop %v759
        %v761 = vmul.f32 %v700, 1.442695
        %v762 = vpow.pop %v761
        %v763 = vmul.f32 %v701, 1.442695
        %v764 = vpow.pop %v763
        %v765 = vmul.f32 %v702, 1.442695
        %v766 = vpow.pop %v765
        %v767 = vadd.f32 %v704, 1.0
        %v768 = vadd.f32 %v706, 1.0
        %v769 = vadd.f32 %v708, 1.0
        %v770 = vadd.f32 %v710, 1.0
        %v771 = vadd.f32 %v712, 1.0
        %v772 = vadd.f32 %v714, 1.0
        %v773 = vadd.f32 %v716, 1.0
        %v774 = vadd.f32 %v718, 1.0
        %v775 = vadd.f32 %v720, 1.0
        %v776 = vadd.f32 %v722, 1.0
        %v777 = vadd.f32 %v724, 1.0
        %v778 = vadd.f32 %v726, 1.0
        %v779 = vadd.f32 %v728, 1.0
        %v780 = vadd.f32 %v730, 1.0
        %v781 = vadd.f32 %v732, 1.0
        %v782 = vadd.f32 %v734, 1.0
        %v783 = vadd.f32 %v736, 1.0
        %v784 = vadd.f32 %v738, 1.0
        %v785 = vadd.f32 %v740, 1.0
        %v786 = vadd.f32 %v742, 1.0
        %v787 = vadd.f32 %v744, 1.0
        %v788 = vadd.f32 %v746, 1.0
        %v789 = vadd.f32 %v748, 1.0
        %v790 = vadd.f32 %v750, 1.0
        %v791 = vadd.f32 %v752, 1.0
        %v792 = vadd.f32 %v754, 1.0
        %v793 = vadd.f32 %v756, 1.0
        %v794 = vadd.f32 %v758, 1.0
        %v795 = vadd.f32 %v760, 1.0
        %v796 = vadd.f32 %v762, 1.0
        %v797 = vadd.f32 %v764, 1.0
        %v798 = vadd.f32 %v766, 1.0
        %v799 = vrcp.pop %v767
        %v800 = vmul.f32 %v767, %v799
        %v801 = vsub.f32 1.0, %v800
        %v802 = vmul.f32 %v799, %v801
        %v803 = vadd.f32 %v799, %v802
        %vm804 = vweird.f32 %v767
        %vm805 = vweird.f32 %v799
        %vm806 = vmor %vm804, %vm805
        %v807 = vsel %vm806, %v799, %v803
        %v808 = vand.u32 2147483647, %v767
        %vm809 = vcmp.eq.f32.partialorder %v808, 8.507059e+37
        %v810 = vand.u32 %v767, 2147483648
        %v811 = vor.u32 1.1754944e-38, %v810
        %v812 = vsel %vm809, %v811, %v807
        %v813 = vmul.f32 1.0, %v812
        %v814 = vrcp.pop %v768
        %v815 = vmul.f32 %v768, %v814
        %v816 = vsub.f32 1.0, %v815
        %v817 = vmul.f32 %v814, %v816
        %v818 = vadd.f32 %v814, %v817
        %vm819 = vweird.f32 %v768
        %vm820 = vweird.f32 %v814
        %vm821 = vmor %vm819, %vm820
        %v822 = vsel %vm821, %v814, %v818
        %v823 = vand.u32 2147483647, %v768
        %vm824 = vcmp.eq.f32.partialorder %v823, 8.507059e+37
        %v825 = vand.u32 %v768, 2147483648
        %v826 = vor.u32 1.1754944e-38, %v825
        %v827 = vsel %vm824, %v826, %v822
        %v828 = vmul.f32 1.0, %v827
        %v829 = vrcp.pop %v769
        %v830 = vmul.f32 %v769, %v829
        %v831 = vsub.f32 1.0, %v830
        %v832 = vmul.f32 %v829, %v831
        %v833 = vadd.f32 %v829, %v832
        %vm834 = vweird.f32 %v769
        %vm835 = vweird.f32 %v829
        %vm836 = vmor %vm834, %vm835
        %v837 = vsel %vm836, %v829, %v833
        %v838 = vand.u32 2147483647, %v769
        %vm839 = vcmp.eq.f32.partialorder %v838, 8.507059e+37
        %v840 = vand.u32 %v769, 2147483648
        %v841 = vor.u32 1.1754944e-38, %v840
        %v842 = vsel %vm839, %v841, %v837
        %v843 = vmul.f32 1.0, %v842
        %v844 = vrcp.pop %v770
        %v845 = vmul.f32 %v770, %v844
        %v846 = vsub.f32 1.0, %v845
        %v847 = vmul.f32 %v844, %v846
        %v848 = vadd.f32 %v844, %v847
        %vm849 = vweird.f32 %v770
        %vm850 = vweird.f32 %v844
        %vm851 = vmor %vm849, %vm850
        %v852 = vsel %vm851, %v844, %v848
        %v853 = vand.u32 2147483647, %v770
        %vm854 = vcmp.eq.f32.partialorder %v853, 8.507059e+37
        %v855 = vand.u32 %v770, 2147483648
        %v856 = vor.u32 1.1754944e-38, %v855
        %v857 = vsel %vm854, %v856, %v852
        %v858 = vmul.f32 1.0, %v857
        %v859 = vrcp.pop %v771
        %v860 = vmul.f32 %v771, %v859
        %v861 = vsub.f32 1.0, %v860
        %v862 = vmul.f32 %v859, %v861
        %v863 = vadd.f32 %v859, %v862
        %vm864 = vweird.f32 %v771
        %vm865 = vweird.f32 %v859
        %vm866 = vmor %vm864, %vm865
        %v867 = vsel %vm866, %v859, %v863
        %v868 = vand.u32 2147483647, %v771
        %vm869 = vcmp.eq.f32.partialorder %v868, 8.507059e+37
        %v870 = vand.u32 %v771, 2147483648
        %v871 = vor.u32 1.1754944e-38, %v870
        %v872 = vsel %vm869, %v871, %v867
        %v873 = vmul.f32 1.0, %v872
        %v874 = vrcp.pop %v772
        %v875 = vmul.f32 %v772, %v874
        %v876 = vsub.f32 1.0, %v875
        %v877 = vmul.f32 %v874, %v876
        %v878 = vadd.f32 %v874, %v877
        %vm879 = vweird.f32 %v772
        %vm880 = vweird.f32 %v874
        %vm881 = vmor %vm879, %vm880
        %v882 = vsel %vm881, %v874, %v878
        %v883 = vand.u32 2147483647, %v772
        %vm884 = vcmp.eq.f32.partialorder %v883, 8.507059e+37
        %v885 = vand.u32 %v772, 2147483648
        %v886 = vor.u32 1.1754944e-38, %v885
        %v887 = vsel %vm884, %v886, %v882
        %v888 = vmul.f32 1.0, %v887
        %v889 = vrcp.pop %v773
        %v890 = vmul.f32 %v773, %v889
        %v891 = vsub.f32 1.0, %v890
        %v892 = vmul.f32 %v889, %v891
        %v893 = vadd.f32 %v889, %v892
        %vm894 = vweird.f32 %v773
        %vm895 = vweird.f32 %v889
        %vm896 = vmor %vm894, %vm895
        %v897 = vsel %vm896, %v889, %v893
        %v898 = vand.u32 2147483647, %v773
        %vm899 = vcmp.eq.f32.partialorder %v898, 8.507059e+37
        %v900 = vand.u32 %v773, 2147483648
        %v901 = vor.u32 1.1754944e-38, %v900
        %v902 = vsel %vm899, %v901, %v897
        %v903 = vmul.f32 1.0, %v902
        %v904 = vrcp.pop %v774
        %v905 = vmul.f32 %v774, %v904
        %v906 = vsub.f32 1.0, %v905
        %v907 = vmul.f32 %v904, %v906
        %v908 = vadd.f32 %v904, %v907
        %vm909 = vweird.f32 %v774
        %vm910 = vweird.f32 %v904
        %vm911 = vmor %vm909, %vm910
        %v912 = vsel %vm911, %v904, %v908
        %v913 = vand.u32 2147483647, %v774
        %vm914 = vcmp.eq.f32.partialorder %v913, 8.507059e+37
        %v915 = vand.u32 %v774, 2147483648
        %v916 = vor.u32 1.1754944e-38, %v915
        %v917 = vsel %vm914, %v916, %v912
        %v918 = vmul.f32 1.0, %v917
        %v919 = vrcp.pop %v775
        %v920 = vmul.f32 %v775, %v919
        %v921 = vsub.f32 1.0, %v920
        %v922 = vmul.f32 %v919, %v921
        %v923 = vadd.f32 %v919, %v922
        %vm924 = vweird.f32 %v775
        %vm925 = vweird.f32 %v919
        %vm926 = vmor %vm924, %vm925
        %v927 = vsel %vm926, %v919, %v923
        %v928 = vand.u32 2147483647, %v775
        %vm929 = vcmp.eq.f32.partialorder %v928, 8.507059e+37
        %v930 = vand.u32 %v775, 2147483648
        %v931 = vor.u32 1.1754944e-38, %v930
        %v932 = vsel %vm929, %v931, %v927
        %v933 = vmul.f32 1.0, %v932
        %v934 = vrcp.pop %v776
        %v935 = vmul.f32 %v776, %v934
        %v936 = vsub.f32 1.0, %v935
        %v937 = vmul.f32 %v934, %v936
        %v938 = vadd.f32 %v934, %v937
        %vm939 = vweird.f32 %v776
        %vm940 = vweird.f32 %v934
        %vm941 = vmor %vm939, %vm940
        %v942 = vsel %vm941, %v934, %v938
        %v943 = vand.u32 2147483647, %v776
        %vm944 = vcmp.eq.f32.partialorder %v943, 8.507059e+37
        %v945 = vand.u32 %v776, 2147483648
        %v946 = vor.u32 1.1754944e-38, %v945
        %v947 = vsel %vm944, %v946, %v942
        %v948 = vmul.f32 1.0, %v947
        %v949 = vrcp.pop %v777
        %v950 = vmul.f32 %v777, %v949
        %v951 = vsub.f32 1.0, %v950
        %v952 = vmul.f32 %v949, %v951
        %v953 = vadd.f32 %v949, %v952
        %vm954 = vweird.f32 %v777
        %vm955 = vweird.f32 %v949
        %vm956 = vmor %vm954, %vm955
        %v957 = vsel %vm956, %v949, %v953
        %v958 = vand.u32 2147483647, %v777
        %vm959 = vcmp.eq.f32.partialorder %v958, 8.507059e+37
        %v960 = vand.u32 %v777, 2147483648
        %v961 = vor.u32 1.1754944e-38, %v960
        %v962 = vsel %vm959, %v961, %v957
        %v963 = vmul.f32 1.0, %v962
        %v964 = vrcp.pop %v778
        %v965 = vmul.f32 %v778, %v964
        %v966 = vsub.f32 1.0, %v965
        %v967 = vmul.f32 %v964, %v966
        %v968 = vadd.f32 %v964, %v967
        %vm969 = vweird.f32 %v778
        %vm970 = vweird.f32 %v964
        %vm971 = vmor %vm969, %vm970
        %v972 = vsel %vm971, %v964, %v968
        %v973 = vand.u32 2147483647, %v778
        %vm974 = vcmp.eq.f32.partialorder %v973, 8.507059e+37
        %v975 = vand.u32 %v778, 2147483648
        %v976 = vor.u32 1.1754944e-38, %v975
        %v977 = vsel %vm974, %v976, %v972
        %v978 = vmul.f32 1.0, %v977
        %v979 = vrcp.pop %v779
        %v980 = vmul.f32 %v779, %v979
        %v981 = vsub.f32 1.0, %v980
        %v982 = vmul.f32 %v979, %v981
        %v983 = vadd.f32 %v979, %v982
        %vm984 = vweird.f32 %v779
        %vm985 = vweird.f32 %v979
        %vm986 = vmor %vm984, %vm985
        %v987 = vsel %vm986, %v979, %v983
        %v988 = vand.u32 2147483647, %v779
        %vm989 = vcmp.eq.f32.partialorder %v988, 8.507059e+37
        %v990 = vand.u32 %v779, 2147483648
        %v991 = vor.u32 1.1754944e-38, %v990
        %v992 = vsel %vm989, %v991, %v987
        %v993 = vmul.f32 1.0, %v992
        %v994 = vrcp.pop %v780
        %v995 = vmul.f32 %v780, %v994
        %v996 = vsub.f32 1.0, %v995
        %v997 = vmul.f32 %v994, %v996
        %v998 = vadd.f32 %v994, %v997
        %vm999 = vweird.f32 %v780
        %vm1000 = vweird.f32 %v994
        %vm1001 = vmor %vm999, %vm1000
        %v1002 = vsel %vm1001, %v994, %v998
        %v1003 = vand.u32 2147483647, %v780
        %vm1004 = vcmp.eq.f32.partialorder %v1003, 8.507059e+37
        %v1005 = vand.u32 %v780, 2147483648
        %v1006 = vor.u32 1.1754944e-38, %v1005
        %v1007 = vsel %vm1004, %v1006, %v1002
        %v1008 = vmul.f32 1.0, %v1007
        %v1009 = vrcp.pop %v781
        %v1010 = vmul.f32 %v781, %v1009
        %v1011 = vsub.f32 1.0, %v1010
        %v1012 = vmul.f32 %v1009, %v1011
        %v1013 = vadd.f32 %v1009, %v1012
        %vm1014 = vweird.f32 %v781
        %vm1015 = vweird.f32 %v1009
        %vm1016 = vmor %vm1014, %vm1015
        %v1017 = vsel %vm1016, %v1009, %v1013
        %v1018 = vand.u32 2147483647, %v781
        %vm1019 = vcmp.eq.f32.partialorder %v1018, 8.507059e+37
        %v1020 = vand.u32 %v781, 2147483648
        %v1021 = vor.u32 1.1754944e-38, %v1020
        %v1022 = vsel %vm1019, %v1021, %v1017
        %v1023 = vmul.f32 1.0, %v1022
        %v1024 = vrcp.pop %v782
        %v1025 = vmul.f32 %v782, %v1024
        %v1026 = vsub.f32 1.0, %v1025
        %v1027 = vmul.f32 %v1024, %v1026
        %v1028 = vadd.f32 %v1024, %v1027
        %vm1029 = vweird.f32 %v782
        %vm1030 = vweird.f32 %v1024
        %vm1031 = vmor %vm1029, %vm1030
        %v1032 = vsel %vm1031, %v1024, %v1028
        %v1033 = vand.u32 2147483647, %v782
        %vm1034 = vcmp.eq.f32.partialorder %v1033, 8.507059e+37
        %v1035 = vand.u32 %v782, 2147483648
        %v1036 = vor.u32 1.1754944e-38, %v1035
        %v1037 = vsel %vm1034, %v1036, %v1032
        %v1038 = vmul.f32 1.0, %v1037
        %v1039 = vrcp.pop %v783
        %v1040 = vmul.f32 %v783, %v1039
        %v1041 = vsub.f32 1.0, %v1040
        %v1042 = vmul.f32 %v1039, %v1041
        %v1043 = vadd.f32 %v1039, %v1042
        %vm1044 = vweird.f32 %v783
        %vm1045 = vweird.f32 %v1039
        %vm1046 = vmor %vm1044, %vm1045
        %v1047 = vsel %vm1046, %v1039, %v1043
        %v1048 = vand.u32 2147483647, %v783
        %vm1049 = vcmp.eq.f32.partialorder %v1048, 8.507059e+37
        %v1050 = vand.u32 %v783, 2147483648
        %v1051 = vor.u32 1.1754944e-38, %v1050
        %v1052 = vsel %vm1049, %v1051, %v1047
        %v1053 = vmul.f32 1.0, %v1052
        %v1054 = vrcp.pop %v784
        %v1055 = vmul.f32 %v784, %v1054
        %v1056 = vsub.f32 1.0, %v1055
        %v1057 = vmul.f32 %v1054, %v1056
        %v1058 = vadd.f32 %v1054, %v1057
        %vm1059 = vweird.f32 %v784
        %vm1060 = vweird.f32 %v1054
        %vm1061 = vmor %vm1059, %vm1060
        %v1062 = vsel %vm1061, %v1054, %v1058
        %v1063 = vand.u32 2147483647, %v784
        %vm1064 = vcmp.eq.f32.partialorder %v1063, 8.507059e+37
        %v1065 = vand.u32 %v784, 2147483648
        %v1066 = vor.u32 1.1754944e-38, %v1065
        %v1067 = vsel %vm1064, %v1066, %v1062
        %v1068 = vmul.f32 1.0, %v1067
        %v1069 = vrcp.pop %v785
        %v1070 = vmul.f32 %v785, %v1069
        %v1071 = vsub.f32 1.0, %v1070
        %v1072 = vmul.f32 %v1069, %v1071
        %v1073 = vadd.f32 %v1069, %v1072
        %vm1074 = vweird.f32 %v785
        %vm1075 = vweird.f32 %v1069
        %vm1076 = vmor %vm1074, %vm1075
        %v1077 = vsel %vm1076, %v1069, %v1073
        %v1078 = vand.u32 2147483647, %v785
        %vm1079 = vcmp.eq.f32.partialorder %v1078, 8.507059e+37
        %v1080 = vand.u32 %v785, 2147483648
        %v1081 = vor.u32 1.1754944e-38, %v1080
        %v1082 = vsel %vm1079, %v1081, %v1077
        %v1083 = vmul.f32 1.0, %v1082
        %v1084 = vrcp.pop %v786
        %v1085 = vmul.f32 %v786, %v1084
        %v1086 = vsub.f32 1.0, %v1085
        %v1087 = vmul.f32 %v1084, %v1086
        %v1088 = vadd.f32 %v1084, %v1087
        %vm1089 = vweird.f32 %v786
        %vm1090 = vweird.f32 %v1084
        %vm1091 = vmor %vm1089, %vm1090
        %v1092 = vsel %vm1091, %v1084, %v1088
        %v1093 = vand.u32 2147483647, %v786
        %vm1094 = vcmp.eq.f32.partialorder %v1093, 8.507059e+37
        %v1095 = vand.u32 %v786, 2147483648
        %v1096 = vor.u32 1.1754944e-38, %v1095
        %v1097 = vsel %vm1094, %v1096, %v1092
        %v1098 = vmul.f32 1.0, %v1097
        %v1099 = vrcp.pop %v787
        %v1100 = vmul.f32 %v787, %v1099
        %v1101 = vsub.f32 1.0, %v1100
        %v1102 = vmul.f32 %v1099, %v1101
        %v1103 = vadd.f32 %v1099, %v1102
        %vm1104 = vweird.f32 %v787
        %vm1105 = vweird.f32 %v1099
        %vm1106 = vmor %vm1104, %vm1105
        %v1107 = vsel %vm1106, %v1099, %v1103
        %v1108 = vand.u32 2147483647, %v787
        %vm1109 = vcmp.eq.f32.partialorder %v1108, 8.507059e+37
        %v1110 = vand.u32 %v787, 2147483648
        %v1111 = vor.u32 1.1754944e-38, %v1110
        %v1112 = vsel %vm1109, %v1111, %v1107
        %v1113 = vmul.f32 1.0, %v1112
        %v1114 = vrcp.pop %v788
        %v1115 = vmul.f32 %v788, %v1114
        %v1116 = vsub.f32 1.0, %v1115
        %v1117 = vmul.f32 %v1114, %v1116
        %v1118 = vadd.f32 %v1114, %v1117
        %vm1119 = vweird.f32 %v788
        %vm1120 = vweird.f32 %v1114
        %vm1121 = vmor %vm1119, %vm1120
        %v1122 = vsel %vm1121, %v1114, %v1118
        %v1123 = vand.u32 2147483647, %v788
        %vm1124 = vcmp.eq.f32.partialorder %v1123, 8.507059e+37
        %v1125 = vand.u32 %v788, 2147483648
        %v1126 = vor.u32 1.1754944e-38, %v1125
        %v1127 = vsel %vm1124, %v1126, %v1122
        %v1128 = vmul.f32 1.0, %v1127
        %v1129 = vrcp.pop %v789
        %v1130 = vmul.f32 %v789, %v1129
        %v1131 = vsub.f32 1.0, %v1130
        %v1132 = vmul.f32 %v1129, %v1131
        %v1133 = vadd.f32 %v1129, %v1132
        %vm1134 = vweird.f32 %v789
        %vm1135 = vweird.f32 %v1129
        %vm1136 = vmor %vm1134, %vm1135
        %v1137 = vsel %vm1136, %v1129, %v1133
        %v1138 = vand.u32 2147483647, %v789
        %vm1139 = vcmp.eq.f32.partialorder %v1138, 8.507059e+37
        %v1140 = vand.u32 %v789, 2147483648
        %v1141 = vor.u32 1.1754944e-38, %v1140
        %v1142 = vsel %vm1139, %v1141, %v1137
        %v1143 = vmul.f32 1.0, %v1142
        %v1144 = vrcp.pop %v790
        %v1145 = vmul.f32 %v790, %v1144
        %v1146 = vsub.f32 1.0, %v1145
        %v1147 = vmul.f32 %v1144, %v1146
        %v1148 = vadd.f32 %v1144, %v1147
        %vm1149 = vweird.f32 %v790
        %vm1150 = vweird.f32 %v1144
        %vm1151 = vmor %vm1149, %vm1150
        %v1152 = vsel %vm1151, %v1144, %v1148
        %v1153 = vand.u32 2147483647, %v790
        %vm1154 = vcmp.eq.f32.partialorder %v1153, 8.507059e+37
        %v1155 = vand.u32 %v790, 2147483648
        %v1156 = vor.u32 1.1754944e-38, %v1155
        %v1157 = vsel %vm1154, %v1156, %v1152
        %v1158 = vmul.f32 1.0, %v1157
        %v1159 = vrcp.pop %v791
        %v1160 = vmul.f32 %v791, %v1159
        %v1161 = vsub.f32 1.0, %v1160
        %v1162 = vmul.f32 %v1159, %v1161
        %v1163 = vadd.f32 %v1159, %v1162
        %vm1164 = vweird.f32 %v791
        %vm1165 = vweird.f32 %v1159
        %vm1166 = vmor %vm1164, %vm1165
        %v1167 = vsel %vm1166, %v1159, %v1163
        %v1168 = vand.u32 2147483647, %v791
        %vm1169 = vcmp.eq.f32.partialorder %v1168, 8.507059e+37
        %v1170 = vand.u32 %v791, 2147483648
        %v1171 = vor.u32 1.1754944e-38, %v1170
        %v1172 = vsel %vm1169, %v1171, %v1167
        %v1173 = vmul.f32 1.0, %v1172
        %v1174 = vrcp.pop %v792
        %v1175 = vmul.f32 %v792, %v1174
        %v1176 = vsub.f32 1.0, %v1175
        %v1177 = vmul.f32 %v1174, %v1176
        %v1178 = vadd.f32 %v1174, %v1177
        %vm1179 = vweird.f32 %v792
        %vm1180 = vweird.f32 %v1174
        %vm1181 = vmor %vm1179, %vm1180
        %v1182 = vsel %vm1181, %v1174, %v1178
        %v1183 = vand.u32 2147483647, %v792
        %vm1184 = vcmp.eq.f32.partialorder %v1183, 8.507059e+37
        %v1185 = vand.u32 %v792, 2147483648
        %v1186 = vor.u32 1.1754944e-38, %v1185
        %v1187 = vsel %vm1184, %v1186, %v1182
        %v1188 = vmul.f32 1.0, %v1187
        %v1189 = vrcp.pop %v793
        %v1190 = vmul.f32 %v793, %v1189
        %v1191 = vsub.f32 1.0, %v1190
        %v1192 = vmul.f32 %v1189, %v1191
        %v1193 = vadd.f32 %v1189, %v1192
        %vm1194 = vweird.f32 %v793
        %vm1195 = vweird.f32 %v1189
        %vm1196 = vmor %vm1194, %vm1195
        %v1197 = vsel %vm1196, %v1189, %v1193
        %v1198 = vand.u32 2147483647, %v793
        %vm1199 = vcmp.eq.f32.partialorder %v1198, 8.507059e+37
        %v1200 = vand.u32 %v793, 2147483648
        %v1201 = vor.u32 1.1754944e-38, %v1200
        %v1202 = vsel %vm1199, %v1201, %v1197
        %v1203 = vmul.f32 1.0, %v1202
        %v1204 = vrcp.pop %v794
        %v1205 = vmul.f32 %v794, %v1204
        %v1206 = vsub.f32 1.0, %v1205
        %v1207 = vmul.f32 %v1204, %v1206
        %v1208 = vadd.f32 %v1204, %v1207
        %vm1209 = vweird.f32 %v794
        %vm1210 = vweird.f32 %v1204
        %vm1211 = vmor %vm1209, %vm1210
        %v1212 = vsel %vm1211, %v1204, %v1208
        %v1213 = vand.u32 2147483647, %v794
        %vm1214 = vcmp.eq.f32.partialorder %v1213, 8.507059e+37
        %v1215 = vand.u32 %v794, 2147483648
        %v1216 = vor.u32 1.1754944e-38, %v1215
        %v1217 = vsel %vm1214, %v1216, %v1212
        %v1218 = vmul.f32 1.0, %v1217
        %v1219 = vrcp.pop %v795
        %v1220 = vmul.f32 %v795, %v1219
        %v1221 = vsub.f32 1.0, %v1220
        %v1222 = vmul.f32 %v1219, %v1221
        %v1223 = vadd.f32 %v1219, %v1222
        %vm1224 = vweird.f32 %v795
        %vm1225 = vweird.f32 %v1219
        %vm1226 = vmor %vm1224, %vm1225
        %v1227 = vsel %vm1226, %v1219, %v1223
        %v1228 = vand.u32 2147483647, %v795
        %vm1229 = vcmp.eq.f32.partialorder %v1228, 8.507059e+37
        %v1230 = vand.u32 %v795, 2147483648
        %v1231 = vor.u32 1.1754944e-38, %v1230
        %v1232 = vsel %vm1229, %v1231, %v1227
        %v1233 = vmul.f32 1.0, %v1232
        %v1234 = vrcp.pop %v796
        %v1235 = vmul.f32 %v796, %v1234
        %v1236 = vsub.f32 1.0, %v1235
        %v1237 = vmul.f32 %v1234, %v1236
        %v1238 = vadd.f32 %v1234, %v1237
        %vm1239 = vweird.f32 %v796
        %vm1240 = vweird.f32 %v1234
        %vm1241 = vmor %vm1239, %vm1240
        %v1242 = vsel %vm1241, %v1234, %v1238
        %v1243 = vand.u32 2147483647, %v796
        %vm1244 = vcmp.eq.f32.partialorder %v1243, 8.507059e+37
        %v1245 = vand.u32 %v796, 2147483648
        %v1246 = vor.u32 1.1754944e-38, %v1245
        %v1247 = vsel %vm1244, %v1246, %v1242
        %v1248 = vmul.f32 1.0, %v1247
        %v1249 = vrcp.pop %v797
        %v1250 = vmul.f32 %v797, %v1249
        %v1251 = vsub.f32 1.0, %v1250
        %v1252 = vmul.f32 %v1249, %v1251
        %v1253 = vadd.f32 %v1249, %v1252
        %vm1254 = vweird.f32 %v797
        %vm1255 = vweird.f32 %v1249
        %vm1256 = vmor %vm1254, %vm1255
        %v1257 = vsel %vm1256, %v1249, %v1253
        %v1258 = vand.u32 2147483647, %v797
        %vm1259 = vcmp.eq.f32.partialorder %v1258, 8.507059e+37
        %v1260 = vand.u32 %v797, 2147483648
        %v1261 = vor.u32 1.1754944e-38, %v1260
        %v1262 = vsel %vm1259, %v1261, %v1257
        %v1263 = vmul.f32 1.0, %v1262
        %v1264 = vrcp.pop %v798
        %v1265 = vmul.f32 %v798, %v1264
        %v1266 = vsub.f32 1.0, %v1265
        %v1267 = vmul.f32 %v1264, %v1266
        %v1268 = vadd.f32 %v1264, %v1267
        %vm1269 = vweird.f32 %v798
        %vm1270 = vweird.f32 %v1264
        %vm1271 = vmor %vm1269, %vm1270
        %v1272 = vsel %vm1271, %v1264, %v1268
        %v1273 = vand.u32 2147483647, %v798
        %vm1274 = vcmp.eq.f32.partialorder %v1273, 8.507059e+37
        %v1275 = vand.u32 %v798, 2147483648
        %v1276 = vor.u32 1.1754944e-38, %v1275
        %v1277 = vsel %vm1274, %v1276, %v1272
        %v1278 = vmul.f32 1.0, %v1277
        %v1279 = vmul.f32 %v639, %v813
        %v1280 = vmul.f32 %v640, %v828
        %v1281 = vmul.f32 %v641, %v843
        %v1282 = vmul.f32 %v642, %v858
        %v1283 = vmul.f32 %v643, %v873
        %v1284 = vmul.f32 %v644, %v888
        %v1285 = vmul.f32 %v645, %v903
        %v1286 = vmul.f32 %v646, %v918
        %v1287 = vmul.f32 %v647, %v933
        %v1288 = vmul.f32 %v648, %v948
        %v1289 = vmul.f32 %v649, %v963
        %v1290 = vmul.f32 %v650, %v978
        %v1291 = vmul.f32 %v651, %v993
        %v1292 = vmul.f32 %v652, %v1008
        %v1293 = vmul.f32 %v653, %v1023
        %v1294 = vmul.f32 %v654, %v1038
        %v1295 = vmul.f32 %v655, %v1053
        %v1296 = vmul.f32 %v656, %v1068
        %v1297 = vmul.f32 %v657, %v1083
        %v1298 = vmul.f32 %v658, %v1098
        %v1299 = vmul.f32 %v659, %v1113
        %v1300 = vmul.f32 %v660, %v1128
        %v1301 = vmul.f32 %v661, %v1143
        %v1302 = vmul.f32 %v662, %v1158
        %v1303 = vmul.f32 %v663, %v1173
        %v1304 = vmul.f32 %v664, %v1188
        %v1305 = vmul.f32 %v665, %v1203
        %v1306 = vmul.f32 %v666, %v1218
        %v1307 = vmul.f32 %v667, %v1233
        %v1308 = vmul.f32 %v668, %v1248
        %v1309 = vmul.f32 %v669, %v1263
        %v1310 = vmul.f32 %v670, %v1278
        %vm1311 = vcmask 261120
        %1312 = vst.msk [vmem:[#allocation2] sm:$0xff] %vm1311, -inf
        %1313 = vst.msk [vmem:[#allocation2 + $0x8] sm:$0xff] %vm1311, -inf
        %vm1314 = vcmask 257024
        %1315 = vst.msk [vmem:[#allocation2 + $0x10] sm:$0xf] %vm1314, -inf
        %1316 = vst.msk [vmem:[#allocation2 + $0x18] sm:$0xff] %vm1311, -inf
        %1317 = vst.msk [vmem:[#allocation2 + $0x20] sm:$0xff] %vm1311, -inf
        %1318 = vst.msk [vmem:[#allocation2 + $0x28] sm:$0xf] %vm1314, -inf
        %1319 = vst.msk [vmem:[#allocation2 + $0x30] sm:$0xff] %vm1311, -inf
        %1320 = vst.msk [vmem:[#allocation2 + $0x38] sm:$0xff] %vm1311, -inf
        %1321 = vst.msk [vmem:[#allocation2 + $0x40] sm:$0xf] %vm1314, -inf
        %1322 = vst.msk [vmem:[#allocation2 + $0x48] sm:$0xff] %vm1311, -inf
        %1323 = vst.msk [vmem:[#allocation2 + $0x50] sm:$0xff] %vm1311, -inf
        %1324 = vst.msk [vmem:[#allocation2 + $0x58] sm:$0xf] %vm1314, -inf
        %1325 = vst.msk [vmem:[#allocation2 + $0x60] sm:$0xff] %vm1311, -inf
        %1326 = vst.msk [vmem:[#allocation2 + $0x68] sm:$0xff] %vm1311, -inf
        %1327 = vst.msk [vmem:[#allocation2 + $0x70] sm:$0xf] %vm1314, -inf
        %1328 = vst.msk [vmem:[#allocation2 + $0x78] sm:$0xff] %vm1311, -inf
        %1329 = vst.msk [vmem:[#allocation2 + $0x80] sm:$0xff] %vm1311, -inf
        %1330 = vst.msk [vmem:[#allocation2 + $0x88] sm:$0xf] %vm1314, -inf
        %1331 = vst.msk [vmem:[#allocation2 + $0x90] sm:$0xff] %vm1311, -inf
        %1332 = vst.msk [vmem:[#allocation2 + $0x98] sm:$0xff] %vm1311, -inf
        %1333 = vst.msk [vmem:[#allocation2 + $0xa0] sm:$0xf] %vm1314, -inf
        %1334 = vst.msk [vmem:[#allocation2 + $0xa8] sm:$0xff] %vm1311, -inf
        %1335 = vst.msk [vmem:[#allocation2 + $0xb0] sm:$0xff] %vm1311, -inf
        %1336 = vst.msk [vmem:[#allocation2 + $0xb8] sm:$0xf] %vm1314, -inf
        %1337 = vst.msk [vmem:[#allocation2 + $0xc0] sm:$0xff] %vm1311, -inf
        %1338 = vst.msk [vmem:[#allocation2 + $0xc8] sm:$0xff] %vm1311, -inf
        %1339 = vst.msk [vmem:[#allocation2 + $0xd0] sm:$0xf] %vm1314, -inf
        %1340 = vst.msk [vmem:[#allocation2 + $0xd8] sm:$0xff] %vm1311, -inf
        %1341 = vst.msk [vmem:[#allocation2 + $0xe0] sm:$0xff] %vm1311, -inf
        %1342 = vst.msk [vmem:[#allocation2 + $0xe8] sm:$0xf] %vm1314, -inf
        %1343 = vst.msk [vmem:[#allocation2 + $0xf0] sm:$0xff] %vm1311, -inf
        %1344 = vst.msk [vmem:[#allocation2 + $0xf8] sm:$0xff] %vm1311, -inf
        %1345 = vst.msk [vmem:[#allocation2 + $0x100] sm:$0xf] %vm1314, -inf
        %1346 = vst.msk [vmem:[#allocation2 + $0x108] sm:$0xff] %vm1311, -inf
        %1347 = vst.msk [vmem:[#allocation2 + $0x110] sm:$0xff] %vm1311, -inf
        %1348 = vst.msk [vmem:[#allocation2 + $0x118] sm:$0xf] %vm1314, -inf
        %1349 = vst.msk [vmem:[#allocation2 + $0x120] sm:$0xff] %vm1311, -inf
        %1350 = vst.msk [vmem:[#allocation2 + $0x128] sm:$0xff] %vm1311, -inf
        %1351 = vst.msk [vmem:[#allocation2 + $0x130] sm:$0xf] %vm1314, -inf
        %1352 = vst.msk [vmem:[#allocation2 + $0x138] sm:$0xff] %vm1311, -inf
        %1353 = vst.msk [vmem:[#allocation2 + $0x140] sm:$0xff] %vm1311, -inf
        %1354 = vst.msk [vmem:[#allocation2 + $0x148] sm:$0xf] %vm1314, -inf
        %1355 = vst.msk [vmem:[#allocation2 + $0x150] sm:$0xff] %vm1311, -inf
        %1356 = vst.msk [vmem:[#allocation2 + $0x158] sm:$0xff] %vm1311, -inf
        %1357 = vst.msk [vmem:[#allocation2 + $0x160] sm:$0xf] %vm1314, -inf
        %1358 = vst.msk [vmem:[#allocation2 + $0x168] sm:$0xff] %vm1311, -inf
        %1359 = vst.msk [vmem:[#allocation2 + $0x170] sm:$0xff] %vm1311, -inf
        %1360 = vst.msk [vmem:[#allocation2 + $0x178] sm:$0xf] %vm1314, -inf
        %1361 = vst.msk [vmem:[#allocation2 + $0x180] sm:$0xff] %vm1311, -inf
        %1362 = vst.msk [vmem:[#allocation2 + $0x188] sm:$0xff] %vm1311, -inf
        %1363 = vst.msk [vmem:[#allocation2 + $0x190] sm:$0xf] %vm1314, -inf
        %1364 = vst.msk [vmem:[#allocation2 + $0x198] sm:$0xff] %vm1311, -inf
        %1365 = vst.msk [vmem:[#allocation2 + $0x1a0] sm:$0xff] %vm1311, -inf
        %1366 = vst.msk [vmem:[#allocation2 + $0x1a8] sm:$0xf] %vm1314, -inf
        %1367 = vst.msk [vmem:[#allocation2 + $0x1b0] sm:$0xff] %vm1311, -inf
        %1368 = vst.msk [vmem:[#allocation2 + $0x1b8] sm:$0xff] %vm1311, -inf
        %1369 = vst.msk [vmem:[#allocation2 + $0x1c0] sm:$0xf] %vm1314, -inf
        %1370 = vst.msk [vmem:[#allocation2 + $0x1c8] sm:$0xff] %vm1311, -inf
        %1371 = vst.msk [vmem:[#allocation2 + $0x1d0] sm:$0xff] %vm1311, -inf
        %1372 = vst.msk [vmem:[#allocation2 + $0x1d8] sm:$0xf] %vm1314, -inf
        %s1373 = scalar_lea.vmem [#allocation2], 48
        %1374 = vst.msk [vmem:[%s1373 + $0x2] sm:$0xff] %vm1311, %v1279
        %1375 = vst.msk [vmem:[%s1373 + $0xa] sm:$0xff] %vm1311, %v1280
        %1376 = vst.msk [vmem:[%s1373 + $0x1a] sm:$0xff] %vm1311, %v1281
        %1377 = vst.msk [vmem:[%s1373 + $0x22] sm:$0xff] %vm1311, %v1282
        %1378 = vst.msk [vmem:[%s1373 + $0x32] sm:$0xff] %vm1311, %v1283
        %1379 = vst.msk [vmem:[%s1373 + $0x3a] sm:$0xff] %vm1311, %v1284
        %1380 = vst.msk [vmem:[%s1373 + $0x4a] sm:$0xff] %vm1311, %v1285
        %1381 = vst.msk [vmem:[%s1373 + $0x52] sm:$0xff] %vm1311, %v1286
        %1382 = vst.msk [vmem:[%s1373 + $0x62] sm:$0xff] %vm1311, %v1287
        %1383 = vst.msk [vmem:[%s1373 + $0x6a] sm:$0xff] %vm1311, %v1288
        %1384 = vst.msk [vmem:[%s1373 + $0x7a] sm:$0xff] %vm1311, %v1289
        %1385 = vst.msk [vmem:[%s1373 + $0x82] sm:$0xff] %vm1311, %v1290
        %1386 = vst.msk [vmem:[%s1373 + $0x92] sm:$0xff] %vm1311, %v1291
        %1387 = vst.msk [vmem:[%s1373 + $0x9a] sm:$0xff] %vm1311, %v1292
        %1388 = vst.msk [vmem:[%s1373 + $0xaa] sm:$0xff] %vm1311, %v1293
        %1389 = vst.msk [vmem:[%s1373 + $0xb2] sm:$0xff] %vm1311, %v1294
        %1390 = vst.msk [vmem:[%s1373 + $0xc2] sm:$0xff] %vm1311, %v1295
        %1391 = vst.msk [vmem:[%s1373 + $0xca] sm:$0xff] %vm1311, %v1296
        %1392 = vst.msk [vmem:[%s1373 + $0xda] sm:$0xff] %vm1311, %v1297
        %1393 = vst.msk [vmem:[%s1373 + $0xe2] sm:$0xff] %vm1311, %v1298
        %1394 = vst.msk [vmem:[%s1373 + $0xf2] sm:$0xff] %vm1311, %v1299
        %1395 = vst.msk [vmem:[%s1373 + $0xfa] sm:$0xff] %vm1311, %v1300
        %1396 = vst.msk [vmem:[%s1373 + $0x10a] sm:$0xff] %vm1311, %v1301
        %1397 = vst.msk [vmem:[%s1373 + $0x112] sm:$0xff] %vm1311, %v1302
        %1398 = vst.msk [vmem:[%s1373 + $0x122] sm:$0xff] %vm1311, %v1303
        %1399 = vst.msk [vmem:[%s1373 + $0x12a] sm:$0xff] %vm1311, %v1304
        %1400 = vst.msk [vmem:[%s1373 + $0x13a] sm:$0xff] %vm1311, %v1305
        %1401 = vst.msk [vmem:[%s1373 + $0x142] sm:$0xff] %vm1311, %v1306
        %1402 = vst.msk [vmem:[%s1373 + $0x152] sm:$0xff] %vm1311, %v1307
        %1403 = vst.msk [vmem:[%s1373 + $0x15a] sm:$0xff] %vm1311, %v1308
        %1404 = vst.msk [vmem:[%s1373 + $0x16a] sm:$0xff] %vm1311, %v1309
        %1405 = vst.msk [vmem:[%s1373 + $0x172] sm:$0xff] %vm1311, %v1310
        %v1406 = vld [vmem:[#allocation2] sm:$0xff]
        %v1407 = vld [vmem:[#allocation2 + $0x8] sm:$0xff]
        %v1408 = vld [vmem:[#allocation2 + $0x10] sm:$0xf]
        %v1409 = vld [vmem:[#allocation2 + $0x18] sm:$0xff]
        %v1410 = vld [vmem:[#allocation2 + $0x20] sm:$0xff]
        %v1411 = vld [vmem:[#allocation2 + $0x28] sm:$0xf]
        %v1412 = vld [vmem:[#allocation2 + $0x30] sm:$0xff]
        %v1413 = vld [vmem:[#allocation2 + $0x38] sm:$0xff]
        %v1414 = vld [vmem:[#allocation2 + $0x40] sm:$0xf]
        %v1415 = vld [vmem:[#allocation2 + $0x48] sm:$0xff]
        %v1416 = vld [vmem:[#allocation2 + $0x50] sm:$0xff]
        %v1417 = vld [vmem:[#allocation2 + $0x58] sm:$0xf]
        %v1418 = vld [vmem:[#allocation2 + $0x60] sm:$0xff]
        %v1419 = vld [vmem:[#allocation2 + $0x68] sm:$0xff]
        %v1420 = vld [vmem:[#allocation2 + $0x70] sm:$0xf]
        %v1421 = vld [vmem:[#allocation2 + $0x78] sm:$0xff]
        %v1422 = vld [vmem:[#allocation2 + $0x80] sm:$0xff]
        %v1423 = vld [vmem:[#allocation2 + $0x88] sm:$0xf]
        %v1424 = vld [vmem:[#allocation2 + $0x90] sm:$0xff]
        %v1425 = vld [vmem:[#allocation2 + $0x98] sm:$0xff]
        %v1426 = vld [vmem:[#allocation2 + $0xa0] sm:$0xf]
        %v1427 = vld [vmem:[#allocation2 + $0xa8] sm:$0xff]
        %v1428 = vld [vmem:[#allocation2 + $0xb0] sm:$0xff]
        %v1429 = vld [vmem:[#allocation2 + $0xb8] sm:$0xf]
        %v1430 = vld [vmem:[#allocation2 + $0xc0] sm:$0xff]
        %v1431 = vld [vmem:[#allocation2 + $0xc8] sm:$0xff]
        %v1432 = vld [vmem:[#allocation2 + $0xd0] sm:$0xf]
        %v1433 = vld [vmem:[#allocation2 + $0xd8] sm:$0xff]
        %v1434 = vld [vmem:[#allocation2 + $0xe0] sm:$0xff]
        %v1435 = vld [vmem:[#allocation2 + $0xe8] sm:$0xf]
        %v1436 = vld [vmem:[#allocation2 + $0xf0] sm:$0xff]
        %v1437 = vld [vmem:[#allocation2 + $0xf8] sm:$0xff]
        %v1438 = vld [vmem:[#allocation2 + $0x100] sm:$0xf]
        %v1439 = vld [vmem:[#allocation2 + $0x108] sm:$0xff]
        %v1440 = vld [vmem:[#allocation2 + $0x110] sm:$0xff]
        %v1441 = vld [vmem:[#allocation2 + $0x118] sm:$0xf]
        %v1442 = vld [vmem:[#allocation2 + $0x120] sm:$0xff]
        %v1443 = vld [vmem:[#allocation2 + $0x128] sm:$0xff]
        %v1444 = vld [vmem:[#allocation2 + $0x130] sm:$0xf]
        %v1445 = vld [vmem:[#allocation2 + $0x138] sm:$0xff]
        %v1446 = vld [vmem:[#allocation2 + $0x140] sm:$0xff]
        %v1447 = vld [vmem:[#allocation2 + $0x148] sm:$0xf]
        %v1448 = vld [vmem:[#allocation2 + $0x150] sm:$0xff]
        %v1449 = vld [vmem:[#allocation2 + $0x158] sm:$0xff]
        %v1450 = vld [vmem:[#allocation2 + $0x160] sm:$0xf]
        %v1451 = vld [vmem:[#allocation2 + $0x168] sm:$0xff]
        %v1452 = vld [vmem:[#allocation2 + $0x170] sm:$0xff]
        %v1453 = vld [vmem:[#allocation2 + $0x178] sm:$0xf]
        %v1454 = vld [vmem:[#allocation2 + $0x180] sm:$0xff]
        %v1455 = vld [vmem:[#allocation2 + $0x188] sm:$0xff]
        %v1456 = vld [vmem:[#allocation2 + $0x190] sm:$0xf]
        %v1457 = vld [vmem:[#allocation2 + $0x198] sm:$0xff]
        %v1458 = vld [vmem:[#allocation2 + $0x1a0] sm:$0xff]
        %v1459 = vld [vmem:[#allocation2 + $0x1a8] sm:$0xf]
        %v1460 = vld [vmem:[#allocation2 + $0x1b0] sm:$0xff]
        %v1461 = vld [vmem:[#allocation2 + $0x1b8] sm:$0xff]
        %v1462 = vld [vmem:[#allocation2 + $0x1c0] sm:$0xf]
        %v1463 = vld [vmem:[#allocation2 + $0x1c8] sm:$0xff]
        %v1464 = vld [vmem:[#allocation2 + $0x1d0] sm:$0xff]
        %v1465 = vld [vmem:[#allocation2 + $0x1d8] sm:$0xf]
        %v1466 = vmax.f32 %v1406, %v1409
        %v1467 = vmax.f32 %v1407, %v1410
        %v1468 = vmax.f32 %v1408, %v1411
        %v1469 = vmax.f32 %v1409, %v1412
        %v1470 = vmax.f32 %v1410, %v1413
        %v1471 = vmax.f32 %v1411, %v1414
        %v1472 = vmax.f32 %v1412, %v1415
        %v1473 = vmax.f32 %v1413, %v1416
        %v1474 = vmax.f32 %v1414, %v1417
        %v1475 = vmax.f32 %v1415, %v1418
        %v1476 = vmax.f32 %v1416, %v1419
        %v1477 = vmax.f32 %v1417, %v1420
        %v1478 = vmax.f32 %v1418, %v1421
        %v1479 = vmax.f32 %v1419, %v1422
        %v1480 = vmax.f32 %v1420, %v1423
        %v1481 = vmax.f32 %v1421, %v1424
        %v1482 = vmax.f32 %v1422, %v1425
        %v1483 = vmax.f32 %v1423, %v1426
        %v1484 = vmax.f32 %v1424, %v1427
        %v1485 = vmax.f32 %v1425, %v1428
        %v1486 = vmax.f32 %v1426, %v1429
        %v1487 = vmax.f32 %v1427, %v1430
        %v1488 = vmax.f32 %v1428, %v1431
        %v1489 = vmax.f32 %v1429, %v1432
        %v1490 = vmax.f32 %v1430, %v1433
        %v1491 = vmax.f32 %v1431, %v1434
        %v1492 = vmax.f32 %v1432, %v1435
        %v1493 = vmax.f32 %v1433, %v1436
        %v1494 = vmax.f32 %v1434, %v1437
        %v1495 = vmax.f32 %v1435, %v1438
        %v1496 = vmax.f32 %v1436, %v1439
        %v1497 = vmax.f32 %v1437, %v1440
        %v1498 = vmax.f32 %v1438, %v1441
        %v1499 = vmax.f32 %v1439, %v1442
        %v1500 = vmax.f32 %v1440, %v1443
        %v1501 = vmax.f32 %v1441, %v1444
        %v1502 = vmax.f32 %v1442, %v1445
        %v1503 = vmax.f32 %v1443, %v1446
        %v1504 = vmax.f32 %v1444, %v1447
        %v1505 = vmax.f32 %v1445, %v1448
        %v1506 = vmax.f32 %v1446, %v1449
        %v1507 = vmax.f32 %v1447, %v1450
        %v1508 = vmax.f32 %v1448, %v1451
        %v1509 = vmax.f32 %v1449, %v1452
        %v1510 = vmax.f32 %v1450, %v1453
        %v1511 = vmax.f32 %v1451, %v1454
        %v1512 = vmax.f32 %v1452, %v1455
        %v1513 = vmax.f32 %v1453, %v1456
        %v1514 = vmax.f32 %v1466, %v1412
        %v1515 = vmax.f32 %v1467, %v1413
        %v1516 = vmax.f32 %v1468, %v1414
        %v1517 = vmax.f32 %v1469, %v1415
        %v1518 = vmax.f32 %v1470, %v1416
        %v1519 = vmax.f32 %v1471, %v1417
        %v1520 = vmax.f32 %v1472, %v1418
        %v1521 = vmax.f32 %v1473, %v1419
        %v1522 = vmax.f32 %v1474, %v1420
        %v1523 = vmax.f32 %v1475, %v1421
        %v1524 = vmax.f32 %v1476, %v1422
        %v1525 = vmax.f32 %v1477, %v1423
        %v1526 = vmax.f32 %v1478, %v1424
        %v1527 = vmax.f32 %v1479, %v1425
        %v1528 = vmax.f32 %v1480, %v1426
        %v1529 = vmax.f32 %v1481, %v1427
        %v1530 = vmax.f32 %v1482, %v1428
        %v1531 = vmax.f32 %v1483, %v1429
        %v1532 = vmax.f32 %v1484, %v1430
        %v1533 = vmax.f32 %v1485, %v1431
        %v1534 = vmax.f32 %v1486, %v1432
        %v1535 = vmax.f32 %v1487, %v1433
        %v1536 = vmax.f32 %v1488, %v1434
        %v1537 = vmax.f32 %v1489, %v1435
        %v1538 = vmax.f32 %v1490, %v1436
        %v1539 = vmax.f32 %v1491, %v1437
        %v1540 = vmax.f32 %v1492, %v1438
        %v1541 = vmax.f32 %v1493, %v1439
        %v1542 = vmax.f32 %v1494, %v1440
        %v1543 = vmax.f32 %v1495, %v1441
        %v1544 = vmax.f32 %v1496, %v1442
        %v1545 = vmax.f32 %v1497, %v1443
        %v1546 = vmax.f32 %v1498, %v1444
        %v1547 = vmax.f32 %v1499, %v1445
        %v1548 = vmax.f32 %v1500, %v1446
        %v1549 = vmax.f32 %v1501, %v1447
        %v1550 = vmax.f32 %v1502, %v1448
        %v1551 = vmax.f32 %v1503, %v1449
        %v1552 = vmax.f32 %v1504, %v1450
        %v1553 = vmax.f32 %v1505, %v1451
        %v1554 = vmax.f32 %v1506, %v1452
        %v1555 = vmax.f32 %v1507, %v1453
        %v1556 = vmax.f32 %v1508, %v1454
        %v1557 = vmax.f32 %v1509, %v1455
        %v1558 = vmax.f32 %v1510, %v1456
        %v1559 = vmax.f32 %v1511, %v1457
        %v1560 = vmax.f32 %v1512, %v1458
        %v1561 = vmax.f32 %v1513, %v1459
        %v1562 = vmax.f32 %v1514, %v1415
        %v1563 = vmax.f32 %v1515, %v1416
        %v1564 = vmax.f32 %v1516, %v1417
        %v1565 = vmax.f32 %v1517, %v1418
        %v1566 = vmax.f32 %v1518, %v1419
        %v1567 = vmax.f32 %v1519, %v1420
        %v1568 = vmax.f32 %v1520, %v1421
        %v1569 = vmax.f32 %v1521, %v1422
        %v1570 = vmax.f32 %v1522, %v1423
        %v1571 = vmax.f32 %v1523, %v1424
        %v1572 = vmax.f32 %v1524, %v1425
        %v1573 = vmax.f32 %v1525, %v1426
        %v1574 = vmax.f32 %v1526, %v1427
        %v1575 = vmax.f32 %v1527, %v1428
        %v1576 = vmax.f32 %v1528, %v1429
        %v1577 = vmax.f32 %v1529, %v1430
        %v1578 = vmax.f32 %v1530, %v1431
        %v1579 = vmax.f32 %v1531, %v1432
        %v1580 = vmax.f32 %v1532, %v1433
        %v1581 = vmax.f32 %v1533, %v1434
        %v1582 = vmax.f32 %v1534, %v1435
        %v1583 = vmax.f32 %v1535, %v1436
        %v1584 = vmax.f32 %v1536, %v1437
        %v1585 = vmax.f32 %v1537, %v1438
        %v1586 = vmax.f32 %v1538, %v1439
        %v1587 = vmax.f32 %v1539, %v1440
        %v1588 = vmax.f32 %v1540, %v1441
        %v1589 = vmax.f32 %v1541, %v1442
        %v1590 = vmax.f32 %v1542, %v1443
        %v1591 = vmax.f32 %v1543, %v1444
        %v1592 = vmax.f32 %v1544, %v1445
        %v1593 = vmax.f32 %v1545, %v1446
        %v1594 = vmax.f32 %v1546, %v1447
        %v1595 = vmax.f32 %v1547, %v1448
        %v1596 = vmax.f32 %v1548, %v1449
        %v1597 = vmax.f32 %v1549, %v1450
        %v1598 = vmax.f32 %v1550, %v1451
        %v1599 = vmax.f32 %v1551, %v1452
        %v1600 = vmax.f32 %v1552, %v1453
        %v1601 = vmax.f32 %v1553, %v1454
        %v1602 = vmax.f32 %v1554, %v1455
        %v1603 = vmax.f32 %v1555, %v1456
        %v1604 = vmax.f32 %v1556, %v1457
        %v1605 = vmax.f32 %v1557, %v1458
        %v1606 = vmax.f32 %v1558, %v1459
        %v1607 = vmax.f32 %v1559, %v1460
        %v1608 = vmax.f32 %v1560, %v1461
        %v1609 = vmax.f32 %v1561, %v1462
        %v1610 = vmax.f32 %v1562, %v1418
        %v1611 = vmax.f32 %v1563, %v1419
        %v1612 = vmax.f32 %v1564, %v1420
        %v1613 = vmax.f32 %v1565, %v1421
        %v1614 = vmax.f32 %v1566, %v1422
        %v1615 = vmax.f32 %v1567, %v1423
        %v1616 = vmax.f32 %v1568, %v1424
        %v1617 = vmax.f32 %v1569, %v1425
        %v1618 = vmax.f32 %v1570, %v1426
        %v1619 = vmax.f32 %v1571, %v1427
        %v1620 = vmax.f32 %v1572, %v1428
        %v1621 = vmax.f32 %v1573, %v1429
        %v1622 = vmax.f32 %v1574, %v1430
        %v1623 = vmax.f32 %v1575, %v1431
        %v1624 = vmax.f32 %v1576, %v1432
        %v1625 = vmax.f32 %v1577, %v1433
        %v1626 = vmax.f32 %v1578, %v1434
        %v1627 = vmax.f32 %v1579, %v1435
        %v1628 = vmax.f32 %v1580, %v1436
        %v1629 = vmax.f32 %v1581, %v1437
        %v1630 = vmax.f32 %v1582, %v1438
        %v1631 = vmax.f32 %v1583, %v1439
        %v1632 = vmax.f32 %v1584, %v1440
        %v1633 = vmax.f32 %v1585, %v1441
        %v1634 = vmax.f32 %v1586, %v1442
        %v1635 = vmax.f32 %v1587, %v1443
        %v1636 = vmax.f32 %v1588, %v1444
        %v1637 = vmax.f32 %v1589, %v1445
        %v1638 = vmax.f32 %v1590, %v1446
        %v1639 = vmax.f32 %v1591, %v1447
        %v1640 = vmax.f32 %v1592, %v1448
        %v1641 = vmax.f32 %v1593, %v1449
        %v1642 = vmax.f32 %v1594, %v1450
        %v1643 = vmax.f32 %v1595, %v1451
        %v1644 = vmax.f32 %v1596, %v1452
        %v1645 = vmax.f32 %v1597, %v1453
        %v1646 = vmax.f32 %v1598, %v1454
        %v1647 = vmax.f32 %v1599, %v1455
        %v1648 = vmax.f32 %v1600, %v1456
        %v1649 = vmax.f32 %v1601, %v1457
        %v1650 = vmax.f32 %v1602, %v1458
        %v1651 = vmax.f32 %v1603, %v1459
        %v1652 = vmax.f32 %v1604, %v1460
        %v1653 = vmax.f32 %v1605, %v1461
        %v1654 = vmax.f32 %v1606, %v1462
        %v1655 = vmax.f32 %v1607, %v1463
        %v1656 = vmax.f32 %v1608, %v1464
        %v1657 = vmax.f32 %v1609, %v1465
        %vm1706 = vcmask 1046528
        %v1707 = vrot.slane %v1610, 1
        %v1708 = vrot.slane %v1611, 1
        %v1709 = vsel %vm1706, %v1707, %v1708
        %v1710 = vrot.slane %v1612, 1
        %v1711 = vsel %vm1706, %v1708, %v1710
        %v1712 = vrot.slane %v1613, 1
        %v1713 = vrot.slane %v1614, 1
        %v1714 = vsel %vm1706, %v1712, %v1713
        %v1715 = vrot.slane %v1615, 1
        %v1716 = vsel %vm1706, %v1713, %v1715
        %v1717 = vrot.slane %v1616, 1
        %v1718 = vrot.slane %v1617, 1
        %v1719 = vsel %vm1706, %v1717, %v1718
        %v1720 = vrot.slane %v1618, 1
        %v1721 = vsel %vm1706, %v1718, %v1720
        %v1722 = vrot.slane %v1619, 1
        %v1723 = vrot.slane %v1620, 1
        %v1724 = vsel %vm1706, %v1722, %v1723
        %v1725 = vrot.slane %v1621, 1
        %v1726 = vsel %vm1706, %v1723, %v1725
        %v1727 = vrot.slane %v1622, 1
        %v1728 = vrot.slane %v1623, 1
        %v1729 = vsel %vm1706, %v1727, %v1728
        %v1730 = vrot.slane %v1624, 1
        %v1731 = vsel %vm1706, %v1728, %v1730
        %v1732 = vrot.slane %v1625, 1
        %v1733 = vrot.slane %v1626, 1
        %v1734 = vsel %vm1706, %v1732, %v1733
        %v1735 = vrot.slane %v1627, 1
        %v1736 = vsel %vm1706, %v1733, %v1735
        %v1737 = vrot.slane %v1628, 1
        %v1738 = vrot.slane %v1629, 1
        %v1739 = vsel %vm1706, %v1737, %v1738
        %v1740 = vrot.slane %v1630, 1
        %v1741 = vsel %vm1706, %v1738, %v1740
        %v1742 = vrot.slane %v1631, 1
        %v1743 = vrot.slane %v1632, 1
        %v1744 = vsel %vm1706, %v1742, %v1743
        %v1745 = vrot.slane %v1633, 1
        %v1746 = vsel %vm1706, %v1743, %v1745
        %v1747 = vrot.slane %v1634, 1
        %v1748 = vrot.slane %v1635, 1
        %v1749 = vsel %vm1706, %v1747, %v1748
        %v1750 = vrot.slane %v1636, 1
        %v1751 = vsel %vm1706, %v1748, %v1750
        %v1752 = vrot.slane %v1637, 1
        %v1753 = vrot.slane %v1638, 1
        %v1754 = vsel %vm1706, %v1752, %v1753
        %v1755 = vrot.slane %v1639, 1
        %v1756 = vsel %vm1706, %v1753, %v1755
        %v1757 = vrot.slane %v1640, 1
        %v1758 = vrot.slane %v1641, 1
        %v1759 = vsel %vm1706, %v1757, %v1758
        %v1760 = vrot.slane %v1642, 1
        %v1761 = vsel %vm1706, %v1758, %v1760
        %v1762 = vrot.slane %v1643, 1
        %v1763 = vrot.slane %v1644, 1
        %v1764 = vsel %vm1706, %v1762, %v1763
        %v1765 = vrot.slane %v1645, 1
        %v1766 = vsel %vm1706, %v1763, %v1765
        %v1767 = vrot.slane %v1646, 1
        %v1768 = vrot.slane %v1647, 1
        %v1769 = vsel %vm1706, %v1767, %v1768
        %v1770 = vrot.slane %v1648, 1
        %v1771 = vsel %vm1706, %v1768, %v1770
        %v1772 = vrot.slane %v1649, 1
        %v1773 = vrot.slane %v1650, 1
        %v1774 = vsel %vm1706, %v1772, %v1773
        %v1775 = vrot.slane %v1651, 1
        %v1776 = vsel %vm1706, %v1773, %v1775
        %v1777 = vrot.slane %v1652, 1
        %v1778 = vrot.slane %v1653, 1
        %v1779 = vsel %vm1706, %v1777, %v1778
        %v1780 = vrot.slane %v1654, 1
        %v1781 = vsel %vm1706, %v1778, %v1780
        %v1782 = vrot.slane %v1655, 1
        %v1783 = vrot.slane %v1656, 1
        %v1784 = vsel %vm1706, %v1782, %v1783
        %v1785 = vrot.slane %v1657, 1
        %v1786 = vsel %vm1706, %v1783, %v1785
        %v1819 = vmax.f32 %v1610, %v1709
        %v1820 = vmax.f32 %v1611, %v1711
        %v1821 = vmax.f32 %v1613, %v1714
        %v1822 = vmax.f32 %v1614, %v1716
        %v1823 = vmax.f32 %v1616, %v1719
        %v1824 = vmax.f32 %v1617, %v1721
        %v1825 = vmax.f32 %v1619, %v1724
        %v1826 = vmax.f32 %v1620, %v1726
        %v1827 = vmax.f32 %v1622, %v1729
        %v1828 = vmax.f32 %v1623, %v1731
        %v1829 = vmax.f32 %v1625, %v1734
        %v1830 = vmax.f32 %v1626, %v1736
        %v1831 = vmax.f32 %v1628, %v1739
        %v1832 = vmax.f32 %v1629, %v1741
        %v1833 = vmax.f32 %v1631, %v1744
        %v1834 = vmax.f32 %v1632, %v1746
        %v1835 = vmax.f32 %v1634, %v1749
        %v1836 = vmax.f32 %v1635, %v1751
        %v1837 = vmax.f32 %v1637, %v1754
        %v1838 = vmax.f32 %v1638, %v1756
        %v1839 = vmax.f32 %v1640, %v1759
        %v1840 = vmax.f32 %v1641, %v1761
        %v1841 = vmax.f32 %v1643, %v1764
        %v1842 = vmax.f32 %v1644, %v1766
        %v1843 = vmax.f32 %v1646, %v1769
        %v1844 = vmax.f32 %v1647, %v1771
        %v1845 = vmax.f32 %v1649, %v1774
        %v1846 = vmax.f32 %v1650, %v1776
        %v1847 = vmax.f32 %v1652, %v1779
        %v1848 = vmax.f32 %v1653, %v1781
        %v1849 = vmax.f32 %v1655, %v1784
        %v1850 = vmax.f32 %v1656, %v1786
        %vm1851 = vcmask 1045504
        %v1852 = vrot.slane %v1610, 2
        %v1853 = vrot.slane %v1611, 2
        %v1854 = vsel %vm1851, %v1852, %v1853
        %v1855 = vrot.slane %v1612, 2
        %v1856 = vsel %vm1851, %v1853, %v1855
        %v1857 = vrot.slane %v1613, 2
        %v1858 = vrot.slane %v1614, 2
        %v1859 = vsel %vm1851, %v1857, %v1858
        %v1860 = vrot.slane %v1615, 2
        %v1861 = vsel %vm1851, %v1858, %v1860
        %v1862 = vrot.slane %v1616, 2
        %v1863 = vrot.slane %v1617, 2
        %v1864 = vsel %vm1851, %v1862, %v1863
        %v1865 = vrot.slane %v1618, 2
        %v1866 = vsel %vm1851, %v1863, %v1865
        %v1867 = vrot.slane %v1619, 2
        %v1868 = vrot.slane %v1620, 2
        %v1869 = vsel %vm1851, %v1867, %v1868
        %v1870 = vrot.slane %v1621, 2
        %v1871 = vsel %vm1851, %v1868, %v1870
        %v1872 = vrot.slane %v1622, 2
        %v1873 = vrot.slane %v1623, 2
        %v1874 = vsel %vm1851, %v1872, %v1873
        %v1875 = vrot.slane %v1624, 2
        %v1876 = vsel %vm1851, %v1873, %v1875
        %v1877 = vrot.slane %v1625, 2
        %v1878 = vrot.slane %v1626, 2
        %v1879 = vsel %vm1851, %v1877, %v1878
        %v1880 = vrot.slane %v1627, 2
        %v1881 = vsel %vm1851, %v1878, %v1880
        %v1882 = vrot.slane %v1628, 2
        %v1883 = vrot.slane %v1629, 2
        %v1884 = vsel %vm1851, %v1882, %v1883
        %v1885 = vrot.slane %v1630, 2
        %v1886 = vsel %vm1851, %v1883, %v1885
        %v1887 = vrot.slane %v1631, 2
        %v1888 = vrot.slane %v1632, 2
        %v1889 = vsel %vm1851, %v1887, %v1888
        %v1890 = vrot.slane %v1633, 2
        %v1891 = vsel %vm1851, %v1888, %v1890
        %v1892 = vrot.slane %v1634, 2
        %v1893 = vrot.slane %v1635, 2
        %v1894 = vsel %vm1851, %v1892, %v1893
        %v1895 = vrot.slane %v1636, 2
        %v1896 = vsel %vm1851, %v1893, %v1895
        %v1897 = vrot.slane %v1637, 2
        %v1898 = vrot.slane %v1638, 2
        %v1899 = vsel %vm1851, %v1897, %v1898
        %v1900 = vrot.slane %v1639, 2
        %v1901 = vsel %vm1851, %v1898, %v1900
        %v1902 = vrot.slane %v1640, 2
        %v1903 = vrot.slane %v1641, 2
        %v1904 = vsel %vm1851, %v1902, %v1903
        %v1905 = vrot.slane %v1642, 2
        %v1906 = vsel %vm1851, %v1903, %v1905
        %v1907 = vrot.slane %v1643, 2
        %v1908 = vrot.slane %v1644, 2
        %v1909 = vsel %vm1851, %v1907, %v1908
        %v1910 = vrot.slane %v1645, 2
        %v1911 = vsel %vm1851, %v1908, %v1910
        %v1912 = vrot.slane %v1646, 2
        %v1913 = vrot.slane %v1647, 2
        %v1914 = vsel %vm1851, %v1912, %v1913
        %v1915 = vrot.slane %v1648, 2
        %v1916 = vsel %vm1851, %v1913, %v1915
        %v1917 = vrot.slane %v1649, 2
        %v1918 = vrot.slane %v1650, 2
        %v1919 = vsel %vm1851, %v1917, %v1918
        %v1920 = vrot.slane %v1651, 2
        %v1921 = vsel %vm1851, %v1918, %v1920
        %v1922 = vrot.slane %v1652, 2
        %v1923 = vrot.slane %v1653, 2
        %v1924 = vsel %vm1851, %v1922, %v1923
        %v1925 = vrot.slane %v1654, 2
        %v1926 = vsel %vm1851, %v1923, %v1925
        %v1927 = vrot.slane %v1655, 2
        %v1928 = vrot.slane %v1656, 2
        %v1929 = vsel %vm1851, %v1927, %v1928
        %v1930 = vrot.slane %v1657, 2
        %v1931 = vsel %vm1851, %v1928, %v1930
        %v1964 = vmax.f32 %v1819, %v1854
        %v1965 = vmax.f32 %v1820, %v1856
        %v1966 = vmax.f32 %v1821, %v1859
        %v1967 = vmax.f32 %v1822, %v1861
        %v1968 = vmax.f32 %v1823, %v1864
        %v1969 = vmax.f32 %v1824, %v1866
        %v1970 = vmax.f32 %v1825, %v1869
        %v1971 = vmax.f32 %v1826, %v1871
        %v1972 = vmax.f32 %v1827, %v1874
        %v1973 = vmax.f32 %v1828, %v1876
        %v1974 = vmax.f32 %v1829, %v1879
        %v1975 = vmax.f32 %v1830, %v1881
        %v1976 = vmax.f32 %v1831, %v1884
        %v1977 = vmax.f32 %v1832, %v1886
        %v1978 = vmax.f32 %v1833, %v1889
        %v1979 = vmax.f32 %v1834, %v1891
        %v1980 = vmax.f32 %v1835, %v1894
        %v1981 = vmax.f32 %v1836, %v1896
        %v1982 = vmax.f32 %v1837, %v1899
        %v1983 = vmax.f32 %v1838, %v1901
        %v1984 = vmax.f32 %v1839, %v1904
        %v1985 = vmax.f32 %v1840, %v1906
        %v1986 = vmax.f32 %v1841, %v1909
        %v1987 = vmax.f32 %v1842, %v1911
        %v1988 = vmax.f32 %v1843, %v1914
        %v1989 = vmax.f32 %v1844, %v1916
        %v1990 = vmax.f32 %v1845, %v1919
        %v1991 = vmax.f32 %v1846, %v1921
        %v1992 = vmax.f32 %v1847, %v1924
        %v1993 = vmax.f32 %v1848, %v1926
        %v1994 = vmax.f32 %v1849, %v1929
        %v1995 = vmax.f32 %v1850, %v1931
        %vm1996 = vcmask 1044480
        %v1997 = vrot.slane %v1610, 3
        %v1998 = vrot.slane %v1611, 3
        %v1999 = vsel %vm1996, %v1997, %v1998
        %v2000 = vrot.slane %v1612, 3
        %v2001 = vsel %vm1996, %v1998, %v2000
        %v2002 = vrot.slane %v1613, 3
        %v2003 = vrot.slane %v1614, 3
        %v2004 = vsel %vm1996, %v2002, %v2003
        %v2005 = vrot.slane %v1615, 3
        %v2006 = vsel %vm1996, %v2003, %v2005
        %v2007 = vrot.slane %v1616, 3
        %v2008 = vrot.slane %v1617, 3
        %v2009 = vsel %vm1996, %v2007, %v2008
        %v2010 = vrot.slane %v1618, 3
        %v2011 = vsel %vm1996, %v2008, %v2010
        %v2012 = vrot.slane %v1619, 3
        %v2013 = vrot.slane %v1620, 3
        %v2014 = vsel %vm1996, %v2012, %v2013
        %v2015 = vrot.slane %v1621, 3
        %v2016 = vsel %vm1996, %v2013, %v2015
        %v2017 = vrot.slane %v1622, 3
        %v2018 = vrot.slane %v1623, 3
        %v2019 = vsel %vm1996, %v2017, %v2018
        %v2020 = vrot.slane %v1624, 3
        %v2021 = vsel %vm1996, %v2018, %v2020
        %v2022 = vrot.slane %v1625, 3
        %v2023 = vrot.slane %v1626, 3
        %v2024 = vsel %vm1996, %v2022, %v2023
        %v2025 = vrot.slane %v1627, 3
        %v2026 = vsel %vm1996, %v2023, %v2025
        %v2027 = vrot.slane %v1628, 3
        %v2028 = vrot.slane %v1629, 3
        %v2029 = vsel %vm1996, %v2027, %v2028
        %v2030 = vrot.slane %v1630, 3
        %v2031 = vsel %vm1996, %v2028, %v2030
        %v2032 = vrot.slane %v1631, 3
        %v2033 = vrot.slane %v1632, 3
        %v2034 = vsel %vm1996, %v2032, %v2033
        %v2035 = vrot.slane %v1633, 3
        %v2036 = vsel %vm1996, %v2033, %v2035
        %v2037 = vrot.slane %v1634, 3
        %v2038 = vrot.slane %v1635, 3
        %v2039 = vsel %vm1996, %v2037, %v2038
        %v2040 = vrot.slane %v1636, 3
        %v2041 = vsel %vm1996, %v2038, %v2040
        %v2042 = vrot.slane %v1637, 3
        %v2043 = vrot.slane %v1638, 3
        %v2044 = vsel %vm1996, %v2042, %v2043
        %v2045 = vrot.slane %v1639, 3
        %v2046 = vsel %vm1996, %v2043, %v2045
        %v2047 = vrot.slane %v1640, 3
        %v2048 = vrot.slane %v1641, 3
        %v2049 = vsel %vm1996, %v2047, %v2048
        %v2050 = vrot.slane %v1642, 3
        %v2051 = vsel %vm1996, %v2048, %v2050
        %v2052 = vrot.slane %v1643, 3
        %v2053 = vrot.slane %v1644, 3
        %v2054 = vsel %vm1996, %v2052, %v2053
        %v2055 = vrot.slane %v1645, 3
        %v2056 = vsel %vm1996, %v2053, %v2055
        %v2057 = vrot.slane %v1646, 3
        %v2058 = vrot.slane %v1647, 3
        %v2059 = vsel %vm1996, %v2057, %v2058
        %v2060 = vrot.slane %v1648, 3
        %v2061 = vsel %vm1996, %v2058, %v2060
        %v2062 = vrot.slane %v1649, 3
        %v2063 = vrot.slane %v1650, 3
        %v2064 = vsel %vm1996, %v2062, %v2063
        %v2065 = vrot.slane %v1651, 3
        %v2066 = vsel %vm1996, %v2063, %v2065
        %v2067 = vrot.slane %v1652, 3
        %v2068 = vrot.slane %v1653, 3
        %v2069 = vsel %vm1996, %v2067, %v2068
        %v2070 = vrot.slane %v1654, 3
        %v2071 = vsel %vm1996, %v2068, %v2070
        %v2072 = vrot.slane %v1655, 3
        %v2073 = vrot.slane %v1656, 3
        %v2074 = vsel %vm1996, %v2072, %v2073
        %v2075 = vrot.slane %v1657, 3
        %v2076 = vsel %vm1996, %v2073, %v2075
        %v2109 = vmax.f32 %v1964, %v1999
        %v2110 = vmax.f32 %v1965, %v2001
        %v2111 = vmax.f32 %v1966, %v2004
        %v2112 = vmax.f32 %v1967, %v2006
        %v2113 = vmax.f32 %v1968, %v2009
        %v2114 = vmax.f32 %v1969, %v2011
        %v2115 = vmax.f32 %v1970, %v2014
        %v2116 = vmax.f32 %v1971, %v2016
        %v2117 = vmax.f32 %v1972, %v2019
        %v2118 = vmax.f32 %v1973, %v2021
        %v2119 = vmax.f32 %v1974, %v2024
        %v2120 = vmax.f32 %v1975, %v2026
        %v2121 = vmax.f32 %v1976, %v2029
        %v2122 = vmax.f32 %v1977, %v2031
        %v2123 = vmax.f32 %v1978, %v2034
        %v2124 = vmax.f32 %v1979, %v2036
        %v2125 = vmax.f32 %v1980, %v2039
        %v2126 = vmax.f32 %v1981, %v2041
        %v2127 = vmax.f32 %v1982, %v2044
        %v2128 = vmax.f32 %v1983, %v2046
        %v2129 = vmax.f32 %v1984, %v2049
        %v2130 = vmax.f32 %v1985, %v2051
        %v2131 = vmax.f32 %v1986, %v2054
        %v2132 = vmax.f32 %v1987, %v2056
        %v2133 = vmax.f32 %v1988, %v2059
        %v2134 = vmax.f32 %v1989, %v2061
        %v2135 = vmax.f32 %v1990, %v2064
        %v2136 = vmax.f32 %v1991, %v2066
        %v2137 = vmax.f32 %v1992, %v2069
        %v2138 = vmax.f32 %v1993, %v2071
        %v2139 = vmax.f32 %v1994, %v2074
        %v2140 = vmax.f32 %v1995, %v2076
        %vm2141 = vcmask 1043456
        %v2142 = vrot.slane %v1610, 4
        %v2143 = vrot.slane %v1611, 4
        %v2144 = vsel %vm2141, %v2142, %v2143
        %v2145 = vrot.slane %v1612, 4
        %v2146 = vsel %vm2141, %v2143, %v2145
        %v2147 = vrot.slane %v1613, 4
        %v2148 = vrot.slane %v1614, 4
        %v2149 = vsel %vm2141, %v2147, %v2148
        %v2150 = vrot.slane %v1615, 4
        %v2151 = vsel %vm2141, %v2148, %v2150
        %v2152 = vrot.slane %v1616, 4
        %v2153 = vrot.slane %v1617, 4
        %v2154 = vsel %vm2141, %v2152, %v2153
        %v2155 = vrot.slane %v1618, 4
        %v2156 = vsel %vm2141, %v2153, %v2155
        %v2157 = vrot.slane %v1619, 4
        %v2158 = vrot.slane %v1620, 4
        %v2159 = vsel %vm2141, %v2157, %v2158
        %v2160 = vrot.slane %v1621, 4
        %v2161 = vsel %vm2141, %v2158, %v2160
        %v2162 = vrot.slane %v1622, 4
        %v2163 = vrot.slane %v1623, 4
        %v2164 = vsel %vm2141, %v2162, %v2163
        %v2165 = vrot.slane %v1624, 4
        %v2166 = vsel %vm2141, %v2163, %v2165
        %v2167 = vrot.slane %v1625, 4
        %v2168 = vrot.slane %v1626, 4
        %v2169 = vsel %vm2141, %v2167, %v2168
        %v2170 = vrot.slane %v1627, 4
        %v2171 = vsel %vm2141, %v2168, %v2170
        %v2172 = vrot.slane %v1628, 4
        %v2173 = vrot.slane %v1629, 4
        %v2174 = vsel %vm2141, %v2172, %v2173
        %v2175 = vrot.slane %v1630, 4
        %v2176 = vsel %vm2141, %v2173, %v2175
        %v2177 = vrot.slane %v1631, 4
        %v2178 = vrot.slane %v1632, 4
        %v2179 = vsel %vm2141, %v2177, %v2178
        %v2180 = vrot.slane %v1633, 4
        %v2181 = vsel %vm2141, %v2178, %v2180
        %v2182 = vrot.slane %v1634, 4
        %v2183 = vrot.slane %v1635, 4
        %v2184 = vsel %vm2141, %v2182, %v2183
        %v2185 = vrot.slane %v1636, 4
        %v2186 = vsel %vm2141, %v2183, %v2185
        %v2187 = vrot.slane %v1637, 4
        %v2188 = vrot.slane %v1638, 4
        %v2189 = vsel %vm2141, %v2187, %v2188
        %v2190 = vrot.slane %v1639, 4
        %v2191 = vsel %vm2141, %v2188, %v2190
        %v2192 = vrot.slane %v1640, 4
        %v2193 = vrot.slane %v1641, 4
        %v2194 = vsel %vm2141, %v2192, %v2193
        %v2195 = vrot.slane %v1642, 4
        %v2196 = vsel %vm2141, %v2193, %v2195
        %v2197 = vrot.slane %v1643, 4
        %v2198 = vrot.slane %v1644, 4
        %v2199 = vsel %vm2141, %v2197, %v2198
        %v2200 = vrot.slane %v1645, 4
        %v2201 = vsel %vm2141, %v2198, %v2200
        %v2202 = vrot.slane %v1646, 4
        %v2203 = vrot.slane %v1647, 4
        %v2204 = vsel %vm2141, %v2202, %v2203
        %v2205 = vrot.slane %v1648, 4
        %v2206 = vsel %vm2141, %v2203, %v2205
        %v2207 = vrot.slane %v1649, 4
        %v2208 = vrot.slane %v1650, 4
        %v2209 = vsel %vm2141, %v2207, %v2208
        %v2210 = vrot.slane %v1651, 4
        %v2211 = vsel %vm2141, %v2208, %v2210
        %v2212 = vrot.slane %v1652, 4
        %v2213 = vrot.slane %v1653, 4
        %v2214 = vsel %vm2141, %v2212, %v2213
        %v2215 = vrot.slane %v1654, 4
        %v2216 = vsel %vm2141, %v2213, %v2215
        %v2217 = vrot.slane %v1655, 4
        %v2218 = vrot.slane %v1656, 4
        %v2219 = vsel %vm2141, %v2217, %v2218
        %v2220 = vrot.slane %v1657, 4
        %v2221 = vsel %vm2141, %v2218, %v2220
        %v2254 = vmax.f32 %v2109, %v2144
        %v2255 = vmax.f32 %v2110, %v2146
        %v2256 = vmax.f32 %v2111, %v2149
        %v2257 = vmax.f32 %v2112, %v2151
        %v2258 = vmax.f32 %v2113, %v2154
        %v2259 = vmax.f32 %v2114, %v2156
        %v2260 = vmax.f32 %v2115, %v2159
        %v2261 = vmax.f32 %v2116, %v2161
        %v2262 = vmax.f32 %v2117, %v2164
        %v2263 = vmax.f32 %v2118, %v2166
        %v2264 = vmax.f32 %v2119, %v2169
        %v2265 = vmax.f32 %v2120, %v2171
        %v2266 = vmax.f32 %v2121, %v2174
        %v2267 = vmax.f32 %v2122, %v2176
        %v2268 = vmax.f32 %v2123, %v2179
        %v2269 = vmax.f32 %v2124, %v2181
        %v2270 = vmax.f32 %v2125, %v2184
        %v2271 = vmax.f32 %v2126, %v2186
        %v2272 = vmax.f32 %v2127, %v2189
        %v2273 = vmax.f32 %v2128, %v2191
        %v2274 = vmax.f32 %v2129, %v2194
        %v2275 = vmax.f32 %v2130, %v2196
        %v2276 = vmax.f32 %v2131, %v2199
        %v2277 = vmax.f32 %v2132, %v2201
        %v2278 = vmax.f32 %v2133, %v2204
        %v2279 = vmax.f32 %v2134, %v2206
        %v2280 = vmax.f32 %v2135, %v2209
        %v2281 = vmax.f32 %v2136, %v2211
        %v2282 = vmax.f32 %v2137, %v2214
        %v2283 = vmax.f32 %v2138, %v2216
        %v2284 = vmax.f32 %v2139, %v2219
        %v2285 = vmax.f32 %v2140, %v2221
        %2286 = vst.msk [vmem:[#allocation2] sm:$0xff] %vm1311, -inf
        %2287 = vst.msk [vmem:[#allocation2 + $0x8] sm:$0xff] %vm1311, -inf
        %2288 = vst.msk [vmem:[#allocation2 + $0x10] sm:$0xf] %vm1314, -inf
        %2289 = vst.msk [vmem:[#allocation2 + $0x18] sm:$0xff] %vm1311, -inf
        %2290 = vst.msk [vmem:[#allocation2 + $0x20] sm:$0xff] %vm1311, -inf
        %2291 = vst.msk [vmem:[#allocation2 + $0x28] sm:$0xf] %vm1314, -inf
        %2292 = vst.msk [vmem:[#allocation2 + $0x30] sm:$0xff] %vm1311, -inf
        %2293 = vst.msk [vmem:[#allocation2 + $0x38] sm:$0xff] %vm1311, -inf
        %2294 = vst.msk [vmem:[#allocation2 + $0x40] sm:$0xf] %vm1314, -inf
        %2295 = vst.msk [vmem:[#allocation2 + $0x48] sm:$0xff] %vm1311, -inf
        %2296 = vst.msk [vmem:[#allocation2 + $0x50] sm:$0xff] %vm1311, -inf
        %2297 = vst.msk [vmem:[#allocation2 + $0x58] sm:$0xf] %vm1314, -inf
        %2298 = vst.msk [vmem:[#allocation2 + $0x60] sm:$0xff] %vm1311, -inf
        %2299 = vst.msk [vmem:[#allocation2 + $0x68] sm:$0xff] %vm1311, -inf
        %2300 = vst.msk [vmem:[#allocation2 + $0x70] sm:$0xf] %vm1314, -inf
        %2301 = vst.msk [vmem:[#allocation2 + $0x78] sm:$0xff] %vm1311, -inf
        %2302 = vst.msk [vmem:[#allocation2 + $0x80] sm:$0xff] %vm1311, -inf
        %2303 = vst.msk [vmem:[#allocation2 + $0x88] sm:$0xf] %vm1314, -inf
        %2304 = vst.msk [vmem:[#allocation2 + $0x90] sm:$0xff] %vm1311, -inf
        %2305 = vst.msk [vmem:[#allocation2 + $0x98] sm:$0xff] %vm1311, -inf
        %2306 = vst.msk [vmem:[#allocation2 + $0xa0] sm:$0xf] %vm1314, -inf
        %2307 = vst.msk [vmem:[#allocation2 + $0xa8] sm:$0xff] %vm1311, -inf
        %2308 = vst.msk [vmem:[#allocation2 + $0xb0] sm:$0xff] %vm1311, -inf
        %2309 = vst.msk [vmem:[#allocation2 + $0xb8] sm:$0xf] %vm1314, -inf
        %2310 = vst.msk [vmem:[#allocation2 + $0xc0] sm:$0xff] %vm1311, -inf
        %2311 = vst.msk [vmem:[#allocation2 + $0xc8] sm:$0xff] %vm1311, -inf
        %2312 = vst.msk [vmem:[#allocation2 + $0xd0] sm:$0xf] %vm1314, -inf
        %2313 = vst.msk [vmem:[#allocation2 + $0xd8] sm:$0xff] %vm1311, -inf
        %2314 = vst.msk [vmem:[#allocation2 + $0xe0] sm:$0xff] %vm1311, -inf
        %2315 = vst.msk [vmem:[#allocation2 + $0xe8] sm:$0xf] %vm1314, -inf
        %2316 = vst.msk [vmem:[#allocation2 + $0xf0] sm:$0xff] %vm1311, -inf
        %2317 = vst.msk [vmem:[#allocation2 + $0xf8] sm:$0xff] %vm1311, -inf
        %2318 = vst.msk [vmem:[#allocation2 + $0x100] sm:$0xf] %vm1314, -inf
        %2319 = vst.msk [vmem:[#allocation2 + $0x108] sm:$0xff] %vm1311, -inf
        %2320 = vst.msk [vmem:[#allocation2 + $0x110] sm:$0xff] %vm1311, -inf
        %2321 = vst.msk [vmem:[#allocation2 + $0x118] sm:$0xf] %vm1314, -inf
        %2322 = vst.msk [vmem:[#allocation2 + $0x120] sm:$0xff] %vm1311, -inf
        %2323 = vst.msk [vmem:[#allocation2 + $0x128] sm:$0xff] %vm1311, -inf
        %2324 = vst.msk [vmem:[#allocation2 + $0x130] sm:$0xf] %vm1314, -inf
        %2325 = vst.msk [vmem:[#allocation2 + $0x138] sm:$0xff] %vm1311, -inf
        %2326 = vst.msk [vmem:[#allocation2 + $0x140] sm:$0xff] %vm1311, -inf
        %2327 = vst.msk [vmem:[#allocation2 + $0x148] sm:$0xf] %vm1314, -inf
        %2328 = vst.msk [vmem:[#allocation2 + $0x150] sm:$0xff] %vm1311, -inf
        %2329 = vst.msk [vmem:[#allocation2 + $0x158] sm:$0xff] %vm1311, -inf
        %2330 = vst.msk [vmem:[#allocation2 + $0x160] sm:$0xf] %vm1314, -inf
        %2331 = vst.msk [vmem:[#allocation2 + $0x168] sm:$0xff] %vm1311, -inf
        %2332 = vst.msk [vmem:[#allocation2 + $0x170] sm:$0xff] %vm1311, -inf
        %2333 = vst.msk [vmem:[#allocation2 + $0x178] sm:$0xf] %vm1314, -inf
        %2334 = vst.msk [vmem:[#allocation2 + $0x180] sm:$0xff] %vm1311, -inf
        %2335 = vst.msk [vmem:[#allocation2 + $0x188] sm:$0xff] %vm1311, -inf
        %2336 = vst.msk [vmem:[#allocation2 + $0x190] sm:$0xf] %vm1314, -inf
        %2337 = vst.msk [vmem:[#allocation2 + $0x198] sm:$0xff] %vm1311, -inf
        %2338 = vst.msk [vmem:[#allocation2 + $0x1a0] sm:$0xff] %vm1311, -inf
        %2339 = vst.msk [vmem:[#allocation2 + $0x1a8] sm:$0xf] %vm1314, -inf
        %2340 = vst.msk [vmem:[#allocation2 + $0x1b0] sm:$0xff] %vm1311, -inf
        %2341 = vst.msk [vmem:[#allocation2 + $0x1b8] sm:$0xff] %vm1311, -inf
        %2342 = vst.msk [vmem:[#allocation2 + $0x1c0] sm:$0xf] %vm1314, -inf
        %2343 = vst.msk [vmem:[#allocation2 + $0x1c8] sm:$0xff] %vm1311, -inf
        %2344 = vst.msk [vmem:[#allocation2 + $0x1d0] sm:$0xff] %vm1311, -inf
        %2345 = vst.msk [vmem:[#allocation2 + $0x1d8] sm:$0xf] %vm1314, -inf
        %2346 = vst.msk [vmem:[%s1373 + $0x2] sm:$0xff] %vm1311, %v2254
        %2347 = vst.msk [vmem:[%s1373 + $0xa] sm:$0xff] %vm1311, %v2255
        %2348 = vst.msk [vmem:[%s1373 + $0x1a] sm:$0xff] %vm1311, %v2256
        %2349 = vst.msk [vmem:[%s1373 + $0x22] sm:$0xff] %vm1311, %v2257
        %2350 = vst.msk [vmem:[%s1373 + $0x32] sm:$0xff] %vm1311, %v2258
        %2351 = vst.msk [vmem:[%s1373 + $0x3a] sm:$0xff] %vm1311, %v2259
        %2352 = vst.msk [vmem:[%s1373 + $0x4a] sm:$0xff] %vm1311, %v2260
        %2353 = vst.msk [vmem:[%s1373 + $0x52] sm:$0xff] %vm1311, %v2261
        %2354 = vst.msk [vmem:[%s1373 + $0x62] sm:$0xff] %vm1311, %v2262
        %2355 = vst.msk [vmem:[%s1373 + $0x6a] sm:$0xff] %vm1311, %v2263
        %2356 = vst.msk [vmem:[%s1373 + $0x7a] sm:$0xff] %vm1311, %v2264
        %2357 = vst.msk [vmem:[%s1373 + $0x82] sm:$0xff] %vm1311, %v2265
        %2358 = vst.msk [vmem:[%s1373 + $0x92] sm:$0xff] %vm1311, %v2266
        %2359 = vst.msk [vmem:[%s1373 + $0x9a] sm:$0xff] %vm1311, %v2267
        %2360 = vst.msk [vmem:[%s1373 + $0xaa] sm:$0xff] %vm1311, %v2268
        %2361 = vst.msk [vmem:[%s1373 + $0xb2] sm:$0xff] %vm1311, %v2269
        %2362 = vst.msk [vmem:[%s1373 + $0xc2] sm:$0xff] %vm1311, %v2270
        %2363 = vst.msk [vmem:[%s1373 + $0xca] sm:$0xff] %vm1311, %v2271
        %2364 = vst.msk [vmem:[%s1373 + $0xda] sm:$0xff] %vm1311, %v2272
        %2365 = vst.msk [vmem:[%s1373 + $0xe2] sm:$0xff] %vm1311, %v2273
        %2366 = vst.msk [vmem:[%s1373 + $0xf2] sm:$0xff] %vm1311, %v2274
        %2367 = vst.msk [vmem:[%s1373 + $0xfa] sm:$0xff] %vm1311, %v2275
        %2368 = vst.msk [vmem:[%s1373 + $0x10a] sm:$0xff] %vm1311, %v2276
        %2369 = vst.msk [vmem:[%s1373 + $0x112] sm:$0xff] %vm1311, %v2277
        %2370 = vst.msk [vmem:[%s1373 + $0x122] sm:$0xff] %vm1311, %v2278
        %2371 = vst.msk [vmem:[%s1373 + $0x12a] sm:$0xff] %vm1311, %v2279
        %2372 = vst.msk [vmem:[%s1373 + $0x13a] sm:$0xff] %vm1311, %v2280
        %2373 = vst.msk [vmem:[%s1373 + $0x142] sm:$0xff] %vm1311, %v2281
        %2374 = vst.msk [vmem:[%s1373 + $0x152] sm:$0xff] %vm1311, %v2282
        %2375 = vst.msk [vmem:[%s1373 + $0x15a] sm:$0xff] %vm1311, %v2283
        %2376 = vst.msk [vmem:[%s1373 + $0x16a] sm:$0xff] %vm1311, %v2284
        %2377 = vst.msk [vmem:[%s1373 + $0x172] sm:$0xff] %vm1311, %v2285
        %v2378 = vld [vmem:[#allocation2] sm:$0xff]
        %v2379 = vld [vmem:[#allocation2 + $0x8] sm:$0xff]
        %v2380 = vld [vmem:[#allocation2 + $0x10] sm:$0xf]
        %v2381 = vld [vmem:[#allocation2 + $0x18] sm:$0xff]
        %v2382 = vld [vmem:[#allocation2 + $0x20] sm:$0xff]
        %v2383 = vld [vmem:[#allocation2 + $0x28] sm:$0xf]
        %v2384 = vld [vmem:[#allocation2 + $0x30] sm:$0xff]
        %v2385 = vld [vmem:[#allocation2 + $0x38] sm:$0xff]
        %v2386 = vld [vmem:[#allocation2 + $0x40] sm:$0xf]
        %v2387 = vld [vmem:[#allocation2 + $0x48] sm:$0xff]
        %v2388 = vld [vmem:[#allocation2 + $0x50] sm:$0xff]
        %v2389 = vld [vmem:[#allocation2 + $0x58] sm:$0xf]
        %v2390 = vld [vmem:[#allocation2 + $0x60] sm:$0xff]
        %v2391 = vld [vmem:[#allocation2 + $0x68] sm:$0xff]
        %v2392 = vld [vmem:[#allocation2 + $0x70] sm:$0xf]
        %v2393 = vld [vmem:[#allocation2 + $0x78] sm:$0xff]
        %v2394 = vld [vmem:[#allocation2 + $0x80] sm:$0xff]
        %v2395 = vld [vmem:[#allocation2 + $0x88] sm:$0xf]
        %v2396 = vld [vmem:[#allocation2 + $0x90] sm:$0xff]
        %v2397 = vld [vmem:[#allocation2 + $0x98] sm:$0xff]
        %v2398 = vld [vmem:[#allocation2 + $0xa0] sm:$0xf]
        %v2399 = vld [vmem:[#allocation2 + $0xa8] sm:$0xff]
        %v2400 = vld [vmem:[#allocation2 + $0xb0] sm:$0xff]
        %v2401 = vld [vmem:[#allocation2 + $0xb8] sm:$0xf]
        %v2402 = vld [vmem:[#allocation2 + $0xc0] sm:$0xff]
        %v2403 = vld [vmem:[#allocation2 + $0xc8] sm:$0xff]
        %v2404 = vld [vmem:[#allocation2 + $0xd0] sm:$0xf]
        %v2405 = vld [vmem:[#allocation2 + $0xd8] sm:$0xff]
        %v2406 = vld [vmem:[#allocation2 + $0xe0] sm:$0xff]
        %v2407 = vld [vmem:[#allocation2 + $0xe8] sm:$0xf]
        %v2408 = vld [vmem:[#allocation2 + $0xf0] sm:$0xff]
        %v2409 = vld [vmem:[#allocation2 + $0xf8] sm:$0xff]
        %v2410 = vld [vmem:[#allocation2 + $0x100] sm:$0xf]
        %v2411 = vld [vmem:[#allocation2 + $0x108] sm:$0xff]
        %v2412 = vld [vmem:[#allocation2 + $0x110] sm:$0xff]
        %v2413 = vld [vmem:[#allocation2 + $0x118] sm:$0xf]
        %v2414 = vld [vmem:[#allocation2 + $0x120] sm:$0xff]
        %v2415 = vld [vmem:[#allocation2 + $0x128] sm:$0xff]
        %v2416 = vld [vmem:[#allocation2 + $0x130] sm:$0xf]
        %v2417 = vld [vmem:[#allocation2 + $0x138] sm:$0xff]
        %v2418 = vld [vmem:[#allocation2 + $0x140] sm:$0xff]
        %v2419 = vld [vmem:[#allocation2 + $0x148] sm:$0xf]
        %v2420 = vld [vmem:[#allocation2 + $0x150] sm:$0xff]
        %v2421 = vld [vmem:[#allocation2 + $0x158] sm:$0xff]
        %v2422 = vld [vmem:[#allocation2 + $0x160] sm:$0xf]
        %v2423 = vld [vmem:[#allocation2 + $0x168] sm:$0xff]
        %v2424 = vld [vmem:[#allocation2 + $0x170] sm:$0xff]
        %v2425 = vld [vmem:[#allocation2 + $0x178] sm:$0xf]
        %v2426 = vld [vmem:[#allocation2 + $0x180] sm:$0xff]
        %v2427 = vld [vmem:[#allocation2 + $0x188] sm:$0xff]
        %v2428 = vld [vmem:[#allocation2 + $0x190] sm:$0xf]
        %v2429 = vld [vmem:[#allocation2 + $0x198] sm:$0xff]
        %v2430 = vld [vmem:[#allocation2 + $0x1a0] sm:$0xff]
        %v2431 = vld [vmem:[#allocation2 + $0x1a8] sm:$0xf]
        %v2432 = vld [vmem:[#allocation2 + $0x1b0] sm:$0xff]
        %v2433 = vld [vmem:[#allocation2 + $0x1b8] sm:$0xff]
        %v2434 = vld [vmem:[#allocation2 + $0x1c0] sm:$0xf]
        %v2435 = vld [vmem:[#allocation2 + $0x1c8] sm:$0xff]
        %v2436 = vld [vmem:[#allocation2 + $0x1d0] sm:$0xff]
        %v2437 = vld [vmem:[#allocation2 + $0x1d8] sm:$0xf]
        %v2438 = vmax.f32 %v2378, %v2381
        %v2439 = vmax.f32 %v2379, %v2382
        %v2440 = vmax.f32 %v2380, %v2383
        %v2441 = vmax.f32 %v2381, %v2384
        %v2442 = vmax.f32 %v2382, %v2385
        %v2443 = vmax.f32 %v2383, %v2386
        %v2444 = vmax.f32 %v2384, %v2387
        %v2445 = vmax.f32 %v2385, %v2388
        %v2446 = vmax.f32 %v2386, %v2389
        %v2447 = vmax.f32 %v2387, %v2390
        %v2448 = vmax.f32 %v2388, %v2391
        %v2449 = vmax.f32 %v2389, %v2392
        %v2450 = vmax.f32 %v2390, %v2393
        %v2451 = vmax.f32 %v2391, %v2394
        %v2452 = vmax.f32 %v2392, %v2395
        %v2453 = vmax.f32 %v2393, %v2396
        %v2454 = vmax.f32 %v2394, %v2397
        %v2455 = vmax.f32 %v2395, %v2398
        %v2456 = vmax.f32 %v2396, %v2399
        %v2457 = vmax.f32 %v2397, %v2400
        %v2458 = vmax.f32 %v2398, %v2401
        %v2459 = vmax.f32 %v2399, %v2402
        %v2460 = vmax.f32 %v2400, %v2403
        %v2461 = vmax.f32 %v2401, %v2404
        %v2462 = vmax.f32 %v2402, %v2405
        %v2463 = vmax.f32 %v2403, %v2406
        %v2464 = vmax.f32 %v2404, %v2407
        %v2465 = vmax.f32 %v2405, %v2408
        %v2466 = vmax.f32 %v2406, %v2409
        %v2467 = vmax.f32 %v2407, %v2410
        %v2468 = vmax.f32 %v2408, %v2411
        %v2469 = vmax.f32 %v2409, %v2412
        %v2470 = vmax.f32 %v2410, %v2413
        %v2471 = vmax.f32 %v2411, %v2414
        %v2472 = vmax.f32 %v2412, %v2415
        %v2473 = vmax.f32 %v2413, %v2416
        %v2474 = vmax.f32 %v2414, %v2417
        %v2475 = vmax.f32 %v2415, %v2418
        %v2476 = vmax.f32 %v2416, %v2419
        %v2477 = vmax.f32 %v2417, %v2420
        %v2478 = vmax.f32 %v2418, %v2421
        %v2479 = vmax.f32 %v2419, %v2422
        %v2480 = vmax.f32 %v2420, %v2423
        %v2481 = vmax.f32 %v2421, %v2424
        %v2482 = vmax.f32 %v2422, %v2425
        %v2483 = vmax.f32 %v2423, %v2426
        %v2484 = vmax.f32 %v2424, %v2427
        %v2485 = vmax.f32 %v2425, %v2428
        %v2486 = vmax.f32 %v2438, %v2384
        %v2487 = vmax.f32 %v2439, %v2385
        %v2488 = vmax.f32 %v2440, %v2386
        %v2489 = vmax.f32 %v2441, %v2387
        %v2490 = vmax.f32 %v2442, %v2388
        %v2491 = vmax.f32 %v2443, %v2389
        %v2492 = vmax.f32 %v2444, %v2390
        %v2493 = vmax.f32 %v2445, %v2391
        %v2494 = vmax.f32 %v2446, %v2392
        %v2495 = vmax.f32 %v2447, %v2393
        %v2496 = vmax.f32 %v2448, %v2394
        %v2497 = vmax.f32 %v2449, %v2395
        %v2498 = vmax.f32 %v2450, %v2396
        %v2499 = vmax.f32 %v2451, %v2397
        %v2500 = vmax.f32 %v2452, %v2398
        %v2501 = vmax.f32 %v2453, %v2399
        %v2502 = vmax.f32 %v2454, %v2400
        %v2503 = vmax.f32 %v2455, %v2401
        %v2504 = vmax.f32 %v2456, %v2402
        %v2505 = vmax.f32 %v2457, %v2403
        %v2506 = vmax.f32 %v2458, %v2404
        %v2507 = vmax.f32 %v2459, %v2405
        %v2508 = vmax.f32 %v2460, %v2406
        %v2509 = vmax.f32 %v2461, %v2407
        %v2510 = vmax.f32 %v2462, %v2408
        %v2511 = vmax.f32 %v2463, %v2409
        %v2512 = vmax.f32 %v2464, %v2410
        %v2513 = vmax.f32 %v2465, %v2411
        %v2514 = vmax.f32 %v2466, %v2412
        %v2515 = vmax.f32 %v2467, %v2413
        %v2516 = vmax.f32 %v2468, %v2414
        %v2517 = vmax.f32 %v2469, %v2415
        %v2518 = vmax.f32 %v2470, %v2416
        %v2519 = vmax.f32 %v2471, %v2417
        %v2520 = vmax.f32 %v2472, %v2418
        %v2521 = vmax.f32 %v2473, %v2419
        %v2522 = vmax.f32 %v2474, %v2420
        %v2523 = vmax.f32 %v2475, %v2421
        %v2524 = vmax.f32 %v2476, %v2422
        %v2525 = vmax.f32 %v2477, %v2423
        %v2526 = vmax.f32 %v2478, %v2424
        %v2527 = vmax.f32 %v2479, %v2425
        %v2528 = vmax.f32 %v2480, %v2426
        %v2529 = vmax.f32 %v2481, %v2427
        %v2530 = vmax.f32 %v2482, %v2428
        %v2531 = vmax.f32 %v2483, %v2429
        %v2532 = vmax.f32 %v2484, %v2430
        %v2533 = vmax.f32 %v2485, %v2431
        %v2534 = vmax.f32 %v2486, %v2387
        %v2535 = vmax.f32 %v2487, %v2388
        %v2536 = vmax.f32 %v2488, %v2389
        %v2537 = vmax.f32 %v2489, %v2390
        %v2538 = vmax.f32 %v2490, %v2391
        %v2539 = vmax.f32 %v2491, %v2392
        %v2540 = vmax.f32 %v2492, %v2393
        %v2541 = vmax.f32 %v2493, %v2394
        %v2542 = vmax.f32 %v2494, %v2395
        %v2543 = vmax.f32 %v2495, %v2396
        %v2544 = vmax.f32 %v2496, %v2397
        %v2545 = vmax.f32 %v2497, %v2398
        %v2546 = vmax.f32 %v2498, %v2399
        %v2547 = vmax.f32 %v2499, %v2400
        %v2548 = vmax.f32 %v2500, %v2401
        %v2549 = vmax.f32 %v2501, %v2402
        %v2550 = vmax.f32 %v2502, %v2403
        %v2551 = vmax.f32 %v2503, %v2404
        %v2552 = vmax.f32 %v2504, %v2405
        %v2553 = vmax.f32 %v2505, %v2406
        %v2554 = vmax.f32 %v2506, %v2407
        %v2555 = vmax.f32 %v2507, %v2408
        %v2556 = vmax.f32 %v2508, %v2409
        %v2557 = vmax.f32 %v2509, %v2410
        %v2558 = vmax.f32 %v2510, %v2411
        %v2559 = vmax.f32 %v2511, %v2412
        %v2560 = vmax.f32 %v2512, %v2413
        %v2561 = vmax.f32 %v2513, %v2414
        %v2562 = vmax.f32 %v2514, %v2415
        %v2563 = vmax.f32 %v2515, %v2416
        %v2564 = vmax.f32 %v2516, %v2417
        %v2565 = vmax.f32 %v2517, %v2418
        %v2566 = vmax.f32 %v2518, %v2419
        %v2567 = vmax.f32 %v2519, %v2420
        %v2568 = vmax.f32 %v2520, %v2421
        %v2569 = vmax.f32 %v2521, %v2422
        %v2570 = vmax.f32 %v2522, %v2423
        %v2571 = vmax.f32 %v2523, %v2424
        %v2572 = vmax.f32 %v2524, %v2425
        %v2573 = vmax.f32 %v2525, %v2426
        %v2574 = vmax.f32 %v2526, %v2427
        %v2575 = vmax.f32 %v2527, %v2428
        %v2576 = vmax.f32 %v2528, %v2429
        %v2577 = vmax.f32 %v2529, %v2430
        %v2578 = vmax.f32 %v2530, %v2431
        %v2579 = vmax.f32 %v2531, %v2432
        %v2580 = vmax.f32 %v2532, %v2433
        %v2581 = vmax.f32 %v2533, %v2434
        %v2582 = vmax.f32 %v2534, %v2390
        %v2583 = vmax.f32 %v2535, %v2391
        %v2584 = vmax.f32 %v2536, %v2392
        %v2585 = vmax.f32 %v2537, %v2393
        %v2586 = vmax.f32 %v2538, %v2394
        %v2587 = vmax.f32 %v2539, %v2395
        %v2588 = vmax.f32 %v2540, %v2396
        %v2589 = vmax.f32 %v2541, %v2397
        %v2590 = vmax.f32 %v2542, %v2398
        %v2591 = vmax.f32 %v2543, %v2399
        %v2592 = vmax.f32 %v2544, %v2400
        %v2593 = vmax.f32 %v2545, %v2401
        %v2594 = vmax.f32 %v2546, %v2402
        %v2595 = vmax.f32 %v2547, %v2403
        %v2596 = vmax.f32 %v2548, %v2404
        %v2597 = vmax.f32 %v2549, %v2405
        %v2598 = vmax.f32 %v2550, %v2406
        %v2599 = vmax.f32 %v2551, %v2407
        %v2600 = vmax.f32 %v2552, %v2408
        %v2601 = vmax.f32 %v2553, %v2409
        %v2602 = vmax.f32 %v2554, %v2410
        %v2603 = vmax.f32 %v2555, %v2411
        %v2604 = vmax.f32 %v2556, %v2412
        %v2605 = vmax.f32 %v2557, %v2413
        %v2606 = vmax.f32 %v2558, %v2414
        %v2607 = vmax.f32 %v2559, %v2415
        %v2608 = vmax.f32 %v2560, %v2416
        %v2609 = vmax.f32 %v2561, %v2417
        %v2610 = vmax.f32 %v2562, %v2418
        %v2611 = vmax.f32 %v2563, %v2419
        %v2612 = vmax.f32 %v2564, %v2420
        %v2613 = vmax.f32 %v2565, %v2421
        %v2614 = vmax.f32 %v2566, %v2422
        %v2615 = vmax.f32 %v2567, %v2423
        %v2616 = vmax.f32 %v2568, %v2424
        %v2617 = vmax.f32 %v2569, %v2425
        %v2618 = vmax.f32 %v2570, %v2426
        %v2619 = vmax.f32 %v2571, %v2427
        %v2620 = vmax.f32 %v2572, %v2428
        %v2621 = vmax.f32 %v2573, %v2429
        %v2622 = vmax.f32 %v2574, %v2430
        %v2623 = vmax.f32 %v2575, %v2431
        %v2624 = vmax.f32 %v2576, %v2432
        %v2625 = vmax.f32 %v2577, %v2433
        %v2626 = vmax.f32 %v2578, %v2434
        %v2627 = vmax.f32 %v2579, %v2435
        %v2628 = vmax.f32 %v2580, %v2436
        %v2629 = vmax.f32 %v2581, %v2437
        %v2678 = vrot.slane %v2582, 1
        %v2679 = vrot.slane %v2583, 1
        %v2680 = vsel %vm1706, %v2678, %v2679
        %v2681 = vrot.slane %v2584, 1
        %v2682 = vsel %vm1706, %v2679, %v2681
        %v2683 = vrot.slane %v2585, 1
        %v2684 = vrot.slane %v2586, 1
        %v2685 = vsel %vm1706, %v2683, %v2684
        %v2686 = vrot.slane %v2587, 1
        %v2687 = vsel %vm1706, %v2684, %v2686
        %v2688 = vrot.slane %v2588, 1
        %v2689 = vrot.slane %v2589, 1
        %v2690 = vsel %vm1706, %v2688, %v2689
        %v2691 = vrot.slane %v2590, 1
        %v2692 = vsel %vm1706, %v2689, %v2691
        %v2693 = vrot.slane %v2591, 1
        %v2694 = vrot.slane %v2592, 1
        %v2695 = vsel %vm1706, %v2693, %v2694
        %v2696 = vrot.slane %v2593, 1
        %v2697 = vsel %vm1706, %v2694, %v2696
        %v2698 = vrot.slane %v2594, 1
        %v2699 = vrot.slane %v2595, 1
        %v2700 = vsel %vm1706, %v2698, %v2699
        %v2701 = vrot.slane %v2596, 1
        %v2702 = vsel %vm1706, %v2699, %v2701
        %v2703 = vrot.slane %v2597, 1
        %v2704 = vrot.slane %v2598, 1
        %v2705 = vsel %vm1706, %v2703, %v2704
        %v2706 = vrot.slane %v2599, 1
        %v2707 = vsel %vm1706, %v2704, %v2706
        %v2708 = vrot.slane %v2600, 1
        %v2709 = vrot.slane %v2601, 1
        %v2710 = vsel %vm1706, %v2708, %v2709
        %v2711 = vrot.slane %v2602, 1
        %v2712 = vsel %vm1706, %v2709, %v2711
        %v2713 = vrot.slane %v2603, 1
        %v2714 = vrot.slane %v2604, 1
        %v2715 = vsel %vm1706, %v2713, %v2714
        %v2716 = vrot.slane %v2605, 1
        %v2717 = vsel %vm1706, %v2714, %v2716
        %v2718 = vrot.slane %v2606, 1
        %v2719 = vrot.slane %v2607, 1
        %v2720 = vsel %vm1706, %v2718, %v2719
        %v2721 = vrot.slane %v2608, 1
        %v2722 = vsel %vm1706, %v2719, %v2721
        %v2723 = vrot.slane %v2609, 1
        %v2724 = vrot.slane %v2610, 1
        %v2725 = vsel %vm1706, %v2723, %v2724
        %v2726 = vrot.slane %v2611, 1
        %v2727 = vsel %vm1706, %v2724, %v2726
        %v2728 = vrot.slane %v2612, 1
        %v2729 = vrot.slane %v2613, 1
        %v2730 = vsel %vm1706, %v2728, %v2729
        %v2731 = vrot.slane %v2614, 1
        %v2732 = vsel %vm1706, %v2729, %v2731
        %v2733 = vrot.slane %v2615, 1
        %v2734 = vrot.slane %v2616, 1
        %v2735 = vsel %vm1706, %v2733, %v2734
        %v2736 = vrot.slane %v2617, 1
        %v2737 = vsel %vm1706, %v2734, %v2736
        %v2738 = vrot.slane %v2618, 1
        %v2739 = vrot.slane %v2619, 1
        %v2740 = vsel %vm1706, %v2738, %v2739
        %v2741 = vrot.slane %v2620, 1
        %v2742 = vsel %vm1706, %v2739, %v2741
        %v2743 = vrot.slane %v2621, 1
        %v2744 = vrot.slane %v2622, 1
        %v2745 = vsel %vm1706, %v2743, %v2744
        %v2746 = vrot.slane %v2623, 1
        %v2747 = vsel %vm1706, %v2744, %v2746
        %v2748 = vrot.slane %v2624, 1
        %v2749 = vrot.slane %v2625, 1
        %v2750 = vsel %vm1706, %v2748, %v2749
        %v2751 = vrot.slane %v2626, 1
        %v2752 = vsel %vm1706, %v2749, %v2751
        %v2753 = vrot.slane %v2627, 1
        %v2754 = vrot.slane %v2628, 1
        %v2755 = vsel %vm1706, %v2753, %v2754
        %v2756 = vrot.slane %v2629, 1
        %v2757 = vsel %vm1706, %v2754, %v2756
        %v2790 = vmax.f32 %v2582, %v2680
        %v2791 = vmax.f32 %v2583, %v2682
        %v2792 = vmax.f32 %v2585, %v2685
        %v2793 = vmax.f32 %v2586, %v2687
        %v2794 = vmax.f32 %v2588, %v2690
        %v2795 = vmax.f32 %v2589, %v2692
        %v2796 = vmax.f32 %v2591, %v2695
        %v2797 = vmax.f32 %v2592, %v2697
        %v2798 = vmax.f32 %v2594, %v2700
        %v2799 = vmax.f32 %v2595, %v2702
        %v2800 = vmax.f32 %v2597, %v2705
        %v2801 = vmax.f32 %v2598, %v2707
        %v2802 = vmax.f32 %v2600, %v2710
        %v2803 = vmax.f32 %v2601, %v2712
        %v2804 = vmax.f32 %v2603, %v2715
        %v2805 = vmax.f32 %v2604, %v2717
        %v2806 = vmax.f32 %v2606, %v2720
        %v2807 = vmax.f32 %v2607, %v2722
        %v2808 = vmax.f32 %v2609, %v2725
        %v2809 = vmax.f32 %v2610, %v2727
        %v2810 = vmax.f32 %v2612, %v2730
        %v2811 = vmax.f32 %v2613, %v2732
        %v2812 = vmax.f32 %v2615, %v2735
        %v2813 = vmax.f32 %v2616, %v2737
        %v2814 = vmax.f32 %v2618, %v2740
        %v2815 = vmax.f32 %v2619, %v2742
        %v2816 = vmax.f32 %v2621, %v2745
        %v2817 = vmax.f32 %v2622, %v2747
        %v2818 = vmax.f32 %v2624, %v2750
        %v2819 = vmax.f32 %v2625, %v2752
        %v2820 = vmax.f32 %v2627, %v2755
        %v2821 = vmax.f32 %v2628, %v2757
        %v2822 = vrot.slane %v2582, 2
        %v2823 = vrot.slane %v2583, 2
        %v2824 = vsel %vm1851, %v2822, %v2823
        %v2825 = vrot.slane %v2584, 2
        %v2826 = vsel %vm1851, %v2823, %v2825
        %v2827 = vrot.slane %v2585, 2
        %v2828 = vrot.slane %v2586, 2
        %v2829 = vsel %vm1851, %v2827, %v2828
        %v2830 = vrot.slane %v2587, 2
        %v2831 = vsel %vm1851, %v2828, %v2830
        %v2832 = vrot.slane %v2588, 2
        %v2833 = vrot.slane %v2589, 2
        %v2834 = vsel %vm1851, %v2832, %v2833
        %v2835 = vrot.slane %v2590, 2
        %v2836 = vsel %vm1851, %v2833, %v2835
        %v2837 = vrot.slane %v2591, 2
        %v2838 = vrot.slane %v2592, 2
        %v2839 = vsel %vm1851, %v2837, %v2838
        %v2840 = vrot.slane %v2593, 2
        %v2841 = vsel %vm1851, %v2838, %v2840
        %v2842 = vrot.slane %v2594, 2
        %v2843 = vrot.slane %v2595, 2
        %v2844 = vsel %vm1851, %v2842, %v2843
        %v2845 = vrot.slane %v2596, 2
        %v2846 = vsel %vm1851, %v2843, %v2845
        %v2847 = vrot.slane %v2597, 2
        %v2848 = vrot.slane %v2598, 2
        %v2849 = vsel %vm1851, %v2847, %v2848
        %v2850 = vrot.slane %v2599, 2
        %v2851 = vsel %vm1851, %v2848, %v2850
        %v2852 = vrot.slane %v2600, 2
        %v2853 = vrot.slane %v2601, 2
        %v2854 = vsel %vm1851, %v2852, %v2853
        %v2855 = vrot.slane %v2602, 2
        %v2856 = vsel %vm1851, %v2853, %v2855
        %v2857 = vrot.slane %v2603, 2
        %v2858 = vrot.slane %v2604, 2
        %v2859 = vsel %vm1851, %v2857, %v2858
        %v2860 = vrot.slane %v2605, 2
        %v2861 = vsel %vm1851, %v2858, %v2860
        %v2862 = vrot.slane %v2606, 2
        %v2863 = vrot.slane %v2607, 2
        %v2864 = vsel %vm1851, %v2862, %v2863
        %v2865 = vrot.slane %v2608, 2
        %v2866 = vsel %vm1851, %v2863, %v2865
        %v2867 = vrot.slane %v2609, 2
        %v2868 = vrot.slane %v2610, 2
        %v2869 = vsel %vm1851, %v2867, %v2868
        %v2870 = vrot.slane %v2611, 2
        %v2871 = vsel %vm1851, %v2868, %v2870
        %v2872 = vrot.slane %v2612, 2
        %v2873 = vrot.slane %v2613, 2
        %v2874 = vsel %vm1851, %v2872, %v2873
        %v2875 = vrot.slane %v2614, 2
        %v2876 = vsel %vm1851, %v2873, %v2875
        %v2877 = vrot.slane %v2615, 2
        %v2878 = vrot.slane %v2616, 2
        %v2879 = vsel %vm1851, %v2877, %v2878
        %v2880 = vrot.slane %v2617, 2
        %v2881 = vsel %vm1851, %v2878, %v2880
        %v2882 = vrot.slane %v2618, 2
        %v2883 = vrot.slane %v2619, 2
        %v2884 = vsel %vm1851, %v2882, %v2883
        %v2885 = vrot.slane %v2620, 2
        %v2886 = vsel %vm1851, %v2883, %v2885
        %v2887 = vrot.slane %v2621, 2
        %v2888 = vrot.slane %v2622, 2
        %v2889 = vsel %vm1851, %v2887, %v2888
        %v2890 = vrot.slane %v2623, 2
        %v2891 = vsel %vm1851, %v2888, %v2890
        %v2892 = vrot.slane %v2624, 2
        %v2893 = vrot.slane %v2625, 2
        %v2894 = vsel %vm1851, %v2892, %v2893
        %v2895 = vrot.slane %v2626, 2
        %v2896 = vsel %vm1851, %v2893, %v2895
        %v2897 = vrot.slane %v2627, 2
        %v2898 = vrot.slane %v2628, 2
        %v2899 = vsel %vm1851, %v2897, %v2898
        %v2900 = vrot.slane %v2629, 2
        %v2901 = vsel %vm1851, %v2898, %v2900
        %v2934 = vmax.f32 %v2790, %v2824
        %v2935 = vmax.f32 %v2791, %v2826
        %v2936 = vmax.f32 %v2792, %v2829
        %v2937 = vmax.f32 %v2793, %v2831
        %v2938 = vmax.f32 %v2794, %v2834
        %v2939 = vmax.f32 %v2795, %v2836
        %v2940 = vmax.f32 %v2796, %v2839
        %v2941 = vmax.f32 %v2797, %v2841
        %v2942 = vmax.f32 %v2798, %v2844
        %v2943 = vmax.f32 %v2799, %v2846
        %v2944 = vmax.f32 %v2800, %v2849
        %v2945 = vmax.f32 %v2801, %v2851
        %v2946 = vmax.f32 %v2802, %v2854
        %v2947 = vmax.f32 %v2803, %v2856
        %v2948 = vmax.f32 %v2804, %v2859
        %v2949 = vmax.f32 %v2805, %v2861
        %v2950 = vmax.f32 %v2806, %v2864
        %v2951 = vmax.f32 %v2807, %v2866
        %v2952 = vmax.f32 %v2808, %v2869
        %v2953 = vmax.f32 %v2809, %v2871
        %v2954 = vmax.f32 %v2810, %v2874
        %v2955 = vmax.f32 %v2811, %v2876
        %v2956 = vmax.f32 %v2812, %v2879
        %v2957 = vmax.f32 %v2813, %v2881
        %v2958 = vmax.f32 %v2814, %v2884
        %v2959 = vmax.f32 %v2815, %v2886
        %v2960 = vmax.f32 %v2816, %v2889
        %v2961 = vmax.f32 %v2817, %v2891
        %v2962 = vmax.f32 %v2818, %v2894
        %v2963 = vmax.f32 %v2819, %v2896
        %v2964 = vmax.f32 %v2820, %v2899
        %v2965 = vmax.f32 %v2821, %v2901
        %v2966 = vrot.slane %v2582, 3
        %v2967 = vrot.slane %v2583, 3
        %v2968 = vsel %vm1996, %v2966, %v2967
        %v2969 = vrot.slane %v2584, 3
        %v2970 = vsel %vm1996, %v2967, %v2969
        %v2971 = vrot.slane %v2585, 3
        %v2972 = vrot.slane %v2586, 3
        %v2973 = vsel %vm1996, %v2971, %v2972
        %v2974 = vrot.slane %v2587, 3
        %v2975 = vsel %vm1996, %v2972, %v2974
        %v2976 = vrot.slane %v2588, 3
        %v2977 = vrot.slane %v2589, 3
        %v2978 = vsel %vm1996, %v2976, %v2977
        %v2979 = vrot.slane %v2590, 3
        %v2980 = vsel %vm1996, %v2977, %v2979
        %v2981 = vrot.slane %v2591, 3
        %v2982 = vrot.slane %v2592, 3
        %v2983 = vsel %vm1996, %v2981, %v2982
        %v2984 = vrot.slane %v2593, 3
        %v2985 = vsel %vm1996, %v2982, %v2984
        %v2986 = vrot.slane %v2594, 3
        %v2987 = vrot.slane %v2595, 3
        %v2988 = vsel %vm1996, %v2986, %v2987
        %v2989 = vrot.slane %v2596, 3
        %v2990 = vsel %vm1996, %v2987, %v2989
        %v2991 = vrot.slane %v2597, 3
        %v2992 = vrot.slane %v2598, 3
        %v2993 = vsel %vm1996, %v2991, %v2992
        %v2994 = vrot.slane %v2599, 3
        %v2995 = vsel %vm1996, %v2992, %v2994
        %v2996 = vrot.slane %v2600, 3
        %v2997 = vrot.slane %v2601, 3
        %v2998 = vsel %vm1996, %v2996, %v2997
        %v2999 = vrot.slane %v2602, 3
        %v3000 = vsel %vm1996, %v2997, %v2999
        %v3001 = vrot.slane %v2603, 3
        %v3002 = vrot.slane %v2604, 3
        %v3003 = vsel %vm1996, %v3001, %v3002
        %v3004 = vrot.slane %v2605, 3
        %v3005 = vsel %vm1996, %v3002, %v3004
        %v3006 = vrot.slane %v2606, 3
        %v3007 = vrot.slane %v2607, 3
        %v3008 = vsel %vm1996, %v3006, %v3007
        %v3009 = vrot.slane %v2608, 3
        %v3010 = vsel %vm1996, %v3007, %v3009
        %v3011 = vrot.slane %v2609, 3
        %v3012 = vrot.slane %v2610, 3
        %v3013 = vsel %vm1996, %v3011, %v3012
        %v3014 = vrot.slane %v2611, 3
        %v3015 = vsel %vm1996, %v3012, %v3014
        %v3016 = vrot.slane %v2612, 3
        %v3017 = vrot.slane %v2613, 3
        %v3018 = vsel %vm1996, %v3016, %v3017
        %v3019 = vrot.slane %v2614, 3
        %v3020 = vsel %vm1996, %v3017, %v3019
        %v3021 = vrot.slane %v2615, 3
        %v3022 = vrot.slane %v2616, 3
        %v3023 = vsel %vm1996, %v3021, %v3022
        %v3024 = vrot.slane %v2617, 3
        %v3025 = vsel %vm1996, %v3022, %v3024
        %v3026 = vrot.slane %v2618, 3
        %v3027 = vrot.slane %v2619, 3
        %v3028 = vsel %vm1996, %v3026, %v3027
        %v3029 = vrot.slane %v2620, 3
        %v3030 = vsel %vm1996, %v3027, %v3029
        %v3031 = vrot.slane %v2621, 3
        %v3032 = vrot.slane %v2622, 3
        %v3033 = vsel %vm1996, %v3031, %v3032
        %v3034 = vrot.slane %v2623, 3
        %v3035 = vsel %vm1996, %v3032, %v3034
        %v3036 = vrot.slane %v2624, 3
        %v3037 = vrot.slane %v2625, 3
        %v3038 = vsel %vm1996, %v3036, %v3037
        %v3039 = vrot.slane %v2626, 3
        %v3040 = vsel %vm1996, %v3037, %v3039
        %v3041 = vrot.slane %v2627, 3
        %v3042 = vrot.slane %v2628, 3
        %v3043 = vsel %vm1996, %v3041, %v3042
        %v3044 = vrot.slane %v2629, 3
        %v3045 = vsel %vm1996, %v3042, %v3044
        %v3078 = vmax.f32 %v2934, %v2968
        %v3079 = vmax.f32 %v2935, %v2970
        %v3080 = vmax.f32 %v2936, %v2973
        %v3081 = vmax.f32 %v2937, %v2975
        %v3082 = vmax.f32 %v2938, %v2978
        %v3083 = vmax.f32 %v2939, %v2980
        %v3084 = vmax.f32 %v2940, %v2983
        %v3085 = vmax.f32 %v2941, %v2985
        %v3086 = vmax.f32 %v2942, %v2988
        %v3087 = vmax.f32 %v2943, %v2990
        %v3088 = vmax.f32 %v2944, %v2993
        %v3089 = vmax.f32 %v2945, %v2995
        %v3090 = vmax.f32 %v2946, %v2998
        %v3091 = vmax.f32 %v2947, %v3000
        %v3092 = vmax.f32 %v2948, %v3003
        %v3093 = vmax.f32 %v2949, %v3005
        %v3094 = vmax.f32 %v2950, %v3008
        %v3095 = vmax.f32 %v2951, %v3010
        %v3096 = vmax.f32 %v2952, %v3013
        %v3097 = vmax.f32 %v2953, %v3015
        %v3098 = vmax.f32 %v2954, %v3018
        %v3099 = vmax.f32 %v2955, %v3020
        %v3100 = vmax.f32 %v2956, %v3023
        %v3101 = vmax.f32 %v2957, %v3025
        %v3102 = vmax.f32 %v2958, %v3028
        %v3103 = vmax.f32 %v2959, %v3030
        %v3104 = vmax.f32 %v2960, %v3033
        %v3105 = vmax.f32 %v2961, %v3035
        %v3106 = vmax.f32 %v2962, %v3038
        %v3107 = vmax.f32 %v2963, %v3040
        %v3108 = vmax.f32 %v2964, %v3043
        %v3109 = vmax.f32 %v2965, %v3045
        %v3110 = vrot.slane %v2582, 4
        %v3111 = vrot.slane %v2583, 4
        %v3112 = vsel %vm2141, %v3110, %v3111
        %v3113 = vrot.slane %v2584, 4
        %v3114 = vsel %vm2141, %v3111, %v3113
        %v3115 = vrot.slane %v2585, 4
        %v3116 = vrot.slane %v2586, 4
        %v3117 = vsel %vm2141, %v3115, %v3116
        %v3118 = vrot.slane %v2587, 4
        %v3119 = vsel %vm2141, %v3116, %v3118
        %v3120 = vrot.slane %v2588, 4
        %v3121 = vrot.slane %v2589, 4
        %v3122 = vsel %vm2141, %v3120, %v3121
        %v3123 = vrot.slane %v2590, 4
        %v3124 = vsel %vm2141, %v3121, %v3123
        %v3125 = vrot.slane %v2591, 4
        %v3126 = vrot.slane %v2592, 4
        %v3127 = vsel %vm2141, %v3125, %v3126
        %v3128 = vrot.slane %v2593, 4
        %v3129 = vsel %vm2141, %v3126, %v3128
        %v3130 = vrot.slane %v2594, 4
        %v3131 = vrot.slane %v2595, 4
        %v3132 = vsel %vm2141, %v3130, %v3131
        %v3133 = vrot.slane %v2596, 4
        %v3134 = vsel %vm2141, %v3131, %v3133
        %v3135 = vrot.slane %v2597, 4
        %v3136 = vrot.slane %v2598, 4
        %v3137 = vsel %vm2141, %v3135, %v3136
        %v3138 = vrot.slane %v2599, 4
        %v3139 = vsel %vm2141, %v3136, %v3138
        %v3140 = vrot.slane %v2600, 4
        %v3141 = vrot.slane %v2601, 4
        %v3142 = vsel %vm2141, %v3140, %v3141
        %v3143 = vrot.slane %v2602, 4
        %v3144 = vsel %vm2141, %v3141, %v3143
        %v3145 = vrot.slane %v2603, 4
        %v3146 = vrot.slane %v2604, 4
        %v3147 = vsel %vm2141, %v3145, %v3146
        %v3148 = vrot.slane %v2605, 4
        %v3149 = vsel %vm2141, %v3146, %v3148
        %v3150 = vrot.slane %v2606, 4
        %v3151 = vrot.slane %v2607, 4
        %v3152 = vsel %vm2141, %v3150, %v3151
        %v3153 = vrot.slane %v2608, 4
        %v3154 = vsel %vm2141, %v3151, %v3153
        %v3155 = vrot.slane %v2609, 4
        %v3156 = vrot.slane %v2610, 4
        %v3157 = vsel %vm2141, %v3155, %v3156
        %v3158 = vrot.slane %v2611, 4
        %v3159 = vsel %vm2141, %v3156, %v3158
        %v3160 = vrot.slane %v2612, 4
        %v3161 = vrot.slane %v2613, 4
        %v3162 = vsel %vm2141, %v3160, %v3161
        %v3163 = vrot.slane %v2614, 4
        %v3164 = vsel %vm2141, %v3161, %v3163
        %v3165 = vrot.slane %v2615, 4
        %v3166 = vrot.slane %v2616, 4
        %v3167 = vsel %vm2141, %v3165, %v3166
        %v3168 = vrot.slane %v2617, 4
        %v3169 = vsel %vm2141, %v3166, %v3168
        %v3170 = vrot.slane %v2618, 4
        %v3171 = vrot.slane %v2619, 4
        %v3172 = vsel %vm2141, %v3170, %v3171
        %v3173 = vrot.slane %v2620, 4
        %v3174 = vsel %vm2141, %v3171, %v3173
        %v3175 = vrot.slane %v2621, 4
        %v3176 = vrot.slane %v2622, 4
        %v3177 = vsel %vm2141, %v3175, %v3176
        %v3178 = vrot.slane %v2623, 4
        %v3179 = vsel %vm2141, %v3176, %v3178
        %v3180 = vrot.slane %v2624, 4
        %v3181 = vrot.slane %v2625, 4
        %v3182 = vsel %vm2141, %v3180, %v3181
        %v3183 = vrot.slane %v2626, 4
        %v3184 = vsel %vm2141, %v3181, %v3183
        %v3185 = vrot.slane %v2627, 4
        %v3186 = vrot.slane %v2628, 4
        %v3187 = vsel %vm2141, %v3185, %v3186
        %v3188 = vrot.slane %v2629, 4
        %v3189 = vsel %vm2141, %v3186, %v3188
        %v3222 = vmax.f32 %v3078, %v3112
        %v3223 = vmax.f32 %v3079, %v3114
        %v3224 = vmax.f32 %v3080, %v3117
        %v3225 = vmax.f32 %v3081, %v3119
        %v3226 = vmax.f32 %v3082, %v3122
        %v3227 = vmax.f32 %v3083, %v3124
        %v3228 = vmax.f32 %v3084, %v3127
        %v3229 = vmax.f32 %v3085, %v3129
        %v3230 = vmax.f32 %v3086, %v3132
        %v3231 = vmax.f32 %v3087, %v3134
        %v3232 = vmax.f32 %v3088, %v3137
        %v3233 = vmax.f32 %v3089, %v3139
        %v3234 = vmax.f32 %v3090, %v3142
        %v3235 = vmax.f32 %v3091, %v3144
        %v3236 = vmax.f32 %v3092, %v3147
        %v3237 = vmax.f32 %v3093, %v3149
        %v3238 = vmax.f32 %v3094, %v3152
        %v3239 = vmax.f32 %v3095, %v3154
        %v3240 = vmax.f32 %v3096, %v3157
        %v3241 = vmax.f32 %v3097, %v3159
        %v3242 = vmax.f32 %v3098, %v3162
        %v3243 = vmax.f32 %v3099, %v3164
        %v3244 = vmax.f32 %v3100, %v3167
        %v3245 = vmax.f32 %v3101, %v3169
        %v3246 = vmax.f32 %v3102, %v3172
        %v3247 = vmax.f32 %v3103, %v3174
        %v3248 = vmax.f32 %v3104, %v3177
        %v3249 = vmax.f32 %v3105, %v3179
        %v3250 = vmax.f32 %v3106, %v3182
        %v3251 = vmax.f32 %v3107, %v3184
        %v3252 = vmax.f32 %v3108, %v3187
        %v3253 = vmax.f32 %v3109, %v3189
        %3254 = vst.msk [vmem:[#allocation2] sm:$0xff] %vm1311, -inf
        %3255 = vst.msk [vmem:[#allocation2 + $0x8] sm:$0xff] %vm1311, -inf
        %3256 = vst.msk [vmem:[#allocation2 + $0x10] sm:$0xf] %vm1314, -inf
        %3257 = vst.msk [vmem:[#allocation2 + $0x18] sm:$0xff] %vm1311, -inf
        %3258 = vst.msk [vmem:[#allocation2 + $0x20] sm:$0xff] %vm1311, -inf
        %3259 = vst.msk [vmem:[#allocation2 + $0x28] sm:$0xf] %vm1314, -inf
        %3260 = vst.msk [vmem:[#allocation2 + $0x30] sm:$0xff] %vm1311, -inf
        %3261 = vst.msk [vmem:[#allocation2 + $0x38] sm:$0xff] %vm1311, -inf
        %3262 = vst.msk [vmem:[#allocation2 + $0x40] sm:$0xf] %vm1314, -inf
        %3263 = vst.msk [vmem:[#allocation2 + $0x48] sm:$0xff] %vm1311, -inf
        %3264 = vst.msk [vmem:[#allocation2 + $0x50] sm:$0xff] %vm1311, -inf
        %3265 = vst.msk [vmem:[#allocation2 + $0x58] sm:$0xf] %vm1314, -inf
        %3266 = vst.msk [vmem:[#allocation2 + $0x60] sm:$0xff] %vm1311, -inf
        %3267 = vst.msk [vmem:[#allocation2 + $0x68] sm:$0xff] %vm1311, -inf
        %3268 = vst.msk [vmem:[#allocation2 + $0x70] sm:$0xf] %vm1314, -inf
        %3269 = vst.msk [vmem:[#allocation2 + $0x78] sm:$0xff] %vm1311, -inf
        %3270 = vst.msk [vmem:[#allocation2 + $0x80] sm:$0xff] %vm1311, -inf
        %3271 = vst.msk [vmem:[#allocation2 + $0x88] sm:$0xf] %vm1314, -inf
        %3272 = vst.msk [vmem:[#allocation2 + $0x90] sm:$0xff] %vm1311, -inf
        %3273 = vst.msk [vmem:[#allocation2 + $0x98] sm:$0xff] %vm1311, -inf
        %3274 = vst.msk [vmem:[#allocation2 + $0xa0] sm:$0xf] %vm1314, -inf
        %3275 = vst.msk [vmem:[#allocation2 + $0xa8] sm:$0xff] %vm1311, -inf
        %3276 = vst.msk [vmem:[#allocation2 + $0xb0] sm:$0xff] %vm1311, -inf
        %3277 = vst.msk [vmem:[#allocation2 + $0xb8] sm:$0xf] %vm1314, -inf
        %3278 = vst.msk [vmem:[#allocation2 + $0xc0] sm:$0xff] %vm1311, -inf
        %3279 = vst.msk [vmem:[#allocation2 + $0xc8] sm:$0xff] %vm1311, -inf
        %3280 = vst.msk [vmem:[#allocation2 + $0xd0] sm:$0xf] %vm1314, -inf
        %3281 = vst.msk [vmem:[#allocation2 + $0xd8] sm:$0xff] %vm1311, -inf
        %3282 = vst.msk [vmem:[#allocation2 + $0xe0] sm:$0xff] %vm1311, -inf
        %3283 = vst.msk [vmem:[#allocation2 + $0xe8] sm:$0xf] %vm1314, -inf
        %3284 = vst.msk [vmem:[#allocation2 + $0xf0] sm:$0xff] %vm1311, -inf
        %3285 = vst.msk [vmem:[#allocation2 + $0xf8] sm:$0xff] %vm1311, -inf
        %3286 = vst.msk [vmem:[#allocation2 + $0x100] sm:$0xf] %vm1314, -inf
        %3287 = vst.msk [vmem:[#allocation2 + $0x108] sm:$0xff] %vm1311, -inf
        %3288 = vst.msk [vmem:[#allocation2 + $0x110] sm:$0xff] %vm1311, -inf
        %3289 = vst.msk [vmem:[#allocation2 + $0x118] sm:$0xf] %vm1314, -inf
        %3290 = vst.msk [vmem:[#allocation2 + $0x120] sm:$0xff] %vm1311, -inf
        %3291 = vst.msk [vmem:[#allocation2 + $0x128] sm:$0xff] %vm1311, -inf
        %3292 = vst.msk [vmem:[#allocation2 + $0x130] sm:$0xf] %vm1314, -inf
        %3293 = vst.msk [vmem:[#allocation2 + $0x138] sm:$0xff] %vm1311, -inf
        %3294 = vst.msk [vmem:[#allocation2 + $0x140] sm:$0xff] %vm1311, -inf
        %3295 = vst.msk [vmem:[#allocation2 + $0x148] sm:$0xf] %vm1314, -inf
        %3296 = vst.msk [vmem:[#allocation2 + $0x150] sm:$0xff] %vm1311, -inf
        %3297 = vst.msk [vmem:[#allocation2 + $0x158] sm:$0xff] %vm1311, -inf
        %3298 = vst.msk [vmem:[#allocation2 + $0x160] sm:$0xf] %vm1314, -inf
        %3299 = vst.msk [vmem:[#allocation2 + $0x168] sm:$0xff] %vm1311, -inf
        %3300 = vst.msk [vmem:[#allocation2 + $0x170] sm:$0xff] %vm1311, -inf
        %3301 = vst.msk [vmem:[#allocation2 + $0x178] sm:$0xf] %vm1314, -inf
        %3302 = vst.msk [vmem:[#allocation2 + $0x180] sm:$0xff] %vm1311, -inf
        %3303 = vst.msk [vmem:[#allocation2 + $0x188] sm:$0xff] %vm1311, -inf
        %3304 = vst.msk [vmem:[#allocation2 + $0x190] sm:$0xf] %vm1314, -inf
        %3305 = vst.msk [vmem:[#allocation2 + $0x198] sm:$0xff] %vm1311, -inf
        %3306 = vst.msk [vmem:[#allocation2 + $0x1a0] sm:$0xff] %vm1311, -inf
        %3307 = vst.msk [vmem:[#allocation2 + $0x1a8] sm:$0xf] %vm1314, -inf
        %3308 = vst.msk [vmem:[#allocation2 + $0x1b0] sm:$0xff] %vm1311, -inf
        %3309 = vst.msk [vmem:[#allocation2 + $0x1b8] sm:$0xff] %vm1311, -inf
        %3310 = vst.msk [vmem:[#allocation2 + $0x1c0] sm:$0xf] %vm1314, -inf
        %3311 = vst.msk [vmem:[#allocation2 + $0x1c8] sm:$0xff] %vm1311, -inf
        %3312 = vst.msk [vmem:[#allocation2 + $0x1d0] sm:$0xff] %vm1311, -inf
        %3313 = vst.msk [vmem:[#allocation2 + $0x1d8] sm:$0xf] %vm1314, -inf
        %3314 = vst.msk [vmem:[%s1373 + $0x2] sm:$0xff] %vm1311, %v3222
        %3315 = vst.msk [vmem:[%s1373 + $0xa] sm:$0xff] %vm1311, %v3223
        %3316 = vst.msk [vmem:[%s1373 + $0x1a] sm:$0xff] %vm1311, %v3224
        %3317 = vst.msk [vmem:[%s1373 + $0x22] sm:$0xff] %vm1311, %v3225
        %3318 = vst.msk [vmem:[%s1373 + $0x32] sm:$0xff] %vm1311, %v3226
        %3319 = vst.msk [vmem:[%s1373 + $0x3a] sm:$0xff] %vm1311, %v3227
        %3320 = vst.msk [vmem:[%s1373 + $0x4a] sm:$0xff] %vm1311, %v3228
        %3321 = vst.msk [vmem:[%s1373 + $0x52] sm:$0xff] %vm1311, %v3229
        %3322 = vst.msk [vmem:[%s1373 + $0x62] sm:$0xff] %vm1311, %v3230
        %3323 = vst.msk [vmem:[%s1373 + $0x6a] sm:$0xff] %vm1311, %v3231
        %3324 = vst.msk [vmem:[%s1373 + $0x7a] sm:$0xff] %vm1311, %v3232
        %3325 = vst.msk [vmem:[%s1373 + $0x82] sm:$0xff] %vm1311, %v3233
        %3326 = vst.msk [vmem:[%s1373 + $0x92] sm:$0xff] %vm1311, %v3234
        %3327 = vst.msk [vmem:[%s1373 + $0x9a] sm:$0xff] %vm1311, %v3235
        %3328 = vst.msk [vmem:[%s1373 + $0xaa] sm:$0xff] %vm1311, %v3236
        %3329 = vst.msk [vmem:[%s1373 + $0xb2] sm:$0xff] %vm1311, %v3237
        %3330 = vst.msk [vmem:[%s1373 + $0xc2] sm:$0xff] %vm1311, %v3238
        %3331 = vst.msk [vmem:[%s1373 + $0xca] sm:$0xff] %vm1311, %v3239
        %3332 = vst.msk [vmem:[%s1373 + $0xda] sm:$0xff] %vm1311, %v3240
        %3333 = vst.msk [vmem:[%s1373 + $0xe2] sm:$0xff] %vm1311, %v3241
        %3334 = vst.msk [vmem:[%s1373 + $0xf2] sm:$0xff] %vm1311, %v3242
        %3335 = vst.msk [vmem:[%s1373 + $0xfa] sm:$0xff] %vm1311, %v3243
        %3336 = vst.msk [vmem:[%s1373 + $0x10a] sm:$0xff] %vm1311, %v3244
        %3337 = vst.msk [vmem:[%s1373 + $0x112] sm:$0xff] %vm1311, %v3245
        %3338 = vst.msk [vmem:[%s1373 + $0x122] sm:$0xff] %vm1311, %v3246
        %3339 = vst.msk [vmem:[%s1373 + $0x12a] sm:$0xff] %vm1311, %v3247
        %3340 = vst.msk [vmem:[%s1373 + $0x13a] sm:$0xff] %vm1311, %v3248
        %3341 = vst.msk [vmem:[%s1373 + $0x142] sm:$0xff] %vm1311, %v3249
        %3342 = vst.msk [vmem:[%s1373 + $0x152] sm:$0xff] %vm1311, %v3250
        %3343 = vst.msk [vmem:[%s1373 + $0x15a] sm:$0xff] %vm1311, %v3251
        %3344 = vst.msk [vmem:[%s1373 + $0x16a] sm:$0xff] %vm1311, %v3252
        %3345 = vst.msk [vmem:[%s1373 + $0x172] sm:$0xff] %vm1311, %v3253
        %v3346 = vld [vmem:[#allocation2] sm:$0xff]
        %v3347 = vld [vmem:[#allocation2 + $0x8] sm:$0xff]
        %v3348 = vld [vmem:[#allocation2 + $0x10] sm:$0xf]
        %v3349 = vld [vmem:[#allocation2 + $0x18] sm:$0xff]
        %v3350 = vld [vmem:[#allocation2 + $0x20] sm:$0xff]
        %v3351 = vld [vmem:[#allocation2 + $0x28] sm:$0xf]
        %v3352 = vld [vmem:[#allocation2 + $0x30] sm:$0xff]
        %v3353 = vld [vmem:[#allocation2 + $0x38] sm:$0xff]
        %v3354 = vld [vmem:[#allocation2 + $0x40] sm:$0xf]
        %v3355 = vld [vmem:[#allocation2 + $0x48] sm:$0xff]
        %v3356 = vld [vmem:[#allocation2 + $0x50] sm:$0xff]
        %v3357 = vld [vmem:[#allocation2 + $0x58] sm:$0xf]
        %v3358 = vld [vmem:[#allocation2 + $0x60] sm:$0xff]
        %v3359 = vld [vmem:[#allocation2 + $0x68] sm:$0xff]
        %v3360 = vld [vmem:[#allocation2 + $0x70] sm:$0xf]
        %v3361 = vld [vmem:[#allocation2 + $0x78] sm:$0xff]
        %v3362 = vld [vmem:[#allocation2 + $0x80] sm:$0xff]
        %v3363 = vld [vmem:[#allocation2 + $0x88] sm:$0xf]
        %v3364 = vld [vmem:[#allocation2 + $0x90] sm:$0xff]
        %v3365 = vld [vmem:[#allocation2 + $0x98] sm:$0xff]
        %v3366 = vld [vmem:[#allocation2 + $0xa0] sm:$0xf]
        %v3367 = vld [vmem:[#allocation2 + $0xa8] sm:$0xff]
        %v3368 = vld [vmem:[#allocation2 + $0xb0] sm:$0xff]
        %v3369 = vld [vmem:[#allocation2 + $0xb8] sm:$0xf]
        %v3370 = vld [vmem:[#allocation2 + $0xc0] sm:$0xff]
        %v3371 = vld [vmem:[#allocation2 + $0xc8] sm:$0xff]
        %v3372 = vld [vmem:[#allocation2 + $0xd0] sm:$0xf]
        %v3373 = vld [vmem:[#allocation2 + $0xd8] sm:$0xff]
        %v3374 = vld [vmem:[#allocation2 + $0xe0] sm:$0xff]
        %v3375 = vld [vmem:[#allocation2 + $0xe8] sm:$0xf]
        %v3376 = vld [vmem:[#allocation2 + $0xf0] sm:$0xff]
        %v3377 = vld [vmem:[#allocation2 + $0xf8] sm:$0xff]
        %v3378 = vld [vmem:[#allocation2 + $0x100] sm:$0xf]
        %v3379 = vld [vmem:[#allocation2 + $0x108] sm:$0xff]
        %v3380 = vld [vmem:[#allocation2 + $0x110] sm:$0xff]
        %v3381 = vld [vmem:[#allocation2 + $0x118] sm:$0xf]
        %v3382 = vld [vmem:[#allocation2 + $0x120] sm:$0xff]
        %v3383 = vld [vmem:[#allocation2 + $0x128] sm:$0xff]
        %v3384 = vld [vmem:[#allocation2 + $0x130] sm:$0xf]
        %v3385 = vld [vmem:[#allocation2 + $0x138] sm:$0xff]
        %v3386 = vld [vmem:[#allocation2 + $0x140] sm:$0xff]
        %v3387 = vld [vmem:[#allocation2 + $0x148] sm:$0xf]
        %v3388 = vld [vmem:[#allocation2 + $0x150] sm:$0xff]
        %v3389 = vld [vmem:[#allocation2 + $0x158] sm:$0xff]
        %v3390 = vld [vmem:[#allocation2 + $0x160] sm:$0xf]
        %v3391 = vld [vmem:[#allocation2 + $0x168] sm:$0xff]
        %v3392 = vld [vmem:[#allocation2 + $0x170] sm:$0xff]
        %v3393 = vld [vmem:[#allocation2 + $0x178] sm:$0xf]
        %v3394 = vld [vmem:[#allocation2 + $0x180] sm:$0xff]
        %v3395 = vld [vmem:[#allocation2 + $0x188] sm:$0xff]
        %v3396 = vld [vmem:[#allocation2 + $0x190] sm:$0xf]
        %v3397 = vld [vmem:[#allocation2 + $0x198] sm:$0xff]
        %v3398 = vld [vmem:[#allocation2 + $0x1a0] sm:$0xff]
        %v3399 = vld [vmem:[#allocation2 + $0x1a8] sm:$0xf]
        %v3400 = vld [vmem:[#allocation2 + $0x1b0] sm:$0xff]
        %v3401 = vld [vmem:[#allocation2 + $0x1b8] sm:$0xff]
        %v3402 = vld [vmem:[#allocation2 + $0x1c0] sm:$0xf]
        %v3403 = vld [vmem:[#allocation2 + $0x1c8] sm:$0xff]
        %v3404 = vld [vmem:[#allocation2 + $0x1d0] sm:$0xff]
        %v3405 = vld [vmem:[#allocation2 + $0x1d8] sm:$0xf]
        %v3406 = vmax.f32 %v3346, %v3349
        %v3407 = vmax.f32 %v3347, %v3350
        %v3408 = vmax.f32 %v3348, %v3351
        %v3409 = vmax.f32 %v3349, %v3352
        %v3410 = vmax.f32 %v3350, %v3353
        %v3411 = vmax.f32 %v3351, %v3354
        %v3412 = vmax.f32 %v3352, %v3355
        %v3413 = vmax.f32 %v3353, %v3356
        %v3414 = vmax.f32 %v3354, %v3357
        %v3415 = vmax.f32 %v3355, %v3358
        %v3416 = vmax.f32 %v3356, %v3359
        %v3417 = vmax.f32 %v3357, %v3360
        %v3418 = vmax.f32 %v3358, %v3361
        %v3419 = vmax.f32 %v3359, %v3362
        %v3420 = vmax.f32 %v3360, %v3363
        %v3421 = vmax.f32 %v3361, %v3364
        %v3422 = vmax.f32 %v3362, %v3365
        %v3423 = vmax.f32 %v3363, %v3366
        %v3424 = vmax.f32 %v3364, %v3367
        %v3425 = vmax.f32 %v3365, %v3368
        %v3426 = vmax.f32 %v3366, %v3369
        %v3427 = vmax.f32 %v3367, %v3370
        %v3428 = vmax.f32 %v3368, %v3371
        %v3429 = vmax.f32 %v3369, %v3372
        %v3430 = vmax.f32 %v3370, %v3373
        %v3431 = vmax.f32 %v3371, %v3374
        %v3432 = vmax.f32 %v3372, %v3375
        %v3433 = vmax.f32 %v3373, %v3376
        %v3434 = vmax.f32 %v3374, %v3377
        %v3435 = vmax.f32 %v3375, %v3378
        %v3436 = vmax.f32 %v3376, %v3379
        %v3437 = vmax.f32 %v3377, %v3380
        %v3438 = vmax.f32 %v3378, %v3381
        %v3439 = vmax.f32 %v3379, %v3382
        %v3440 = vmax.f32 %v3380, %v3383
        %v3441 = vmax.f32 %v3381, %v3384
        %v3442 = vmax.f32 %v3382, %v3385
        %v3443 = vmax.f32 %v3383, %v3386
        %v3444 = vmax.f32 %v3384, %v3387
        %v3445 = vmax.f32 %v3385, %v3388
        %v3446 = vmax.f32 %v3386, %v3389
        %v3447 = vmax.f32 %v3387, %v3390
        %v3448 = vmax.f32 %v3388, %v3391
        %v3449 = vmax.f32 %v3389, %v3392
        %v3450 = vmax.f32 %v3390, %v3393
        %v3451 = vmax.f32 %v3391, %v3394
        %v3452 = vmax.f32 %v3392, %v3395
        %v3453 = vmax.f32 %v3393, %v3396
        %v3454 = vmax.f32 %v3406, %v3352
        %v3455 = vmax.f32 %v3407, %v3353
        %v3456 = vmax.f32 %v3408, %v3354
        %v3457 = vmax.f32 %v3409, %v3355
        %v3458 = vmax.f32 %v3410, %v3356
        %v3459 = vmax.f32 %v3411, %v3357
        %v3460 = vmax.f32 %v3412, %v3358
        %v3461 = vmax.f32 %v3413, %v3359
        %v3462 = vmax.f32 %v3414, %v3360
        %v3463 = vmax.f32 %v3415, %v3361
        %v3464 = vmax.f32 %v3416, %v3362
        %v3465 = vmax.f32 %v3417, %v3363
        %v3466 = vmax.f32 %v3418, %v3364
        %v3467 = vmax.f32 %v3419, %v3365
        %v3468 = vmax.f32 %v3420, %v3366
        %v3469 = vmax.f32 %v3421, %v3367
        %v3470 = vmax.f32 %v3422, %v3368
        %v3471 = vmax.f32 %v3423, %v3369
        %v3472 = vmax.f32 %v3424, %v3370
        %v3473 = vmax.f32 %v3425, %v3371
        %v3474 = vmax.f32 %v3426, %v3372
        %v3475 = vmax.f32 %v3427, %v3373
        %v3476 = vmax.f32 %v3428, %v3374
        %v3477 = vmax.f32 %v3429, %v3375
        %v3478 = vmax.f32 %v3430, %v3376
        %v3479 = vmax.f32 %v3431, %v3377
        %v3480 = vmax.f32 %v3432, %v3378
        %v3481 = vmax.f32 %v3433, %v3379
        %v3482 = vmax.f32 %v3434, %v3380
        %v3483 = vmax.f32 %v3435, %v3381
        %v3484 = vmax.f32 %v3436, %v3382
        %v3485 = vmax.f32 %v3437, %v3383
        %v3486 = vmax.f32 %v3438, %v3384
        %v3487 = vmax.f32 %v3439, %v3385
        %v3488 = vmax.f32 %v3440, %v3386
        %v3489 = vmax.f32 %v3441, %v3387
        %v3490 = vmax.f32 %v3442, %v3388
        %v3491 = vmax.f32 %v3443, %v3389
        %v3492 = vmax.f32 %v3444, %v3390
        %v3493 = vmax.f32 %v3445, %v3391
        %v3494 = vmax.f32 %v3446, %v3392
        %v3495 = vmax.f32 %v3447, %v3393
        %v3496 = vmax.f32 %v3448, %v3394
        %v3497 = vmax.f32 %v3449, %v3395
        %v3498 = vmax.f32 %v3450, %v3396
        %v3499 = vmax.f32 %v3451, %v3397
        %v3500 = vmax.f32 %v3452, %v3398
        %v3501 = vmax.f32 %v3453, %v3399
        %v3502 = vmax.f32 %v3454, %v3355
        %v3503 = vmax.f32 %v3455, %v3356
        %v3504 = vmax.f32 %v3456, %v3357
        %v3505 = vmax.f32 %v3457, %v3358
        %v3506 = vmax.f32 %v3458, %v3359
        %v3507 = vmax.f32 %v3459, %v3360
        %v3508 = vmax.f32 %v3460, %v3361
        %v3509 = vmax.f32 %v3461, %v3362
        %v3510 = vmax.f32 %v3462, %v3363
        %v3511 = vmax.f32 %v3463, %v3364
        %v3512 = vmax.f32 %v3464, %v3365
        %v3513 = vmax.f32 %v3465, %v3366
        %v3514 = vmax.f32 %v3466, %v3367
        %v3515 = vmax.f32 %v3467, %v3368
        %v3516 = vmax.f32 %v3468, %v3369
        %v3517 = vmax.f32 %v3469, %v3370
        %v3518 = vmax.f32 %v3470, %v3371
        %v3519 = vmax.f32 %v3471, %v3372
        %v3520 = vmax.f32 %v3472, %v3373
        %v3521 = vmax.f32 %v3473, %v3374
        %v3522 = vmax.f32 %v3474, %v3375
        %v3523 = vmax.f32 %v3475, %v3376
        %v3524 = vmax.f32 %v3476, %v3377
        %v3525 = vmax.f32 %v3477, %v3378
        %v3526 = vmax.f32 %v3478, %v3379
        %v3527 = vmax.f32 %v3479, %v3380
        %v3528 = vmax.f32 %v3480, %v3381
        %v3529 = vmax.f32 %v3481, %v3382
        %v3530 = vmax.f32 %v3482, %v3383
        %v3531 = vmax.f32 %v3483, %v3384
        %v3532 = vmax.f32 %v3484, %v3385
        %v3533 = vmax.f32 %v3485, %v3386
        %v3534 = vmax.f32 %v3486, %v3387
        %v3535 = vmax.f32 %v3487, %v3388
        %v3536 = vmax.f32 %v3488, %v3389
        %v3537 = vmax.f32 %v3489, %v3390
        %v3538 = vmax.f32 %v3490, %v3391
        %v3539 = vmax.f32 %v3491, %v3392
        %v3540 = vmax.f32 %v3492, %v3393
        %v3541 = vmax.f32 %v3493, %v3394
        %v3542 = vmax.f32 %v3494, %v3395
        %v3543 = vmax.f32 %v3495, %v3396
        %v3544 = vmax.f32 %v3496, %v3397
        %v3545 = vmax.f32 %v3497, %v3398
        %v3546 = vmax.f32 %v3498, %v3399
        %v3547 = vmax.f32 %v3499, %v3400
        %v3548 = vmax.f32 %v3500, %v3401
        %v3549 = vmax.f32 %v3501, %v3402
        %v3550 = vmax.f32 %v3502, %v3358
        %v3551 = vmax.f32 %v3503, %v3359
        %v3552 = vmax.f32 %v3504, %v3360
        %v3553 = vmax.f32 %v3505, %v3361
        %v3554 = vmax.f32 %v3506, %v3362
        %v3555 = vmax.f32 %v3507, %v3363
        %v3556 = vmax.f32 %v3508, %v3364
        %v3557 = vmax.f32 %v3509, %v3365
        %v3558 = vmax.f32 %v3510, %v3366
        %v3559 = vmax.f32 %v3511, %v3367
        %v3560 = vmax.f32 %v3512, %v3368
        %v3561 = vmax.f32 %v3513, %v3369
        %v3562 = vmax.f32 %v3514, %v3370
        %v3563 = vmax.f32 %v3515, %v3371
        %v3564 = vmax.f32 %v3516, %v3372
        %v3565 = vmax.f32 %v3517, %v3373
        %v3566 = vmax.f32 %v3518, %v3374
        %v3567 = vmax.f32 %v3519, %v3375
        %v3568 = vmax.f32 %v3520, %v3376
        %v3569 = vmax.f32 %v3521, %v3377
        %v3570 = vmax.f32 %v3522, %v3378
        %v3571 = vmax.f32 %v3523, %v3379
        %v3572 = vmax.f32 %v3524, %v3380
        %v3573 = vmax.f32 %v3525, %v3381
        %v3574 = vmax.f32 %v3526, %v3382
        %v3575 = vmax.f32 %v3527, %v3383
        %v3576 = vmax.f32 %v3528, %v3384
        %v3577 = vmax.f32 %v3529, %v3385
        %v3578 = vmax.f32 %v3530, %v3386
        %v3579 = vmax.f32 %v3531, %v3387
        %v3580 = vmax.f32 %v3532, %v3388
        %v3581 = vmax.f32 %v3533, %v3389
        %v3582 = vmax.f32 %v3534, %v3390
        %v3583 = vmax.f32 %v3535, %v3391
        %v3584 = vmax.f32 %v3536, %v3392
        %v3585 = vmax.f32 %v3537, %v3393
        %v3586 = vmax.f32 %v3538, %v3394
        %v3587 = vmax.f32 %v3539, %v3395
        %v3588 = vmax.f32 %v3540, %v3396
        %v3589 = vmax.f32 %v3541, %v3397
        %v3590 = vmax.f32 %v3542, %v3398
        %v3591 = vmax.f32 %v3543, %v3399
        %v3592 = vmax.f32 %v3544, %v3400
        %v3593 = vmax.f32 %v3545, %v3401
        %v3594 = vmax.f32 %v3546, %v3402
        %v3595 = vmax.f32 %v3547, %v3403
        %v3596 = vmax.f32 %v3548, %v3404
        %v3597 = vmax.f32 %v3549, %v3405
        %v3646 = vrot.slane %v3550, 1
        %v3647 = vrot.slane %v3551, 1
        %v3648 = vsel %vm1706, %v3646, %v3647
        %v3649 = vrot.slane %v3552, 1
        %v3650 = vsel %vm1706, %v3647, %v3649
        %v3651 = vrot.slane %v3553, 1
        %v3652 = vrot.slane %v3554, 1
        %v3653 = vsel %vm1706, %v3651, %v3652
        %v3654 = vrot.slane %v3555, 1
        %v3655 = vsel %vm1706, %v3652, %v3654
        %v3656 = vrot.slane %v3556, 1
        %v3657 = vrot.slane %v3557, 1
        %v3658 = vsel %vm1706, %v3656, %v3657
        %v3659 = vrot.slane %v3558, 1
        %v3660 = vsel %vm1706, %v3657, %v3659
        %v3661 = vrot.slane %v3559, 1
        %v3662 = vrot.slane %v3560, 1
        %v3663 = vsel %vm1706, %v3661, %v3662
        %v3664 = vrot.slane %v3561, 1
        %v3665 = vsel %vm1706, %v3662, %v3664
        %v3666 = vrot.slane %v3562, 1
        %v3667 = vrot.slane %v3563, 1
        %v3668 = vsel %vm1706, %v3666, %v3667
        %v3669 = vrot.slane %v3564, 1
        %v3670 = vsel %vm1706, %v3667, %v3669
        %v3671 = vrot.slane %v3565, 1
        %v3672 = vrot.slane %v3566, 1
        %v3673 = vsel %vm1706, %v3671, %v3672
        %v3674 = vrot.slane %v3567, 1
        %v3675 = vsel %vm1706, %v3672, %v3674
        %v3676 = vrot.slane %v3568, 1
        %v3677 = vrot.slane %v3569, 1
        %v3678 = vsel %vm1706, %v3676, %v3677
        %v3679 = vrot.slane %v3570, 1
        %v3680 = vsel %vm1706, %v3677, %v3679
        %v3681 = vrot.slane %v3571, 1
        %v3682 = vrot.slane %v3572, 1
        %v3683 = vsel %vm1706, %v3681, %v3682
        %v3684 = vrot.slane %v3573, 1
        %v3685 = vsel %vm1706, %v3682, %v3684
        %v3686 = vrot.slane %v3574, 1
        %v3687 = vrot.slane %v3575, 1
        %v3688 = vsel %vm1706, %v3686, %v3687
        %v3689 = vrot.slane %v3576, 1
        %v3690 = vsel %vm1706, %v3687, %v3689
        %v3691 = vrot.slane %v3577, 1
        %v3692 = vrot.slane %v3578, 1
        %v3693 = vsel %vm1706, %v3691, %v3692
        %v3694 = vrot.slane %v3579, 1
        %v3695 = vsel %vm1706, %v3692, %v3694
        %v3696 = vrot.slane %v3580, 1
        %v3697 = vrot.slane %v3581, 1
        %v3698 = vsel %vm1706, %v3696, %v3697
        %v3699 = vrot.slane %v3582, 1
        %v3700 = vsel %vm1706, %v3697, %v3699
        %v3701 = vrot.slane %v3583, 1
        %v3702 = vrot.slane %v3584, 1
        %v3703 = vsel %vm1706, %v3701, %v3702
        %v3704 = vrot.slane %v3585, 1
        %v3705 = vsel %vm1706, %v3702, %v3704
        %v3706 = vrot.slane %v3586, 1
        %v3707 = vrot.slane %v3587, 1
        %v3708 = vsel %vm1706, %v3706, %v3707
        %v3709 = vrot.slane %v3588, 1
        %v3710 = vsel %vm1706, %v3707, %v3709
        %v3711 = vrot.slane %v3589, 1
        %v3712 = vrot.slane %v3590, 1
        %v3713 = vsel %vm1706, %v3711, %v3712
        %v3714 = vrot.slane %v3591, 1
        %v3715 = vsel %vm1706, %v3712, %v3714
        %v3716 = vrot.slane %v3592, 1
        %v3717 = vrot.slane %v3593, 1
        %v3718 = vsel %vm1706, %v3716, %v3717
        %v3719 = vrot.slane %v3594, 1
        %v3720 = vsel %vm1706, %v3717, %v3719
        %v3721 = vrot.slane %v3595, 1
        %v3722 = vrot.slane %v3596, 1
        %v3723 = vsel %vm1706, %v3721, %v3722
        %v3724 = vrot.slane %v3597, 1
        %v3725 = vsel %vm1706, %v3722, %v3724
        %v3758 = vmax.f32 %v3550, %v3648
        %v3759 = vmax.f32 %v3551, %v3650
        %v3760 = vmax.f32 %v3553, %v3653
        %v3761 = vmax.f32 %v3554, %v3655
        %v3762 = vmax.f32 %v3556, %v3658
        %v3763 = vmax.f32 %v3557, %v3660
        %v3764 = vmax.f32 %v3559, %v3663
        %v3765 = vmax.f32 %v3560, %v3665
        %v3766 = vmax.f32 %v3562, %v3668
        %v3767 = vmax.f32 %v3563, %v3670
        %v3768 = vmax.f32 %v3565, %v3673
        %v3769 = vmax.f32 %v3566, %v3675
        %v3770 = vmax.f32 %v3568, %v3678
        %v3771 = vmax.f32 %v3569, %v3680
        %v3772 = vmax.f32 %v3571, %v3683
        %v3773 = vmax.f32 %v3572, %v3685
        %v3774 = vmax.f32 %v3574, %v3688
        %v3775 = vmax.f32 %v3575, %v3690
        %v3776 = vmax.f32 %v3577, %v3693
        %v3777 = vmax.f32 %v3578, %v3695
        %v3778 = vmax.f32 %v3580, %v3698
        %v3779 = vmax.f32 %v3581, %v3700
        %v3780 = vmax.f32 %v3583, %v3703
        %v3781 = vmax.f32 %v3584, %v3705
        %v3782 = vmax.f32 %v3586, %v3708
        %v3783 = vmax.f32 %v3587, %v3710
        %v3784 = vmax.f32 %v3589, %v3713
        %v3785 = vmax.f32 %v3590, %v3715
        %v3786 = vmax.f32 %v3592, %v3718
        %v3787 = vmax.f32 %v3593, %v3720
        %v3788 = vmax.f32 %v3595, %v3723
        %v3789 = vmax.f32 %v3596, %v3725
        %v3790 = vrot.slane %v3550, 2
        %v3791 = vrot.slane %v3551, 2
        %v3792 = vsel %vm1851, %v3790, %v3791
        %v3793 = vrot.slane %v3552, 2
        %v3794 = vsel %vm1851, %v3791, %v3793
        %v3795 = vrot.slane %v3553, 2
        %v3796 = vrot.slane %v3554, 2
        %v3797 = vsel %vm1851, %v3795, %v3796
        %v3798 = vrot.slane %v3555, 2
        %v3799 = vsel %vm1851, %v3796, %v3798
        %v3800 = vrot.slane %v3556, 2
        %v3801 = vrot.slane %v3557, 2
        %v3802 = vsel %vm1851, %v3800, %v3801
        %v3803 = vrot.slane %v3558, 2
        %v3804 = vsel %vm1851, %v3801, %v3803
        %v3805 = vrot.slane %v3559, 2
        %v3806 = vrot.slane %v3560, 2
        %v3807 = vsel %vm1851, %v3805, %v3806
        %v3808 = vrot.slane %v3561, 2
        %v3809 = vsel %vm1851, %v3806, %v3808
        %v3810 = vrot.slane %v3562, 2
        %v3811 = vrot.slane %v3563, 2
        %v3812 = vsel %vm1851, %v3810, %v3811
        %v3813 = vrot.slane %v3564, 2
        %v3814 = vsel %vm1851, %v3811, %v3813
        %v3815 = vrot.slane %v3565, 2
        %v3816 = vrot.slane %v3566, 2
        %v3817 = vsel %vm1851, %v3815, %v3816
        %v3818 = vrot.slane %v3567, 2
        %v3819 = vsel %vm1851, %v3816, %v3818
        %v3820 = vrot.slane %v3568, 2
        %v3821 = vrot.slane %v3569, 2
        %v3822 = vsel %vm1851, %v3820, %v3821
        %v3823 = vrot.slane %v3570, 2
        %v3824 = vsel %vm1851, %v3821, %v3823
        %v3825 = vrot.slane %v3571, 2
        %v3826 = vrot.slane %v3572, 2
        %v3827 = vsel %vm1851, %v3825, %v3826
        %v3828 = vrot.slane %v3573, 2
        %v3829 = vsel %vm1851, %v3826, %v3828
        %v3830 = vrot.slane %v3574, 2
        %v3831 = vrot.slane %v3575, 2
        %v3832 = vsel %vm1851, %v3830, %v3831
        %v3833 = vrot.slane %v3576, 2
        %v3834 = vsel %vm1851, %v3831, %v3833
        %v3835 = vrot.slane %v3577, 2
        %v3836 = vrot.slane %v3578, 2
        %v3837 = vsel %vm1851, %v3835, %v3836
        %v3838 = vrot.slane %v3579, 2
        %v3839 = vsel %vm1851, %v3836, %v3838
        %v3840 = vrot.slane %v3580, 2
        %v3841 = vrot.slane %v3581, 2
        %v3842 = vsel %vm1851, %v3840, %v3841
        %v3843 = vrot.slane %v3582, 2
        %v3844 = vsel %vm1851, %v3841, %v3843
        %v3845 = vrot.slane %v3583, 2
        %v3846 = vrot.slane %v3584, 2
        %v3847 = vsel %vm1851, %v3845, %v3846
        %v3848 = vrot.slane %v3585, 2
        %v3849 = vsel %vm1851, %v3846, %v3848
        %v3850 = vrot.slane %v3586, 2
        %v3851 = vrot.slane %v3587, 2
        %v3852 = vsel %vm1851, %v3850, %v3851
        %v3853 = vrot.slane %v3588, 2
        %v3854 = vsel %vm1851, %v3851, %v3853
        %v3855 = vrot.slane %v3589, 2
        %v3856 = vrot.slane %v3590, 2
        %v3857 = vsel %vm1851, %v3855, %v3856
        %v3858 = vrot.slane %v3591, 2
        %v3859 = vsel %vm1851, %v3856, %v3858
        %v3860 = vrot.slane %v3592, 2
        %v3861 = vrot.slane %v3593, 2
        %v3862 = vsel %vm1851, %v3860, %v3861
        %v3863 = vrot.slane %v3594, 2
        %v3864 = vsel %vm1851, %v3861, %v3863
        %v3865 = vrot.slane %v3595, 2
        %v3866 = vrot.slane %v3596, 2
        %v3867 = vsel %vm1851, %v3865, %v3866
        %v3868 = vrot.slane %v3597, 2
        %v3869 = vsel %vm1851, %v3866, %v3868
        %v3902 = vmax.f32 %v3758, %v3792
        %v3903 = vmax.f32 %v3759, %v3794
        %v3904 = vmax.f32 %v3760, %v3797
        %v3905 = vmax.f32 %v3761, %v3799
        %v3906 = vmax.f32 %v3762, %v3802
        %v3907 = vmax.f32 %v3763, %v3804
        %v3908 = vmax.f32 %v3764, %v3807
        %v3909 = vmax.f32 %v3765, %v3809
        %v3910 = vmax.f32 %v3766, %v3812
        %v3911 = vmax.f32 %v3767, %v3814
        %v3912 = vmax.f32 %v3768, %v3817
        %v3913 = vmax.f32 %v3769, %v3819
        %v3914 = vmax.f32 %v3770, %v3822
        %v3915 = vmax.f32 %v3771, %v3824
        %v3916 = vmax.f32 %v3772, %v3827
        %v3917 = vmax.f32 %v3773, %v3829
        %v3918 = vmax.f32 %v3774, %v3832
        %v3919 = vmax.f32 %v3775, %v3834
        %v3920 = vmax.f32 %v3776, %v3837
        %v3921 = vmax.f32 %v3777, %v3839
        %v3922 = vmax.f32 %v3778, %v3842
        %v3923 = vmax.f32 %v3779, %v3844
        %v3924 = vmax.f32 %v3780, %v3847
        %v3925 = vmax.f32 %v3781, %v3849
        %v3926 = vmax.f32 %v3782, %v3852
        %v3927 = vmax.f32 %v3783, %v3854
        %v3928 = vmax.f32 %v3784, %v3857
        %v3929 = vmax.f32 %v3785, %v3859
        %v3930 = vmax.f32 %v3786, %v3862
        %v3931 = vmax.f32 %v3787, %v3864
        %v3932 = vmax.f32 %v3788, %v3867
        %v3933 = vmax.f32 %v3789, %v3869
        %v3934 = vrot.slane %v3550, 3
        %v3935 = vrot.slane %v3551, 3
        %v3936 = vsel %vm1996, %v3934, %v3935
        %v3937 = vrot.slane %v3552, 3
        %v3938 = vsel %vm1996, %v3935, %v3937
        %v3939 = vrot.slane %v3553, 3
        %v3940 = vrot.slane %v3554, 3
        %v3941 = vsel %vm1996, %v3939, %v3940
        %v3942 = vrot.slane %v3555, 3
        %v3943 = vsel %vm1996, %v3940, %v3942
        %v3944 = vrot.slane %v3556, 3
        %v3945 = vrot.slane %v3557, 3
        %v3946 = vsel %vm1996, %v3944, %v3945
        %v3947 = vrot.slane %v3558, 3
        %v3948 = vsel %vm1996, %v3945, %v3947
        %v3949 = vrot.slane %v3559, 3
        %v3950 = vrot.slane %v3560, 3
        %v3951 = vsel %vm1996, %v3949, %v3950
        %v3952 = vrot.slane %v3561, 3
        %v3953 = vsel %vm1996, %v3950, %v3952
        %v3954 = vrot.slane %v3562, 3
        %v3955 = vrot.slane %v3563, 3
        %v3956 = vsel %vm1996, %v3954, %v3955
        %v3957 = vrot.slane %v3564, 3
        %v3958 = vsel %vm1996, %v3955, %v3957
        %v3959 = vrot.slane %v3565, 3
        %v3960 = vrot.slane %v3566, 3
        %v3961 = vsel %vm1996, %v3959, %v3960
        %v3962 = vrot.slane %v3567, 3
        %v3963 = vsel %vm1996, %v3960, %v3962
        %v3964 = vrot.slane %v3568, 3
        %v3965 = vrot.slane %v3569, 3
        %v3966 = vsel %vm1996, %v3964, %v3965
        %v3967 = vrot.slane %v3570, 3
        %v3968 = vsel %vm1996, %v3965, %v3967
        %v3969 = vrot.slane %v3571, 3
        %v3970 = vrot.slane %v3572, 3
        %v3971 = vsel %vm1996, %v3969, %v3970
        %v3972 = vrot.slane %v3573, 3
        %v3973 = vsel %vm1996, %v3970, %v3972
        %v3974 = vrot.slane %v3574, 3
        %v3975 = vrot.slane %v3575, 3
        %v3976 = vsel %vm1996, %v3974, %v3975
        %v3977 = vrot.slane %v3576, 3
        %v3978 = vsel %vm1996, %v3975, %v3977
        %v3979 = vrot.slane %v3577, 3
        %v3980 = vrot.slane %v3578, 3
        %v3981 = vsel %vm1996, %v3979, %v3980
        %v3982 = vrot.slane %v3579, 3
        %v3983 = vsel %vm1996, %v3980, %v3982
        %v3984 = vrot.slane %v3580, 3
        %v3985 = vrot.slane %v3581, 3
        %v3986 = vsel %vm1996, %v3984, %v3985
        %v3987 = vrot.slane %v3582, 3
        %v3988 = vsel %vm1996, %v3985, %v3987
        %v3989 = vrot.slane %v3583, 3
        %v3990 = vrot.slane %v3584, 3
        %v3991 = vsel %vm1996, %v3989, %v3990
        %v3992 = vrot.slane %v3585, 3
        %v3993 = vsel %vm1996, %v3990, %v3992
        %v3994 = vrot.slane %v3586, 3
        %v3995 = vrot.slane %v3587, 3
        %v3996 = vsel %vm1996, %v3994, %v3995
        %v3997 = vrot.slane %v3588, 3
        %v3998 = vsel %vm1996, %v3995, %v3997
        %v3999 = vrot.slane %v3589, 3
        %v4000 = vrot.slane %v3590, 3
        %v4001 = vsel %vm1996, %v3999, %v4000
        %v4002 = vrot.slane %v3591, 3
        %v4003 = vsel %vm1996, %v4000, %v4002
        %v4004 = vrot.slane %v3592, 3
        %v4005 = vrot.slane %v3593, 3
        %v4006 = vsel %vm1996, %v4004, %v4005
        %v4007 = vrot.slane %v3594, 3
        %v4008 = vsel %vm1996, %v4005, %v4007
        %v4009 = vrot.slane %v3595, 3
        %v4010 = vrot.slane %v3596, 3
        %v4011 = vsel %vm1996, %v4009, %v4010
        %v4012 = vrot.slane %v3597, 3
        %v4013 = vsel %vm1996, %v4010, %v4012
        %v4046 = vmax.f32 %v3902, %v3936
        %v4047 = vmax.f32 %v3903, %v3938
        %v4048 = vmax.f32 %v3904, %v3941
        %v4049 = vmax.f32 %v3905, %v3943
        %v4050 = vmax.f32 %v3906, %v3946
        %v4051 = vmax.f32 %v3907, %v3948
        %v4052 = vmax.f32 %v3908, %v3951
        %v4053 = vmax.f32 %v3909, %v3953
        %v4054 = vmax.f32 %v3910, %v3956
        %v4055 = vmax.f32 %v3911, %v3958
        %v4056 = vmax.f32 %v3912, %v3961
        %v4057 = vmax.f32 %v3913, %v3963
        %v4058 = vmax.f32 %v3914, %v3966
        %v4059 = vmax.f32 %v3915, %v3968
        %v4060 = vmax.f32 %v3916, %v3971
        %v4061 = vmax.f32 %v3917, %v3973
        %v4062 = vmax.f32 %v3918, %v3976
        %v4063 = vmax.f32 %v3919, %v3978
        %v4064 = vmax.f32 %v3920, %v3981
        %v4065 = vmax.f32 %v3921, %v3983
        %v4066 = vmax.f32 %v3922, %v3986
        %v4067 = vmax.f32 %v3923, %v3988
        %v4068 = vmax.f32 %v3924, %v3991
        %v4069 = vmax.f32 %v3925, %v3993
        %v4070 = vmax.f32 %v3926, %v3996
        %v4071 = vmax.f32 %v3927, %v3998
        %v4072 = vmax.f32 %v3928, %v4001
        %v4073 = vmax.f32 %v3929, %v4003
        %v4074 = vmax.f32 %v3930, %v4006
        %v4075 = vmax.f32 %v3931, %v4008
        %v4076 = vmax.f32 %v3932, %v4011
        %v4077 = vmax.f32 %v3933, %v4013
        %v4078 = vrot.slane %v3550, 4
        %v4079 = vrot.slane %v3551, 4
        %v4080 = vsel %vm2141, %v4078, %v4079
        %v4081 = vrot.slane %v3552, 4
        %v4082 = vsel %vm2141, %v4079, %v4081
        %v4083 = vrot.slane %v3553, 4
        %v4084 = vrot.slane %v3554, 4
        %v4085 = vsel %vm2141, %v4083, %v4084
        %v4086 = vrot.slane %v3555, 4
        %v4087 = vsel %vm2141, %v4084, %v4086
        %v4088 = vrot.slane %v3556, 4
        %v4089 = vrot.slane %v3557, 4
        %v4090 = vsel %vm2141, %v4088, %v4089
        %v4091 = vrot.slane %v3558, 4
        %v4092 = vsel %vm2141, %v4089, %v4091
        %v4093 = vrot.slane %v3559, 4
        %v4094 = vrot.slane %v3560, 4
        %v4095 = vsel %vm2141, %v4093, %v4094
        %v4096 = vrot.slane %v3561, 4
        %v4097 = vsel %vm2141, %v4094, %v4096
        %v4098 = vrot.slane %v3562, 4
        %v4099 = vrot.slane %v3563, 4
        %v4100 = vsel %vm2141, %v4098, %v4099
        %v4101 = vrot.slane %v3564, 4
        %v4102 = vsel %vm2141, %v4099, %v4101
        %v4103 = vrot.slane %v3565, 4
        %v4104 = vrot.slane %v3566, 4
        %v4105 = vsel %vm2141, %v4103, %v4104
        %v4106 = vrot.slane %v3567, 4
        %v4107 = vsel %vm2141, %v4104, %v4106
        %v4108 = vrot.slane %v3568, 4
        %v4109 = vrot.slane %v3569, 4
        %v4110 = vsel %vm2141, %v4108, %v4109
        %v4111 = vrot.slane %v3570, 4
        %v4112 = vsel %vm2141, %v4109, %v4111
        %v4113 = vrot.slane %v3571, 4
        %v4114 = vrot.slane %v3572, 4
        %v4115 = vsel %vm2141, %v4113, %v4114
        %v4116 = vrot.slane %v3573, 4
        %v4117 = vsel %vm2141, %v4114, %v4116
        %v4118 = vrot.slane %v3574, 4
        %v4119 = vrot.slane %v3575, 4
        %v4120 = vsel %vm2141, %v4118, %v4119
        %v4121 = vrot.slane %v3576, 4
        %v4122 = vsel %vm2141, %v4119, %v4121
        %v4123 = vrot.slane %v3577, 4
        %v4124 = vrot.slane %v3578, 4
        %v4125 = vsel %vm2141, %v4123, %v4124
        %v4126 = vrot.slane %v3579, 4
        %v4127 = vsel %vm2141, %v4124, %v4126
        %v4128 = vrot.slane %v3580, 4
        %v4129 = vrot.slane %v3581, 4
        %v4130 = vsel %vm2141, %v4128, %v4129
        %v4131 = vrot.slane %v3582, 4
        %v4132 = vsel %vm2141, %v4129, %v4131
        %v4133 = vrot.slane %v3583, 4
        %v4134 = vrot.slane %v3584, 4
        %v4135 = vsel %vm2141, %v4133, %v4134
        %v4136 = vrot.slane %v3585, 4
        %v4137 = vsel %vm2141, %v4134, %v4136
        %v4138 = vrot.slane %v3586, 4
        %v4139 = vrot.slane %v3587, 4
        %v4140 = vsel %vm2141, %v4138, %v4139
        %v4141 = vrot.slane %v3588, 4
        %v4142 = vsel %vm2141, %v4139, %v4141
        %v4143 = vrot.slane %v3589, 4
        %v4144 = vrot.slane %v3590, 4
        %v4145 = vsel %vm2141, %v4143, %v4144
        %v4146 = vrot.slane %v3591, 4
        %v4147 = vsel %vm2141, %v4144, %v4146
        %v4148 = vrot.slane %v3592, 4
        %v4149 = vrot.slane %v3593, 4
        %v4150 = vsel %vm2141, %v4148, %v4149
        %v4151 = vrot.slane %v3594, 4
        %v4152 = vsel %vm2141, %v4149, %v4151
        %v4153 = vrot.slane %v3595, 4
        %v4154 = vrot.slane %v3596, 4
        %v4155 = vsel %vm2141, %v4153, %v4154
        %v4156 = vrot.slane %v3597, 4
        %v4157 = vsel %vm2141, %v4154, %v4156
        %v4190 = vmax.f32 %v4046, %v4080
        %v4191 = vmax.f32 %v4047, %v4082
        %v4192 = vmax.f32 %v4048, %v4085
        %v4193 = vmax.f32 %v4049, %v4087
        %v4194 = vmax.f32 %v4050, %v4090
        %v4195 = vmax.f32 %v4051, %v4092
        %v4196 = vmax.f32 %v4052, %v4095
        %v4197 = vmax.f32 %v4053, %v4097
        %v4198 = vmax.f32 %v4054, %v4100
        %v4199 = vmax.f32 %v4055, %v4102
        %v4200 = vmax.f32 %v4056, %v4105
        %v4201 = vmax.f32 %v4057, %v4107
        %v4202 = vmax.f32 %v4058, %v4110
        %v4203 = vmax.f32 %v4059, %v4112
        %v4204 = vmax.f32 %v4060, %v4115
        %v4205 = vmax.f32 %v4061, %v4117
        %v4206 = vmax.f32 %v4062, %v4120
        %v4207 = vmax.f32 %v4063, %v4122
        %v4208 = vmax.f32 %v4064, %v4125
        %v4209 = vmax.f32 %v4065, %v4127
        %v4210 = vmax.f32 %v4066, %v4130
        %v4211 = vmax.f32 %v4067, %v4132
        %v4212 = vmax.f32 %v4068, %v4135
        %v4213 = vmax.f32 %v4069, %v4137
        %v4214 = vmax.f32 %v4070, %v4140
        %v4215 = vmax.f32 %v4071, %v4142
        %v4216 = vmax.f32 %v4072, %v4145
        %v4217 = vmax.f32 %v4073, %v4147
        %v4218 = vmax.f32 %v4074, %v4150
        %v4219 = vmax.f32 %v4075, %v4152
        %v4220 = vmax.f32 %v4076, %v4155
        %v4221 = vmax.f32 %v4077, %v4157
        %4254 = vrot.lane.b32.xlu0 %v2254, 32
        %v4255 = vpop.permute.xlu0 %4254
        %4256 = vrot.lane.b32.xlu0 %v2255, 32
        %v4257 = vpop.permute.xlu0 %4256
        %4258 = vrot.lane.b32.xlu0 %v2256, 32
        %v4259 = vpop.permute.xlu0 %4258
        %4260 = vrot.lane.b32.xlu0 %v2257, 32
        %v4261 = vpop.permute.xlu0 %4260
        %4262 = vrot.lane.b32.xlu0 %v2258, 32
        %v4263 = vpop.permute.xlu0 %4262
        %4264 = vrot.lane.b32.xlu0 %v2259, 32
        %v4265 = vpop.permute.xlu0 %4264
        %4266 = vrot.lane.b32.xlu0 %v2260, 32
        %v4267 = vpop.permute.xlu0 %4266
        %4268 = vrot.lane.b32.xlu0 %v2261, 32
        %v4269 = vpop.permute.xlu0 %4268
        %4270 = vrot.lane.b32.xlu0 %v2262, 32
        %v4271 = vpop.permute.xlu0 %4270
        %4272 = vrot.lane.b32.xlu0 %v2263, 32
        %v4273 = vpop.permute.xlu0 %4272
        %4274 = vrot.lane.b32.xlu0 %v2264, 32
        %v4275 = vpop.permute.xlu0 %4274
        %4276 = vrot.lane.b32.xlu0 %v2265, 32
        %v4277 = vpop.permute.xlu0 %4276
        %4278 = vrot.lane.b32.xlu0 %v2266, 32
        %v4279 = vpop.permute.xlu0 %4278
        %4280 = vrot.lane.b32.xlu0 %v2267, 32
        %v4281 = vpop.permute.xlu0 %4280
        %4282 = vrot.lane.b32.xlu0 %v2268, 32
        %v4283 = vpop.permute.xlu0 %4282
        %4284 = vrot.lane.b32.xlu0 %v2269, 32
        %v4285 = vpop.permute.xlu0 %4284
        %4286 = vrot.lane.b32.xlu0 %v2270, 32
        %v4287 = vpop.permute.xlu0 %4286
        %4288 = vrot.lane.b32.xlu0 %v2271, 32
        %v4289 = vpop.permute.xlu0 %4288
        %4290 = vrot.lane.b32.xlu0 %v2272, 32
        %v4291 = vpop.permute.xlu0 %4290
        %4292 = vrot.lane.b32.xlu0 %v2273, 32
        %v4293 = vpop.permute.xlu0 %4292
        %4294 = vrot.lane.b32.xlu0 %v2274, 32
        %v4295 = vpop.permute.xlu0 %4294
        %4296 = vrot.lane.b32.xlu0 %v2275, 32
        %v4297 = vpop.permute.xlu0 %4296
        %4298 = vrot.lane.b32.xlu0 %v2276, 32
        %v4299 = vpop.permute.xlu0 %4298
        %4300 = vrot.lane.b32.xlu0 %v2277, 32
        %v4301 = vpop.permute.xlu0 %4300
        %4302 = vrot.lane.b32.xlu0 %v2278, 32
        %v4303 = vpop.permute.xlu0 %4302
        %4304 = vrot.lane.b32.xlu0 %v2279, 32
        %v4305 = vpop.permute.xlu0 %4304
        %4306 = vrot.lane.b32.xlu0 %v2280, 32
        %v4307 = vpop.permute.xlu0 %4306
        %4308 = vrot.lane.b32.xlu0 %v2281, 32
        %v4309 = vpop.permute.xlu0 %4308
        %4310 = vrot.lane.b32.xlu0 %v2282, 32
        %v4311 = vpop.permute.xlu0 %4310
        %4312 = vrot.lane.b32.xlu0 %v2283, 32
        %v4313 = vpop.permute.xlu0 %4312
        %4314 = vrot.lane.b32.xlu0 %v2284, 32
        %v4315 = vpop.permute.xlu0 %4314
        %4316 = vrot.lane.b32.xlu0 %v2285, 32
        %v4317 = vpop.permute.xlu0 %4316
        %4382 = vrot.lane.b32.xlu0 %v3222, 64
        %v4383 = vpop.permute.xlu0 %4382
        %4384 = vrot.lane.b32.xlu0 %v3223, 64
        %v4385 = vpop.permute.xlu0 %4384
        %4386 = vrot.lane.b32.xlu0 %v3224, 64
        %v4387 = vpop.permute.xlu0 %4386
        %4388 = vrot.lane.b32.xlu0 %v3225, 64
        %v4389 = vpop.permute.xlu0 %4388
        %4390 = vrot.lane.b32.xlu0 %v3226, 64
        %v4391 = vpop.permute.xlu0 %4390
        %4392 = vrot.lane.b32.xlu0 %v3227, 64
        %v4393 = vpop.permute.xlu0 %4392
        %4394 = vrot.lane.b32.xlu0 %v3228, 64
        %v4395 = vpop.permute.xlu0 %4394
        %4396 = vrot.lane.b32.xlu0 %v3229, 64
        %v4397 = vpop.permute.xlu0 %4396
        %4398 = vrot.lane.b32.xlu0 %v3230, 64
        %v4399 = vpop.permute.xlu0 %4398
        %4400 = vrot.lane.b32.xlu0 %v3231, 64
        %v4401 = vpop.permute.xlu0 %4400
        %4402 = vrot.lane.b32.xlu0 %v3232, 64
        %v4403 = vpop.permute.xlu0 %4402
        %4404 = vrot.lane.b32.xlu0 %v3233, 64
        %v4405 = vpop.permute.xlu0 %4404
        %4406 = vrot.lane.b32.xlu0 %v3234, 64
        %v4407 = vpop.permute.xlu0 %4406
        %4408 = vrot.lane.b32.xlu0 %v3235, 64
        %v4409 = vpop.permute.xlu0 %4408
        %4410 = vrot.lane.b32.xlu0 %v3236, 64
        %v4411 = vpop.permute.xlu0 %4410
        %4412 = vrot.lane.b32.xlu0 %v3237, 64
        %v4413 = vpop.permute.xlu0 %4412
        %4414 = vrot.lane.b32.xlu0 %v3238, 64
        %v4415 = vpop.permute.xlu0 %4414
        %4416 = vrot.lane.b32.xlu0 %v3239, 64
        %v4417 = vpop.permute.xlu0 %4416
        %4418 = vrot.lane.b32.xlu0 %v3240, 64
        %v4419 = vpop.permute.xlu0 %4418
        %4420 = vrot.lane.b32.xlu0 %v3241, 64
        %v4421 = vpop.permute.xlu0 %4420
        %4422 = vrot.lane.b32.xlu0 %v3242, 64
        %v4423 = vpop.permute.xlu0 %4422
        %4424 = vrot.lane.b32.xlu0 %v3243, 64
        %v4425 = vpop.permute.xlu0 %4424
        %4426 = vrot.lane.b32.xlu0 %v3244, 64
        %v4427 = vpop.permute.xlu0 %4426
        %4428 = vrot.lane.b32.xlu0 %v3245, 64
        %v4429 = vpop.permute.xlu0 %4428
        %4430 = vrot.lane.b32.xlu0 %v3246, 64
        %v4431 = vpop.permute.xlu0 %4430
        %4432 = vrot.lane.b32.xlu0 %v3247, 64
        %v4433 = vpop.permute.xlu0 %4432
        %4434 = vrot.lane.b32.xlu0 %v3248, 64
        %v4435 = vpop.permute.xlu0 %4434
        %4436 = vrot.lane.b32.xlu0 %v3249, 64
        %v4437 = vpop.permute.xlu0 %4436
        %4438 = vrot.lane.b32.xlu0 %v3250, 64
        %v4439 = vpop.permute.xlu0 %4438
        %4440 = vrot.lane.b32.xlu0 %v3251, 64
        %v4441 = vpop.permute.xlu0 %4440
        %4442 = vrot.lane.b32.xlu0 %v3252, 64
        %v4443 = vpop.permute.xlu0 %4442
        %4444 = vrot.lane.b32.xlu0 %v3253, 64
        %v4445 = vpop.permute.xlu0 %4444
        %4510 = vrot.lane.b32.xlu0 %v4190, 96
        %v4511 = vpop.permute.xlu0 %4510
        %4512 = vrot.lane.b32.xlu0 %v4191, 96
        %v4513 = vpop.permute.xlu0 %4512
        %4514 = vrot.lane.b32.xlu0 %v4192, 96
        %v4515 = vpop.permute.xlu0 %4514
        %4516 = vrot.lane.b32.xlu0 %v4193, 96
        %v4517 = vpop.permute.xlu0 %4516
        %4518 = vrot.lane.b32.xlu0 %v4194, 96
        %v4519 = vpop.permute.xlu0 %4518
        %4520 = vrot.lane.b32.xlu0 %v4195, 96
        %v4521 = vpop.permute.xlu0 %4520
        %4522 = vrot.lane.b32.xlu0 %v4196, 96
        %v4523 = vpop.permute.xlu0 %4522
        %4524 = vrot.lane.b32.xlu0 %v4197, 96
        %v4525 = vpop.permute.xlu0 %4524
        %4526 = vrot.lane.b32.xlu0 %v4198, 96
        %v4527 = vpop.permute.xlu0 %4526
        %4528 = vrot.lane.b32.xlu0 %v4199, 96
        %v4529 = vpop.permute.xlu0 %4528
        %4530 = vrot.lane.b32.xlu0 %v4200, 96
        %v4531 = vpop.permute.xlu0 %4530
        %4532 = vrot.lane.b32.xlu0 %v4201, 96
        %v4533 = vpop.permute.xlu0 %4532
        %4534 = vrot.lane.b32.xlu0 %v4202, 96
        %v4535 = vpop.permute.xlu0 %4534
        %4536 = vrot.lane.b32.xlu0 %v4203, 96
        %v4537 = vpop.permute.xlu0 %4536
        %4538 = vrot.lane.b32.xlu0 %v4204, 96
        %v4539 = vpop.permute.xlu0 %4538
        %4540 = vrot.lane.b32.xlu0 %v4205, 96
        %v4541 = vpop.permute.xlu0 %4540
        %4542 = vrot.lane.b32.xlu0 %v4206, 96
        %v4543 = vpop.permute.xlu0 %4542
        %4544 = vrot.lane.b32.xlu0 %v4207, 96
        %v4545 = vpop.permute.xlu0 %4544
        %4546 = vrot.lane.b32.xlu0 %v4208, 96
        %v4547 = vpop.permute.xlu0 %4546
        %4548 = vrot.lane.b32.xlu0 %v4209, 96
        %v4549 = vpop.permute.xlu0 %4548
        %4550 = vrot.lane.b32.xlu0 %v4210, 96
        %v4551 = vpop.permute.xlu0 %4550
        %4552 = vrot.lane.b32.xlu0 %v4211, 96
        %v4553 = vpop.permute.xlu0 %4552
        %4554 = vrot.lane.b32.xlu0 %v4212, 96
        %v4555 = vpop.permute.xlu0 %4554
        %4556 = vrot.lane.b32.xlu0 %v4213, 96
        %v4557 = vpop.permute.xlu0 %4556
        %4558 = vrot.lane.b32.xlu0 %v4214, 96
        %v4559 = vpop.permute.xlu0 %4558
        %4560 = vrot.lane.b32.xlu0 %v4215, 96
        %v4561 = vpop.permute.xlu0 %4560
        %4562 = vrot.lane.b32.xlu0 %v4216, 96
        %v4563 = vpop.permute.xlu0 %4562
        %4564 = vrot.lane.b32.xlu0 %v4217, 96
        %v4565 = vpop.permute.xlu0 %4564
        %4566 = vrot.lane.b32.xlu0 %v4218, 96
        %v4567 = vpop.permute.xlu0 %4566
        %4568 = vrot.lane.b32.xlu0 %v4219, 96
        %v4569 = vpop.permute.xlu0 %4568
        %4570 = vrot.lane.b32.xlu0 %v4220, 96
        %v4571 = vpop.permute.xlu0 %4570
        %4572 = vrot.lane.b32.xlu0 %v4221, 96
        %v4573 = vpop.permute.xlu0 %4572
        %v4606 = vsel %vm1311, %v1279, %v4255
        %v4607 = vsel %vm1311, %v1280, %v4257
        %v4608 = vsel %vm1311, %v1281, %v4259
        %v4609 = vsel %vm1311, %v1282, %v4261
        %v4610 = vsel %vm1311, %v1283, %v4263
        %v4611 = vsel %vm1311, %v1284, %v4265
        %v4612 = vsel %vm1311, %v1285, %v4267
        %v4613 = vsel %vm1311, %v1286, %v4269
        %v4614 = vsel %vm1311, %v1287, %v4271
        %v4615 = vsel %vm1311, %v1288, %v4273
        %v4616 = vsel %vm1311, %v1289, %v4275
        %v4617 = vsel %vm1311, %v1290, %v4277
        %v4618 = vsel %vm1311, %v1291, %v4279
        %v4619 = vsel %vm1311, %v1292, %v4281
        %v4620 = vsel %vm1311, %v1293, %v4283
        %v4621 = vsel %vm1311, %v1294, %v4285
        %v4622 = vsel %vm1311, %v1295, %v4287
        %v4623 = vsel %vm1311, %v1296, %v4289
        %v4624 = vsel %vm1311, %v1297, %v4291
        %v4625 = vsel %vm1311, %v1298, %v4293
        %v4626 = vsel %vm1311, %v1299, %v4295
        %v4627 = vsel %vm1311, %v1300, %v4297
        %v4628 = vsel %vm1311, %v1301, %v4299
        %v4629 = vsel %vm1311, %v1302, %v4301
        %v4630 = vsel %vm1311, %v1303, %v4303
        %v4631 = vsel %vm1311, %v1304, %v4305
        %v4632 = vsel %vm1311, %v1305, %v4307
        %v4633 = vsel %vm1311, %v1306, %v4309
        %v4634 = vsel %vm1311, %v1307, %v4311
        %v4635 = vsel %vm1311, %v1308, %v4313
        %v4636 = vsel %vm1311, %v1309, %v4315
        %v4637 = vsel %vm1311, %v1310, %v4317
        %v4638 = vsel %vm461, %v4606, %v4383
        %v4639 = vsel %vm461, %v4607, %v4385
        %v4640 = vsel %vm461, %v4608, %v4387
        %v4641 = vsel %vm461, %v4609, %v4389
        %v4642 = vsel %vm461, %v4610, %v4391
        %v4643 = vsel %vm461, %v4611, %v4393
        %v4644 = vsel %vm461, %v4612, %v4395
        %v4645 = vsel %vm461, %v4613, %v4397
        %v4646 = vsel %vm461, %v4614, %v4399
        %v4647 = vsel %vm461, %v4615, %v4401
        %v4648 = vsel %vm461, %v4616, %v4403
        %v4649 = vsel %vm461, %v4617, %v4405
        %v4650 = vsel %vm461, %v4618, %v4407
        %v4651 = vsel %vm461, %v4619, %v4409
        %v4652 = vsel %vm461, %v4620, %v4411
        %v4653 = vsel %vm461, %v4621, %v4413
        %v4654 = vsel %vm461, %v4622, %v4415
        %v4655 = vsel %vm461, %v4623, %v4417
        %v4656 = vsel %vm461, %v4624, %v4419
        %v4657 = vsel %vm461, %v4625, %v4421
        %v4658 = vsel %vm461, %v4626, %v4423
        %v4659 = vsel %vm461, %v4627, %v4425
        %v4660 = vsel %vm461, %v4628, %v4427
        %v4661 = vsel %vm461, %v4629, %v4429
        %v4662 = vsel %vm461, %v4630, %v4431
        %v4663 = vsel %vm461, %v4631, %v4433
        %v4664 = vsel %vm461, %v4632, %v4435
        %v4665 = vsel %vm461, %v4633, %v4437
        %v4666 = vsel %vm461, %v4634, %v4439
        %v4667 = vsel %vm461, %v4635, %v4441
        %v4668 = vsel %vm461, %v4636, %v4443
        %v4669 = vsel %vm461, %v4637, %v4445
        %vm4670 = vcmask 785408
        %v4671 = vsel %vm4670, %v4638, %v4511
        %v4672 = vsel %vm4670, %v4639, %v4513
        %v4673 = vsel %vm4670, %v4640, %v4515
        %v4674 = vsel %vm4670, %v4641, %v4517
        %v4675 = vsel %vm4670, %v4642, %v4519
        %v4676 = vsel %vm4670, %v4643, %v4521
        %v4677 = vsel %vm4670, %v4644, %v4523
        %v4678 = vsel %vm4670, %v4645, %v4525
        %v4679 = vsel %vm4670, %v4646, %v4527
        %v4680 = vsel %vm4670, %v4647, %v4529
        %v4681 = vsel %vm4670, %v4648, %v4531
        %v4682 = vsel %vm4670, %v4649, %v4533
        %v4683 = vsel %vm4670, %v4650, %v4535
        %v4684 = vsel %vm4670, %v4651, %v4537
        %v4685 = vsel %vm4670, %v4652, %v4539
        %v4686 = vsel %vm4670, %v4653, %v4541
        %v4687 = vsel %vm4670, %v4654, %v4543
        %v4688 = vsel %vm4670, %v4655, %v4545
        %v4689 = vsel %vm4670, %v4656, %v4547
        %v4690 = vsel %vm4670, %v4657, %v4549
        %v4691 = vsel %vm4670, %v4658, %v4551
        %v4692 = vsel %vm4670, %v4659, %v4553
        %v4693 = vsel %vm4670, %v4660, %v4555
        %v4694 = vsel %vm4670, %v4661, %v4557
        %v4695 = vsel %vm4670, %v4662, %v4559
        %v4696 = vsel %vm4670, %v4663, %v4561
        %v4697 = vsel %vm4670, %v4664, %v4563
        %v4698 = vsel %vm4670, %v4665, %v4565
        %v4699 = vsel %vm4670, %v4666, %v4567
        %v4700 = vsel %vm4670, %v4667, %v4569
        %v4701 = vsel %vm4670, %v4668, %v4571
        %v4702 = vsel %vm4670, %v4669, %v4573
        %v4703 = vpack.c.bf16 %v4672, %v4671
        %v4704 = vpack.c.bf16 %v4674, %v4673
        %v4705 = vpack.c.bf16 %v4676, %v4675
        %v4706 = vpack.c.bf16 %v4678, %v4677
        %v4707 = vpack.c.bf16 %v4680, %v4679
        %v4708 = vpack.c.bf16 %v4682, %v4681
        %v4709 = vpack.c.bf16 %v4684, %v4683
        %v4710 = vpack.c.bf16 %v4686, %v4685
        %v4711 = vpack.c.bf16 %v4688, %v4687
        %v4712 = vpack.c.bf16 %v4690, %v4689
        %v4713 = vpack.c.bf16 %v4692, %v4691
        %v4714 = vpack.c.bf16 %v4694, %v4693
        %v4715 = vpack.c.bf16 %v4696, %v4695
        %v4716 = vpack.c.bf16 %v4698, %v4697
        %v4717 = vpack.c.bf16 %v4700, %v4699
        %v4718 = vpack.c.bf16 %v4702, %v4701
        %v4719 = vld [vmem:[#allocation6] sm:$0xf]
        %v4720 = vld [vmem:[#allocation6 + $0x4] sm:$0xf]
        %v4721 = vld [vmem:[#allocation6 + $0x8] sm:$0xf]
        %v4722 = vld [vmem:[#allocation6 + $0xc] sm:$0xf]
        %v4723 = vld [vmem:[#allocation6 + $0x10] sm:$0xf]
        %v4724 = vld [vmem:[#allocation6 + $0x14] sm:$0xf]
        %v4725 = vld [vmem:[#allocation6 + $0x18] sm:$0xf]
        %v4726 = vld [vmem:[#allocation6 + $0x1c] sm:$0xf]
        %v4727 = vld [vmem:[#allocation6 + $0x20] sm:$0xf]
        %v4728 = vld [vmem:[#allocation6 + $0x24] sm:$0xf]
        %v4729 = vld [vmem:[#allocation6 + $0x28] sm:$0xf]
        %v4730 = vld [vmem:[#allocation6 + $0x2c] sm:$0xf]
        %v4731 = vld [vmem:[#allocation6 + $0x30] sm:$0xf]
        %v4732 = vld [vmem:[#allocation6 + $0x34] sm:$0xf]
        %v4733 = vld [vmem:[#allocation6 + $0x38] sm:$0xf]
        %v4734 = vld [vmem:[#allocation6 + $0x3c] sm:$0xf]
        %v4751 = vunpack.c.l.b16 %v4719
        %v4752 = vunpack.c.l.b16 %v4720
        %v4753 = vunpack.c.l.b16 %v4721
        %v4754 = vunpack.c.l.b16 %v4722
        %v4755 = vunpack.c.l.b16 %v4723
        %v4756 = vunpack.c.l.b16 %v4724
        %v4757 = vunpack.c.l.b16 %v4725
        %v4758 = vunpack.c.l.b16 %v4726
        %v4759 = vunpack.c.l.b16 %v4727
        %v4760 = vunpack.c.l.b16 %v4728
        %v4761 = vunpack.c.l.b16 %v4729
        %v4762 = vunpack.c.l.b16 %v4730
        %v4763 = vunpack.c.l.b16 %v4731
        %v4764 = vunpack.c.l.b16 %v4732
        %v4765 = vunpack.c.l.b16 %v4733
        %v4766 = vunpack.c.l.b16 %v4734
        %v4767 = vpack.c.b16 %v4752, %v4751
        %v4768 = vpack.c.b16 %v4754, %v4753
        %v4769 = vpack.c.b16 %v4756, %v4755
        %v4770 = vpack.c.b16 %v4758, %v4757
        %v4771 = vpack.c.b16 %v4760, %v4759
        %v4772 = vpack.c.b16 %v4762, %v4761
        %v4773 = vpack.c.b16 %v4764, %v4763
        %v4774 = vpack.c.b16 %v4766, %v4765
        %4783 = vmatpush.bf16.msra.mxu0 %v4774
        %4784 = vmatpush.bf16.msra.mxu0 %v4773
        %4785 = vmatpush.bf16.msra.mxu0 %v4772
        %4786 = vmatpush.bf16.msra.mxu0 %v4771
        %4787 = vmatpush.bf16.msra.mxu0 %v4770
        %4788 = vmatpush.bf16.msra.mxu0 %v4769
        %4789 = vmatpush.bf16.msra.mxu0 %v4768
        %4790 = vmatpush.bf16.msra.mxu0 %v4767
        %4791 = vmatmul.bf16.gmra.mxu0 %v4703
        %v4792 = vpop.f32.mrf.mxu0
        %v4793 = vadd.f32 0.0, %v4792
        %v4794 = vpop.f32.mrf.mxu0
        %v4795 = vadd.f32 0.0, %v4794
        %4796 = vmatmul.bf16.gmra.mxu0 %v4704
        %v4797 = vpop.f32.mrf.mxu0
        %v4798 = vadd.f32 0.0, %v4797
        %v4799 = vpop.f32.mrf.mxu0
        %v4800 = vadd.f32 0.0, %v4799
        %4801 = vmatmul.bf16.gmra.mxu0 %v4705
        %v4802 = vpop.f32.mrf.mxu0
        %v4803 = vadd.f32 0.0, %v4802
        %v4804 = vpop.f32.mrf.mxu0
        %v4805 = vadd.f32 0.0, %v4804
        %4806 = vmatmul.bf16.gmra.mxu0 %v4706
        %v4807 = vpop.f32.mrf.mxu0
        %v4808 = vadd.f32 0.0, %v4807
        %v4809 = vpop.f32.mrf.mxu0
        %v4810 = vadd.f32 0.0, %v4809
        %4811 = vmatmul.bf16.gmra.mxu0 %v4707
        %v4812 = vpop.f32.mrf.mxu0
        %v4813 = vadd.f32 0.0, %v4812
        %v4814 = vpop.f32.mrf.mxu0
        %v4815 = vadd.f32 0.0, %v4814
        %4816 = vmatmul.bf16.gmra.mxu0 %v4708
        %v4817 = vpop.f32.mrf.mxu0
        %v4818 = vadd.f32 0.0, %v4817
        %v4819 = vpop.f32.mrf.mxu0
        %v4820 = vadd.f32 0.0, %v4819
        %4821 = vmatmul.bf16.gmra.mxu0 %v4709
        %v4822 = vpop.f32.mrf.mxu0
        %v4823 = vadd.f32 0.0, %v4822
        %v4824 = vpop.f32.mrf.mxu0
        %v4825 = vadd.f32 0.0, %v4824
        %4826 = vmatmul.bf16.gmra.mxu0 %v4710
        %v4827 = vpop.f32.mrf.mxu0
        %v4828 = vadd.f32 0.0, %v4827
        %v4829 = vpop.f32.mrf.mxu0
        %v4830 = vadd.f32 0.0, %v4829
        %4831 = vmatmul.bf16.gmra.mxu0 %v4711
        %v4832 = vpop.f32.mrf.mxu0
        %v4833 = vadd.f32 0.0, %v4832
        %v4834 = vpop.f32.mrf.mxu0
        %v4835 = vadd.f32 0.0, %v4834
        %4836 = vmatmul.bf16.gmra.mxu0 %v4712
        %v4837 = vpop.f32.mrf.mxu0
        %v4838 = vadd.f32 0.0, %v4837
        %v4839 = vpop.f32.mrf.mxu0
        %v4840 = vadd.f32 0.0, %v4839
        %4841 = vmatmul.bf16.gmra.mxu0 %v4713
        %v4842 = vpop.f32.mrf.mxu0
        %v4843 = vadd.f32 0.0, %v4842
        %v4844 = vpop.f32.mrf.mxu0
        %v4845 = vadd.f32 0.0, %v4844
        %4846 = vmatmul.bf16.gmra.mxu0 %v4714
        %v4847 = vpop.f32.mrf.mxu0
        %v4848 = vadd.f32 0.0, %v4847
        %v4849 = vpop.f32.mrf.mxu0
        %v4850 = vadd.f32 0.0, %v4849
        %4851 = vmatmul.bf16.gmra.mxu0 %v4715
        %v4852 = vpop.f32.mrf.mxu0
        %v4853 = vadd.f32 0.0, %v4852
        %v4854 = vpop.f32.mrf.mxu0
        %v4855 = vadd.f32 0.0, %v4854
        %4856 = vmatmul.bf16.gmra.mxu0 %v4716
        %v4857 = vpop.f32.mrf.mxu0
        %v4858 = vadd.f32 0.0, %v4857
        %v4859 = vpop.f32.mrf.mxu0
        %v4860 = vadd.f32 0.0, %v4859
        %4861 = vmatmul.bf16.gmra.mxu0 %v4717
        %v4862 = vpop.f32.mrf.mxu0
        %v4863 = vadd.f32 0.0, %v4862
        %v4864 = vpop.f32.mrf.mxu0
        %v4865 = vadd.f32 0.0, %v4864
        %4866 = vmatmul.bf16.gmra.mxu0 %v4718
        %v4867 = vpop.f32.mrf.mxu0
        %v4868 = vadd.f32 0.0, %v4867
        %v4869 = vpop.f32.mrf.mxu0
        %v4870 = vadd.f32 0.0, %v4869
        %4871 = vdwg.mxu0
        %v4872 = vld [vmem:[%s5] sm:$0x1]
        %v4874 = vperm.slane %v4872, 0
        %v4876 = vmul.f32 %v4793, %v4874
        %v4877 = vmul.f32 %v4795, %v4874
        %v4878 = vmul.f32 %v4798, %v4874
        %v4879 = vmul.f32 %v4800, %v4874
        %v4880 = vmul.f32 %v4803, %v4874
        %v4881 = vmul.f32 %v4805, %v4874
        %v4882 = vmul.f32 %v4808, %v4874
        %v4883 = vmul.f32 %v4810, %v4874
        %v4884 = vmul.f32 %v4813, %v4874
        %v4885 = vmul.f32 %v4815, %v4874
        %v4886 = vmul.f32 %v4818, %v4874
        %v4887 = vmul.f32 %v4820, %v4874
        %v4888 = vmul.f32 %v4823, %v4874
        %v4889 = vmul.f32 %v4825, %v4874
        %v4890 = vmul.f32 %v4828, %v4874
        %v4891 = vmul.f32 %v4830, %v4874
        %v4892 = vmul.f32 %v4833, %v4874
        %v4893 = vmul.f32 %v4835, %v4874
        %v4894 = vmul.f32 %v4838, %v4874
        %v4895 = vmul.f32 %v4840, %v4874
        %v4896 = vmul.f32 %v4843, %v4874
        %v4897 = vmul.f32 %v4845, %v4874
        %v4898 = vmul.f32 %v4848, %v4874
        %v4899 = vmul.f32 %v4850, %v4874
        %v4900 = vmul.f32 %v4853, %v4874
        %v4901 = vmul.f32 %v4855, %v4874
        %v4902 = vmul.f32 %v4858, %v4874
        %v4903 = vmul.f32 %v4860, %v4874
        %v4904 = vmul.f32 %v4863, %v4874
        %v4905 = vmul.f32 %v4865, %v4874
        %v4906 = vmul.f32 %v4868, %v4874
        %v4907 = vmul.f32 %v4870, %v4874
        %v4908 = vld [vmem:[%s6] sm:$0x1]
        %v4910 = vperm.slane %v4908, 0
        %v4912 = vadd.f32 %v4876, %v4910
        %v4913 = vadd.f32 %v4877, %v4910
        %v4914 = vadd.f32 %v4878, %v4910
        %v4915 = vadd.f32 %v4879, %v4910
        %v4916 = vadd.f32 %v4880, %v4910
        %v4917 = vadd.f32 %v4881, %v4910
        %v4918 = vadd.f32 %v4882, %v4910
        %v4919 = vadd.f32 %v4883, %v4910
        %v4920 = vadd.f32 %v4884, %v4910
        %v4921 = vadd.f32 %v4885, %v4910
        %v4922 = vadd.f32 %v4886, %v4910
        %v4923 = vadd.f32 %v4887, %v4910
        %v4924 = vadd.f32 %v4888, %v4910
        %v4925 = vadd.f32 %v4889, %v4910
        %v4926 = vadd.f32 %v4890, %v4910
        %v4927 = vadd.f32 %v4891, %v4910
        %v4928 = vadd.f32 %v4892, %v4910
        %v4929 = vadd.f32 %v4893, %v4910
        %v4930 = vadd.f32 %v4894, %v4910
        %v4931 = vadd.f32 %v4895, %v4910
        %v4932 = vadd.f32 %v4896, %v4910
        %v4933 = vadd.f32 %v4897, %v4910
        %v4934 = vadd.f32 %v4898, %v4910
        %v4935 = vadd.f32 %v4899, %v4910
        %v4936 = vadd.f32 %v4900, %v4910
        %v4937 = vadd.f32 %v4901, %v4910
        %v4938 = vadd.f32 %v4902, %v4910
        %v4939 = vadd.f32 %v4903, %v4910
        %v4940 = vadd.f32 %v4904, %v4910
        %v4941 = vadd.f32 %v4905, %v4910
        %v4942 = vadd.f32 %v4906, %v4910
        %v4943 = vadd.f32 %v4907, %v4910
        %v4944 = vxor.u32 %v4912, 2147483648
        %v4945 = vxor.u32 %v4913, 2147483648
        %v4946 = vxor.u32 %v4914, 2147483648
        %v4947 = vxor.u32 %v4915, 2147483648
        %v4948 = vxor.u32 %v4916, 2147483648
        %v4949 = vxor.u32 %v4917, 2147483648
        %v4950 = vxor.u32 %v4918, 2147483648
        %v4951 = vxor.u32 %v4919, 2147483648
        %v4952 = vxor.u32 %v4920, 2147483648
        %v4953 = vxor.u32 %v4921, 2147483648
        %v4954 = vxor.u32 %v4922, 2147483648
        %v4955 = vxor.u32 %v4923, 2147483648
        %v4956 = vxor.u32 %v4924, 2147483648
        %v4957 = vxor.u32 %v4925, 2147483648
        %v4958 = vxor.u32 %v4926, 2147483648
        %v4959 = vxor.u32 %v4927, 2147483648
        %v4960 = vxor.u32 %v4928, 2147483648
        %v4961 = vxor.u32 %v4929, 2147483648
        %v4962 = vxor.u32 %v4930, 2147483648
        %v4963 = vxor.u32 %v4931, 2147483648
        %v4964 = vxor.u32 %v4932, 2147483648
        %v4965 = vxor.u32 %v4933, 2147483648
        %v4966 = vxor.u32 %v4934, 2147483648
        %v4967 = vxor.u32 %v4935, 2147483648
        %v4968 = vxor.u32 %v4936, 2147483648
        %v4969 = vxor.u32 %v4937, 2147483648
        %v4970 = vxor.u32 %v4938, 2147483648
        %v4971 = vxor.u32 %v4939, 2147483648
        %v4972 = vxor.u32 %v4940, 2147483648
        %v4973 = vxor.u32 %v4941, 2147483648
        %v4974 = vxor.u32 %v4942, 2147483648
        %v4975 = vxor.u32 %v4943, 2147483648
        %v4976 = vmul.f32 %v4944, 1.442695
        %v4977 = vpow.pop %v4976
        %v4978 = vmul.f32 %v4945, 1.442695
        %v4979 = vpow.pop %v4978
        %v4980 = vmul.f32 %v4946, 1.442695
        %v4981 = vpow.pop %v4980
        %v4982 = vmul.f32 %v4947, 1.442695
        %v4983 = vpow.pop %v4982
        %v4984 = vmul.f32 %v4948, 1.442695
        %v4985 = vpow.pop %v4984
        %v4986 = vmul.f32 %v4949, 1.442695
        %v4987 = vpow.pop %v4986
        %v4988 = vmul.f32 %v4950, 1.442695
        %v4989 = vpow.pop %v4988
        %v4990 = vmul.f32 %v4951, 1.442695
        %v4991 = vpow.pop %v4990
        %v4992 = vmul.f32 %v4952, 1.442695
        %v4993 = vpow.pop %v4992
        %v4994 = vmul.f32 %v4953, 1.442695
        %v4995 = vpow.pop %v4994
        %v4996 = vmul.f32 %v4954, 1.442695
        %v4997 = vpow.pop %v4996
        %v4998 = vmul.f32 %v4955, 1.442695
        %v4999 = vpow.pop %v4998
        %v5000 = vmul.f32 %v4956, 1.442695
        %v5001 = vpow.pop %v5000
        %v5002 = vmul.f32 %v4957, 1.442695
        %v5003 = vpow.pop %v5002
        %v5004 = vmul.f32 %v4958, 1.442695
        %v5005 = vpow.pop %v5004
        %v5006 = vmul.f32 %v4959, 1.442695
        %v5007 = vpow.pop %v5006
        %v5008 = vmul.f32 %v4960, 1.442695
        %v5009 = vpow.pop %v5008
        %v5010 = vmul.f32 %v4961, 1.442695
        %v5011 = vpow.pop %v5010
        %v5012 = vmul.f32 %v4962, 1.442695
        %v5013 = vpow.pop %v5012
        %v5014 = vmul.f32 %v4963, 1.442695
        %v5015 = vpow.pop %v5014
        %v5016 = vmul.f32 %v4964, 1.442695
        %v5017 = vpow.pop %v5016
        %v5018 = vmul.f32 %v4965, 1.442695
        %v5019 = vpow.pop %v5018
        %v5020 = vmul.f32 %v4966, 1.442695
        %v5021 = vpow.pop %v5020
        %v5022 = vmul.f32 %v4967, 1.442695
        %v5023 = vpow.pop %v5022
        %v5024 = vmul.f32 %v4968, 1.442695
        %v5025 = vpow.pop %v5024
        %v5026 = vmul.f32 %v4969, 1.442695
        %v5027 = vpow.pop %v5026
        %v5028 = vmul.f32 %v4970, 1.442695
        %v5029 = vpow.pop %v5028
        %v5030 = vmul.f32 %v4971, 1.442695
        %v5031 = vpow.pop %v5030
        %v5032 = vmul.f32 %v4972, 1.442695
        %v5033 = vpow.pop %v5032
        %v5034 = vmul.f32 %v4973, 1.442695
        %v5035 = vpow.pop %v5034
        %v5036 = vmul.f32 %v4974, 1.442695
        %v5037 = vpow.pop %v5036
        %v5038 = vmul.f32 %v4975, 1.442695
        %v5039 = vpow.pop %v5038
        %v5040 = vadd.f32 %v4977, 1.0
        %v5041 = vadd.f32 %v4979, 1.0
        %v5042 = vadd.f32 %v4981, 1.0
        %v5043 = vadd.f32 %v4983, 1.0
        %v5044 = vadd.f32 %v4985, 1.0
        %v5045 = vadd.f32 %v4987, 1.0
        %v5046 = vadd.f32 %v4989, 1.0
        %v5047 = vadd.f32 %v4991, 1.0
        %v5048 = vadd.f32 %v4993, 1.0
        %v5049 = vadd.f32 %v4995, 1.0
        %v5050 = vadd.f32 %v4997, 1.0
        %v5051 = vadd.f32 %v4999, 1.0
        %v5052 = vadd.f32 %v5001, 1.0
        %v5053 = vadd.f32 %v5003, 1.0
        %v5054 = vadd.f32 %v5005, 1.0
        %v5055 = vadd.f32 %v5007, 1.0
        %v5056 = vadd.f32 %v5009, 1.0
        %v5057 = vadd.f32 %v5011, 1.0
        %v5058 = vadd.f32 %v5013, 1.0
        %v5059 = vadd.f32 %v5015, 1.0
        %v5060 = vadd.f32 %v5017, 1.0
        %v5061 = vadd.f32 %v5019, 1.0
        %v5062 = vadd.f32 %v5021, 1.0
        %v5063 = vadd.f32 %v5023, 1.0
        %v5064 = vadd.f32 %v5025, 1.0
        %v5065 = vadd.f32 %v5027, 1.0
        %v5066 = vadd.f32 %v5029, 1.0
        %v5067 = vadd.f32 %v5031, 1.0
        %v5068 = vadd.f32 %v5033, 1.0
        %v5069 = vadd.f32 %v5035, 1.0
        %v5070 = vadd.f32 %v5037, 1.0
        %v5071 = vadd.f32 %v5039, 1.0
        %v5072 = vrcp.pop %v5040
        %v5073 = vmul.f32 %v5040, %v5072
        %v5074 = vsub.f32 1.0, %v5073
        %v5075 = vmul.f32 %v5072, %v5074
        %v5076 = vadd.f32 %v5072, %v5075
        %vm5077 = vweird.f32 %v5040
        %vm5078 = vweird.f32 %v5072
        %vm5079 = vmor %vm5077, %vm5078
        %v5080 = vsel %vm5079, %v5072, %v5076
        %v5081 = vand.u32 2147483647, %v5040
        %vm5082 = vcmp.eq.f32.partialorder %v5081, 8.507059e+37
        %v5083 = vand.u32 %v5040, 2147483648
        %v5084 = vor.u32 1.1754944e-38, %v5083
        %v5085 = vsel %vm5082, %v5084, %v5080
        %v5086 = vmul.f32 1.0, %v5085
        %v5087 = vrcp.pop %v5041
        %v5088 = vmul.f32 %v5041, %v5087
        %v5089 = vsub.f32 1.0, %v5088
        %v5090 = vmul.f32 %v5087, %v5089
        %v5091 = vadd.f32 %v5087, %v5090
        %vm5092 = vweird.f32 %v5041
        %vm5093 = vweird.f32 %v5087
        %vm5094 = vmor %vm5092, %vm5093
        %v5095 = vsel %vm5094, %v5087, %v5091
        %v5096 = vand.u32 2147483647, %v5041
        %vm5097 = vcmp.eq.f32.partialorder %v5096, 8.507059e+37
        %v5098 = vand.u32 %v5041, 2147483648
        %v5099 = vor.u32 1.1754944e-38, %v5098
        %v5100 = vsel %vm5097, %v5099, %v5095
        %v5101 = vmul.f32 1.0, %v5100
        %v5102 = vrcp.pop %v5042
        %v5103 = vmul.f32 %v5042, %v5102
        %v5104 = vsub.f32 1.0, %v5103
        %v5105 = vmul.f32 %v5102, %v5104
        %v5106 = vadd.f32 %v5102, %v5105
        %vm5107 = vweird.f32 %v5042
        %vm5108 = vweird.f32 %v5102
        %vm5109 = vmor %vm5107, %vm5108
        %v5110 = vsel %vm5109, %v5102, %v5106
        %v5111 = vand.u32 2147483647, %v5042
        %vm5112 = vcmp.eq.f32.partialorder %v5111, 8.507059e+37
        %v5113 = vand.u32 %v5042, 2147483648
        %v5114 = vor.u32 1.1754944e-38, %v5113
        %v5115 = vsel %vm5112, %v5114, %v5110
        %v5116 = vmul.f32 1.0, %v5115
        %v5117 = vrcp.pop %v5043
        %v5118 = vmul.f32 %v5043, %v5117
        %v5119 = vsub.f32 1.0, %v5118
        %v5120 = vmul.f32 %v5117, %v5119
        %v5121 = vadd.f32 %v5117, %v5120
        %vm5122 = vweird.f32 %v5043
        %vm5123 = vweird.f32 %v5117
        %vm5124 = vmor %vm5122, %vm5123
        %v5125 = vsel %vm5124, %v5117, %v5121
        %v5126 = vand.u32 2147483647, %v5043
        %vm5127 = vcmp.eq.f32.partialorder %v5126, 8.507059e+37
        %v5128 = vand.u32 %v5043, 2147483648
        %v5129 = vor.u32 1.1754944e-38, %v5128
        %v5130 = vsel %vm5127, %v5129, %v5125
        %v5131 = vmul.f32 1.0, %v5130
        %v5132 = vrcp.pop %v5044
        %v5133 = vmul.f32 %v5044, %v5132
        %v5134 = vsub.f32 1.0, %v5133
        %v5135 = vmul.f32 %v5132, %v5134
        %v5136 = vadd.f32 %v5132, %v5135
        %vm5137 = vweird.f32 %v5044
        %vm5138 = vweird.f32 %v5132
        %vm5139 = vmor %vm5137, %vm5138
        %v5140 = vsel %vm5139, %v5132, %v5136
        %v5141 = vand.u32 2147483647, %v5044
        %vm5142 = vcmp.eq.f32.partialorder %v5141, 8.507059e+37
        %v5143 = vand.u32 %v5044, 2147483648
        %v5144 = vor.u32 1.1754944e-38, %v5143
        %v5145 = vsel %vm5142, %v5144, %v5140
        %v5146 = vmul.f32 1.0, %v5145
        %v5147 = vrcp.pop %v5045
        %v5148 = vmul.f32 %v5045, %v5147
        %v5149 = vsub.f32 1.0, %v5148
        %v5150 = vmul.f32 %v5147, %v5149
        %v5151 = vadd.f32 %v5147, %v5150
        %vm5152 = vweird.f32 %v5045
        %vm5153 = vweird.f32 %v5147
        %vm5154 = vmor %vm5152, %vm5153
        %v5155 = vsel %vm5154, %v5147, %v5151
        %v5156 = vand.u32 2147483647, %v5045
        %vm5157 = vcmp.eq.f32.partialorder %v5156, 8.507059e+37
        %v5158 = vand.u32 %v5045, 2147483648
        %v5159 = vor.u32 1.1754944e-38, %v5158
        %v5160 = vsel %vm5157, %v5159, %v5155
        %v5161 = vmul.f32 1.0, %v5160
        %v5162 = vrcp.pop %v5046
        %v5163 = vmul.f32 %v5046, %v5162
        %v5164 = vsub.f32 1.0, %v5163
        %v5165 = vmul.f32 %v5162, %v5164
        %v5166 = vadd.f32 %v5162, %v5165
        %vm5167 = vweird.f32 %v5046
        %vm5168 = vweird.f32 %v5162
        %vm5169 = vmor %vm5167, %vm5168
        %v5170 = vsel %vm5169, %v5162, %v5166
        %v5171 = vand.u32 2147483647, %v5046
        %vm5172 = vcmp.eq.f32.partialorder %v5171, 8.507059e+37
        %v5173 = vand.u32 %v5046, 2147483648
        %v5174 = vor.u32 1.1754944e-38, %v5173
        %v5175 = vsel %vm5172, %v5174, %v5170
        %v5176 = vmul.f32 1.0, %v5175
        %v5177 = vrcp.pop %v5047
        %v5178 = vmul.f32 %v5047, %v5177
        %v5179 = vsub.f32 1.0, %v5178
        %v5180 = vmul.f32 %v5177, %v5179
        %v5181 = vadd.f32 %v5177, %v5180
        %vm5182 = vweird.f32 %v5047
        %vm5183 = vweird.f32 %v5177
        %vm5184 = vmor %vm5182, %vm5183
        %v5185 = vsel %vm5184, %v5177, %v5181
        %v5186 = vand.u32 2147483647, %v5047
        %vm5187 = vcmp.eq.f32.partialorder %v5186, 8.507059e+37
        %v5188 = vand.u32 %v5047, 2147483648
        %v5189 = vor.u32 1.1754944e-38, %v5188
        %v5190 = vsel %vm5187, %v5189, %v5185
        %v5191 = vmul.f32 1.0, %v5190
        %v5192 = vrcp.pop %v5048
        %v5193 = vmul.f32 %v5048, %v5192
        %v5194 = vsub.f32 1.0, %v5193
        %v5195 = vmul.f32 %v5192, %v5194
        %v5196 = vadd.f32 %v5192, %v5195
        %vm5197 = vweird.f32 %v5048
        %vm5198 = vweird.f32 %v5192
        %vm5199 = vmor %vm5197, %vm5198
        %v5200 = vsel %vm5199, %v5192, %v5196
        %v5201 = vand.u32 2147483647, %v5048
        %vm5202 = vcmp.eq.f32.partialorder %v5201, 8.507059e+37
        %v5203 = vand.u32 %v5048, 2147483648
        %v5204 = vor.u32 1.1754944e-38, %v5203
        %v5205 = vsel %vm5202, %v5204, %v5200
        %v5206 = vmul.f32 1.0, %v5205
        %v5207 = vrcp.pop %v5049
        %v5208 = vmul.f32 %v5049, %v5207
        %v5209 = vsub.f32 1.0, %v5208
        %v5210 = vmul.f32 %v5207, %v5209
        %v5211 = vadd.f32 %v5207, %v5210
        %vm5212 = vweird.f32 %v5049
        %vm5213 = vweird.f32 %v5207
        %vm5214 = vmor %vm5212, %vm5213
        %v5215 = vsel %vm5214, %v5207, %v5211
        %v5216 = vand.u32 2147483647, %v5049
        %vm5217 = vcmp.eq.f32.partialorder %v5216, 8.507059e+37
        %v5218 = vand.u32 %v5049, 2147483648
        %v5219 = vor.u32 1.1754944e-38, %v5218
        %v5220 = vsel %vm5217, %v5219, %v5215
        %v5221 = vmul.f32 1.0, %v5220
        %v5222 = vrcp.pop %v5050
        %v5223 = vmul.f32 %v5050, %v5222
        %v5224 = vsub.f32 1.0, %v5223
        %v5225 = vmul.f32 %v5222, %v5224
        %v5226 = vadd.f32 %v5222, %v5225
        %vm5227 = vweird.f32 %v5050
        %vm5228 = vweird.f32 %v5222
        %vm5229 = vmor %vm5227, %vm5228
        %v5230 = vsel %vm5229, %v5222, %v5226
        %v5231 = vand.u32 2147483647, %v5050
        %vm5232 = vcmp.eq.f32.partialorder %v5231, 8.507059e+37
        %v5233 = vand.u32 %v5050, 2147483648
        %v5234 = vor.u32 1.1754944e-38, %v5233
        %v5235 = vsel %vm5232, %v5234, %v5230
        %v5236 = vmul.f32 1.0, %v5235
        %v5237 = vrcp.pop %v5051
        %v5238 = vmul.f32 %v5051, %v5237
        %v5239 = vsub.f32 1.0, %v5238
        %v5240 = vmul.f32 %v5237, %v5239
        %v5241 = vadd.f32 %v5237, %v5240
        %vm5242 = vweird.f32 %v5051
        %vm5243 = vweird.f32 %v5237
        %vm5244 = vmor %vm5242, %vm5243
        %v5245 = vsel %vm5244, %v5237, %v5241
        %v5246 = vand.u32 2147483647, %v5051
        %vm5247 = vcmp.eq.f32.partialorder %v5246, 8.507059e+37
        %v5248 = vand.u32 %v5051, 2147483648
        %v5249 = vor.u32 1.1754944e-38, %v5248
        %v5250 = vsel %vm5247, %v5249, %v5245
        %v5251 = vmul.f32 1.0, %v5250
        %v5252 = vrcp.pop %v5052
        %v5253 = vmul.f32 %v5052, %v5252
        %v5254 = vsub.f32 1.0, %v5253
        %v5255 = vmul.f32 %v5252, %v5254
        %v5256 = vadd.f32 %v5252, %v5255
        %vm5257 = vweird.f32 %v5052
        %vm5258 = vweird.f32 %v5252
        %vm5259 = vmor %vm5257, %vm5258
        %v5260 = vsel %vm5259, %v5252, %v5256
        %v5261 = vand.u32 2147483647, %v5052
        %vm5262 = vcmp.eq.f32.partialorder %v5261, 8.507059e+37
        %v5263 = vand.u32 %v5052, 2147483648
        %v5264 = vor.u32 1.1754944e-38, %v5263
        %v5265 = vsel %vm5262, %v5264, %v5260
        %v5266 = vmul.f32 1.0, %v5265
        %v5267 = vrcp.pop %v5053
        %v5268 = vmul.f32 %v5053, %v5267
        %v5269 = vsub.f32 1.0, %v5268
        %v5270 = vmul.f32 %v5267, %v5269
        %v5271 = vadd.f32 %v5267, %v5270
        %vm5272 = vweird.f32 %v5053
        %vm5273 = vweird.f32 %v5267
        %vm5274 = vmor %vm5272, %vm5273
        %v5275 = vsel %vm5274, %v5267, %v5271
        %v5276 = vand.u32 2147483647, %v5053
        %vm5277 = vcmp.eq.f32.partialorder %v5276, 8.507059e+37
        %v5278 = vand.u32 %v5053, 2147483648
        %v5279 = vor.u32 1.1754944e-38, %v5278
        %v5280 = vsel %vm5277, %v5279, %v5275
        %v5281 = vmul.f32 1.0, %v5280
        %v5282 = vrcp.pop %v5054
        %v5283 = vmul.f32 %v5054, %v5282
        %v5284 = vsub.f32 1.0, %v5283
        %v5285 = vmul.f32 %v5282, %v5284
        %v5286 = vadd.f32 %v5282, %v5285
        %vm5287 = vweird.f32 %v5054
        %vm5288 = vweird.f32 %v5282
        %vm5289 = vmor %vm5287, %vm5288
        %v5290 = vsel %vm5289, %v5282, %v5286
        %v5291 = vand.u32 2147483647, %v5054
        %vm5292 = vcmp.eq.f32.partialorder %v5291, 8.507059e+37
        %v5293 = vand.u32 %v5054, 2147483648
        %v5294 = vor.u32 1.1754944e-38, %v5293
        %v5295 = vsel %vm5292, %v5294, %v5290
        %v5296 = vmul.f32 1.0, %v5295
        %v5297 = vrcp.pop %v5055
        %v5298 = vmul.f32 %v5055, %v5297
        %v5299 = vsub.f32 1.0, %v5298
        %v5300 = vmul.f32 %v5297, %v5299
        %v5301 = vadd.f32 %v5297, %v5300
        %vm5302 = vweird.f32 %v5055
        %vm5303 = vweird.f32 %v5297
        %vm5304 = vmor %vm5302, %vm5303
        %v5305 = vsel %vm5304, %v5297, %v5301
        %v5306 = vand.u32 2147483647, %v5055
        %vm5307 = vcmp.eq.f32.partialorder %v5306, 8.507059e+37
        %v5308 = vand.u32 %v5055, 2147483648
        %v5309 = vor.u32 1.1754944e-38, %v5308
        %v5310 = vsel %vm5307, %v5309, %v5305
        %v5311 = vmul.f32 1.0, %v5310
        %v5312 = vrcp.pop %v5056
        %v5313 = vmul.f32 %v5056, %v5312
        %v5314 = vsub.f32 1.0, %v5313
        %v5315 = vmul.f32 %v5312, %v5314
        %v5316 = vadd.f32 %v5312, %v5315
        %vm5317 = vweird.f32 %v5056
        %vm5318 = vweird.f32 %v5312
        %vm5319 = vmor %vm5317, %vm5318
        %v5320 = vsel %vm5319, %v5312, %v5316
        %v5321 = vand.u32 2147483647, %v5056
        %vm5322 = vcmp.eq.f32.partialorder %v5321, 8.507059e+37
        %v5323 = vand.u32 %v5056, 2147483648
        %v5324 = vor.u32 1.1754944e-38, %v5323
        %v5325 = vsel %vm5322, %v5324, %v5320
        %v5326 = vmul.f32 1.0, %v5325
        %v5327 = vrcp.pop %v5057
        %v5328 = vmul.f32 %v5057, %v5327
        %v5329 = vsub.f32 1.0, %v5328
        %v5330 = vmul.f32 %v5327, %v5329
        %v5331 = vadd.f32 %v5327, %v5330
        %vm5332 = vweird.f32 %v5057
        %vm5333 = vweird.f32 %v5327
        %vm5334 = vmor %vm5332, %vm5333
        %v5335 = vsel %vm5334, %v5327, %v5331
        %v5336 = vand.u32 2147483647, %v5057
        %vm5337 = vcmp.eq.f32.partialorder %v5336, 8.507059e+37
        %v5338 = vand.u32 %v5057, 2147483648
        %v5339 = vor.u32 1.1754944e-38, %v5338
        %v5340 = vsel %vm5337, %v5339, %v5335
        %v5341 = vmul.f32 1.0, %v5340
        %v5342 = vrcp.pop %v5058
        %v5343 = vmul.f32 %v5058, %v5342
        %v5344 = vsub.f32 1.0, %v5343
        %v5345 = vmul.f32 %v5342, %v5344
        %v5346 = vadd.f32 %v5342, %v5345
        %vm5347 = vweird.f32 %v5058
        %vm5348 = vweird.f32 %v5342
        %vm5349 = vmor %vm5347, %vm5348
        %v5350 = vsel %vm5349, %v5342, %v5346
        %v5351 = vand.u32 2147483647, %v5058
        %vm5352 = vcmp.eq.f32.partialorder %v5351, 8.507059e+37
        %v5353 = vand.u32 %v5058, 2147483648
        %v5354 = vor.u32 1.1754944e-38, %v5353
        %v5355 = vsel %vm5352, %v5354, %v5350
        %v5356 = vmul.f32 1.0, %v5355
        %v5357 = vrcp.pop %v5059
        %v5358 = vmul.f32 %v5059, %v5357
        %v5359 = vsub.f32 1.0, %v5358
        %v5360 = vmul.f32 %v5357, %v5359
        %v5361 = vadd.f32 %v5357, %v5360
        %vm5362 = vweird.f32 %v5059
        %vm5363 = vweird.f32 %v5357
        %vm5364 = vmor %vm5362, %vm5363
        %v5365 = vsel %vm5364, %v5357, %v5361
        %v5366 = vand.u32 2147483647, %v5059
        %vm5367 = vcmp.eq.f32.partialorder %v5366, 8.507059e+37
        %v5368 = vand.u32 %v5059, 2147483648
        %v5369 = vor.u32 1.1754944e-38, %v5368
        %v5370 = vsel %vm5367, %v5369, %v5365
        %v5371 = vmul.f32 1.0, %v5370
        %v5372 = vrcp.pop %v5060
        %v5373 = vmul.f32 %v5060, %v5372
        %v5374 = vsub.f32 1.0, %v5373
        %v5375 = vmul.f32 %v5372, %v5374
        %v5376 = vadd.f32 %v5372, %v5375
        %vm5377 = vweird.f32 %v5060
        %vm5378 = vweird.f32 %v5372
        %vm5379 = vmor %vm5377, %vm5378
        %v5380 = vsel %vm5379, %v5372, %v5376
        %v5381 = vand.u32 2147483647, %v5060
        %vm5382 = vcmp.eq.f32.partialorder %v5381, 8.507059e+37
        %v5383 = vand.u32 %v5060, 2147483648
        %v5384 = vor.u32 1.1754944e-38, %v5383
        %v5385 = vsel %vm5382, %v5384, %v5380
        %v5386 = vmul.f32 1.0, %v5385
        %v5387 = vrcp.pop %v5061
        %v5388 = vmul.f32 %v5061, %v5387
        %v5389 = vsub.f32 1.0, %v5388
        %v5390 = vmul.f32 %v5387, %v5389
        %v5391 = vadd.f32 %v5387, %v5390
        %vm5392 = vweird.f32 %v5061
        %vm5393 = vweird.f32 %v5387
        %vm5394 = vmor %vm5392, %vm5393
        %v5395 = vsel %vm5394, %v5387, %v5391
        %v5396 = vand.u32 2147483647, %v5061
        %vm5397 = vcmp.eq.f32.partialorder %v5396, 8.507059e+37
        %v5398 = vand.u32 %v5061, 2147483648
        %v5399 = vor.u32 1.1754944e-38, %v5398
        %v5400 = vsel %vm5397, %v5399, %v5395
        %v5401 = vmul.f32 1.0, %v5400
        %v5402 = vrcp.pop %v5062
        %v5403 = vmul.f32 %v5062, %v5402
        %v5404 = vsub.f32 1.0, %v5403
        %v5405 = vmul.f32 %v5402, %v5404
        %v5406 = vadd.f32 %v5402, %v5405
        %vm5407 = vweird.f32 %v5062
        %vm5408 = vweird.f32 %v5402
        %vm5409 = vmor %vm5407, %vm5408
        %v5410 = vsel %vm5409, %v5402, %v5406
        %v5411 = vand.u32 2147483647, %v5062
        %vm5412 = vcmp.eq.f32.partialorder %v5411, 8.507059e+37
        %v5413 = vand.u32 %v5062, 2147483648
        %v5414 = vor.u32 1.1754944e-38, %v5413
        %v5415 = vsel %vm5412, %v5414, %v5410
        %v5416 = vmul.f32 1.0, %v5415
        %v5417 = vrcp.pop %v5063
        %v5418 = vmul.f32 %v5063, %v5417
        %v5419 = vsub.f32 1.0, %v5418
        %v5420 = vmul.f32 %v5417, %v5419
        %v5421 = vadd.f32 %v5417, %v5420
        %vm5422 = vweird.f32 %v5063
        %vm5423 = vweird.f32 %v5417
        %vm5424 = vmor %vm5422, %vm5423
        %v5425 = vsel %vm5424, %v5417, %v5421
        %v5426 = vand.u32 2147483647, %v5063
        %vm5427 = vcmp.eq.f32.partialorder %v5426, 8.507059e+37
        %v5428 = vand.u32 %v5063, 2147483648
        %v5429 = vor.u32 1.1754944e-38, %v5428
        %v5430 = vsel %vm5427, %v5429, %v5425
        %v5431 = vmul.f32 1.0, %v5430
        %v5432 = vrcp.pop %v5064
        %v5433 = vmul.f32 %v5064, %v5432
        %v5434 = vsub.f32 1.0, %v5433
        %v5435 = vmul.f32 %v5432, %v5434
        %v5436 = vadd.f32 %v5432, %v5435
        %vm5437 = vweird.f32 %v5064
        %vm5438 = vweird.f32 %v5432
        %vm5439 = vmor %vm5437, %vm5438
        %v5440 = vsel %vm5439, %v5432, %v5436
        %v5441 = vand.u32 2147483647, %v5064
        %vm5442 = vcmp.eq.f32.partialorder %v5441, 8.507059e+37
        %v5443 = vand.u32 %v5064, 2147483648
        %v5444 = vor.u32 1.1754944e-38, %v5443
        %v5445 = vsel %vm5442, %v5444, %v5440
        %v5446 = vmul.f32 1.0, %v5445
        %v5447 = vrcp.pop %v5065
        %v5448 = vmul.f32 %v5065, %v5447
        %v5449 = vsub.f32 1.0, %v5448
        %v5450 = vmul.f32 %v5447, %v5449
        %v5451 = vadd.f32 %v5447, %v5450
        %vm5452 = vweird.f32 %v5065
        %vm5453 = vweird.f32 %v5447
        %vm5454 = vmor %vm5452, %vm5453
        %v5455 = vsel %vm5454, %v5447, %v5451
        %v5456 = vand.u32 2147483647, %v5065
        %vm5457 = vcmp.eq.f32.partialorder %v5456, 8.507059e+37
        %v5458 = vand.u32 %v5065, 2147483648
        %v5459 = vor.u32 1.1754944e-38, %v5458
        %v5460 = vsel %vm5457, %v5459, %v5455
        %v5461 = vmul.f32 1.0, %v5460
        %v5462 = vrcp.pop %v5066
        %v5463 = vmul.f32 %v5066, %v5462
        %v5464 = vsub.f32 1.0, %v5463
        %v5465 = vmul.f32 %v5462, %v5464
        %v5466 = vadd.f32 %v5462, %v5465
        %vm5467 = vweird.f32 %v5066
        %vm5468 = vweird.f32 %v5462
        %vm5469 = vmor %vm5467, %vm5468
        %v5470 = vsel %vm5469, %v5462, %v5466
        %v5471 = vand.u32 2147483647, %v5066
        %vm5472 = vcmp.eq.f32.partialorder %v5471, 8.507059e+37
        %v5473 = vand.u32 %v5066, 2147483648
        %v5474 = vor.u32 1.1754944e-38, %v5473
        %v5475 = vsel %vm5472, %v5474, %v5470
        %v5476 = vmul.f32 1.0, %v5475
        %v5477 = vrcp.pop %v5067
        %v5478 = vmul.f32 %v5067, %v5477
        %v5479 = vsub.f32 1.0, %v5478
        %v5480 = vmul.f32 %v5477, %v5479
        %v5481 = vadd.f32 %v5477, %v5480
        %vm5482 = vweird.f32 %v5067
        %vm5483 = vweird.f32 %v5477
        %vm5484 = vmor %vm5482, %vm5483
        %v5485 = vsel %vm5484, %v5477, %v5481
        %v5486 = vand.u32 2147483647, %v5067
        %vm5487 = vcmp.eq.f32.partialorder %v5486, 8.507059e+37
        %v5488 = vand.u32 %v5067, 2147483648
        %v5489 = vor.u32 1.1754944e-38, %v5488
        %v5490 = vsel %vm5487, %v5489, %v5485
        %v5491 = vmul.f32 1.0, %v5490
        %v5492 = vrcp.pop %v5068
        %v5493 = vmul.f32 %v5068, %v5492
        %v5494 = vsub.f32 1.0, %v5493
        %v5495 = vmul.f32 %v5492, %v5494
        %v5496 = vadd.f32 %v5492, %v5495
        %vm5497 = vweird.f32 %v5068
        %vm5498 = vweird.f32 %v5492
        %vm5499 = vmor %vm5497, %vm5498
        %v5500 = vsel %vm5499, %v5492, %v5496
        %v5501 = vand.u32 2147483647, %v5068
        %vm5502 = vcmp.eq.f32.partialorder %v5501, 8.507059e+37
        %v5503 = vand.u32 %v5068, 2147483648
        %v5504 = vor.u32 1.1754944e-38, %v5503
        %v5505 = vsel %vm5502, %v5504, %v5500
        %v5506 = vmul.f32 1.0, %v5505
        %v5507 = vrcp.pop %v5069
        %v5508 = vmul.f32 %v5069, %v5507
        %v5509 = vsub.f32 1.0, %v5508
        %v5510 = vmul.f32 %v5507, %v5509
        %v5511 = vadd.f32 %v5507, %v5510
        %vm5512 = vweird.f32 %v5069
        %vm5513 = vweird.f32 %v5507
        %vm5514 = vmor %vm5512, %vm5513
        %v5515 = vsel %vm5514, %v5507, %v5511
        %v5516 = vand.u32 2147483647, %v5069
        %vm5517 = vcmp.eq.f32.partialorder %v5516, 8.507059e+37
        %v5518 = vand.u32 %v5069, 2147483648
        %v5519 = vor.u32 1.1754944e-38, %v5518
        %v5520 = vsel %vm5517, %v5519, %v5515
        %v5521 = vmul.f32 1.0, %v5520
        %v5522 = vrcp.pop %v5070
        %v5523 = vmul.f32 %v5070, %v5522
        %v5524 = vsub.f32 1.0, %v5523
        %v5525 = vmul.f32 %v5522, %v5524
        %v5526 = vadd.f32 %v5522, %v5525
        %vm5527 = vweird.f32 %v5070
        %vm5528 = vweird.f32 %v5522
        %vm5529 = vmor %vm5527, %vm5528
        %v5530 = vsel %vm5529, %v5522, %v5526
        %v5531 = vand.u32 2147483647, %v5070
        %vm5532 = vcmp.eq.f32.partialorder %v5531, 8.507059e+37
        %v5533 = vand.u32 %v5070, 2147483648
        %v5534 = vor.u32 1.1754944e-38, %v5533
        %v5535 = vsel %vm5532, %v5534, %v5530
        %v5536 = vmul.f32 1.0, %v5535
        %v5537 = vrcp.pop %v5071
        %v5538 = vmul.f32 %v5071, %v5537
        %v5539 = vsub.f32 1.0, %v5538
        %v5540 = vmul.f32 %v5537, %v5539
        %v5541 = vadd.f32 %v5537, %v5540
        %vm5542 = vweird.f32 %v5071
        %vm5543 = vweird.f32 %v5537
        %vm5544 = vmor %vm5542, %vm5543
        %v5545 = vsel %vm5544, %v5537, %v5541
        %v5546 = vand.u32 2147483647, %v5071
        %vm5547 = vcmp.eq.f32.partialorder %v5546, 8.507059e+37
        %v5548 = vand.u32 %v5071, 2147483648
        %v5549 = vor.u32 1.1754944e-38, %v5548
        %v5550 = vsel %vm5547, %v5549, %v5545
        %v5551 = vmul.f32 1.0, %v5550
        %v5552 = vmul.f32 %v4912, %v5086
        %v5553 = vmul.f32 %v4913, %v5101
        %v5554 = vmul.f32 %v4914, %v5116
        %v5555 = vmul.f32 %v4915, %v5131
        %v5556 = vmul.f32 %v4916, %v5146
        %v5557 = vmul.f32 %v4917, %v5161
        %v5558 = vmul.f32 %v4918, %v5176
        %v5559 = vmul.f32 %v4919, %v5191
        %v5560 = vmul.f32 %v4920, %v5206
        %v5561 = vmul.f32 %v4921, %v5221
        %v5562 = vmul.f32 %v4922, %v5236
        %v5563 = vmul.f32 %v4923, %v5251
        %v5564 = vmul.f32 %v4924, %v5266
        %v5565 = vmul.f32 %v4925, %v5281
        %v5566 = vmul.f32 %v4926, %v5296
        %v5567 = vmul.f32 %v4927, %v5311
        %v5568 = vmul.f32 %v4928, %v5326
        %v5569 = vmul.f32 %v4929, %v5341
        %v5570 = vmul.f32 %v4930, %v5356
        %v5571 = vmul.f32 %v4931, %v5371
        %v5572 = vmul.f32 %v4932, %v5386
        %v5573 = vmul.f32 %v4933, %v5401
        %v5574 = vmul.f32 %v4934, %v5416
        %v5575 = vmul.f32 %v4935, %v5431
        %v5576 = vmul.f32 %v4936, %v5446
        %v5577 = vmul.f32 %v4937, %v5461
        %v5578 = vmul.f32 %v4938, %v5476
        %v5579 = vmul.f32 %v4939, %v5491
        %v5580 = vmul.f32 %v4940, %v5506
        %v5581 = vmul.f32 %v4941, %v5521
        %v5582 = vmul.f32 %v4942, %v5536
        %v5583 = vmul.f32 %v4943, %v5551
        %5584 = vst [vmem:[%s315] sm:$0xff] %v5552
        %5585 = vst [vmem:[%s315 + $0x8] sm:$0xff] %v5553
        %5586 = vst [vmem:[%s315 + $0x10] sm:$0xff] %v5554
        %5587 = vst [vmem:[%s315 + $0x18] sm:$0xff] %v5555
        %5588 = vst [vmem:[%s315 + $0x20] sm:$0xff] %v5556
        %5589 = vst [vmem:[%s315 + $0x28] sm:$0xff] %v5557
        %5590 = vst [vmem:[%s315 + $0x30] sm:$0xff] %v5558
        %5591 = vst [vmem:[%s315 + $0x38] sm:$0xff] %v5559
        %5592 = vst [vmem:[%s315 + $0x40] sm:$0xff] %v5560
        %5593 = vst [vmem:[%s315 + $0x48] sm:$0xff] %v5561
        %5594 = vst [vmem:[%s315 + $0x50] sm:$0xff] %v5562
        %5595 = vst [vmem:[%s315 + $0x58] sm:$0xff] %v5563
        %5596 = vst [vmem:[%s315 + $0x60] sm:$0xff] %v5564
        %5597 = vst [vmem:[%s315 + $0x68] sm:$0xff] %v5565
        %5598 = vst [vmem:[%s315 + $0x70] sm:$0xff] %v5566
        %5599 = vst [vmem:[%s315 + $0x78] sm:$0xff] %v5567
        %5600 = vst [vmem:[%s315 + $0x80] sm:$0xff] %v5568
        %5601 = vst [vmem:[%s315 + $0x88] sm:$0xff] %v5569
        %5602 = vst [vmem:[%s315 + $0x90] sm:$0xff] %v5570
        %5603 = vst [vmem:[%s315 + $0x98] sm:$0xff] %v5571
        %5604 = vst [vmem:[%s315 + $0xa0] sm:$0xff] %v5572
        %5605 = vst [vmem:[%s315 + $0xa8] sm:$0xff] %v5573
        %5606 = vst [vmem:[%s315 + $0xb0] sm:$0xff] %v5574
        %5607 = vst [vmem:[%s315 + $0xb8] sm:$0xff] %v5575
        %5608 = vst [vmem:[%s315 + $0xc0] sm:$0xff] %v5576
        %5609 = vst [vmem:[%s315 + $0xc8] sm:$0xff] %v5577
        %5610 = vst [vmem:[%s315 + $0xd0] sm:$0xff] %v5578
        %5611 = vst [vmem:[%s315 + $0xd8] sm:$0xff] %v5579
        %5612 = vst [vmem:[%s315 + $0xe0] sm:$0xff] %v5580
        %5613 = vst [vmem:[%s315 + $0xe8] sm:$0xff] %v5581
        %5614 = vst [vmem:[%s315 + $0xf0] sm:$0xff] %v5582
        %5615 = vst [vmem:[%s315 + $0xf8] sm:$0xff] %v5583
        %s5616 = sand.u32 %s185, 1
        %s5617 = scalar_lea.sflag [#allocation5], %s5616
        %s5618 = sand.u32 %s185, 1
        %s5619 = smul.addr %s5618, 256
        %s5620 = scalar_lea.vmem [#allocation8], %s5619
        // Predicated region
        $region57: #{tpu_custom_call.1} parent=47 // pred_check
          %p5621 = pneg %p195
        $region58: #{tpu_custom_call.1} parent=47 // pred_check_branch
          %5623 = sbr.rel (%p5621) target = $region60
        $region59: #{tpu_custom_call.1} parent=47 // pred_region
          %5625 = vsyncadd %s5617, 0
          %s5626 = smul.addr %s25, 32
          %s5627 = smul.addr %s5626, 8
          %s5628 = scalar_lea.hbm %s7, %s5627
          %s5629 = sshll.u32 %s5620, 4
          %s5630 = int_to_ptr.vmem [resolvable:$true] %s5629
          %s5631 = sshll.u32 %s5628, 4
          %s5632 = int_to_ptr.hbm [resolvable:$true] %s5631
          %5637 = dma.vmem_to_hbm [thread:$0]  %s5630, 4096, %s5632, %s5617, 128, 128, 8
        $region60: #{tpu_custom_call.1} parent=47 // pred_fallthru
          _
      $region48: #{tpu_custom_call.1} parent=5 // pred_fallthru
        _
      %p5638 = scmp.le.s32.totalorder 2, %s20
      // Predicated region
      $region61: #{tpu_custom_call.1} parent=5 // pred_check
        %p5639 = pneg %p5638
      $region62: #{tpu_custom_call.1} parent=5 // pred_check_branch
        %5641 = sbr.rel (%p5639) target = $region64
      $region63: #{tpu_custom_call.1} parent=5 // pred_region
        %s5642 = ssub.s32 %s20, 2
        // Predicated region
        $region65: #{tpu_custom_call.1} parent=63 // pred_check
          %p5643 = pneg %p201
        $region66: #{tpu_custom_call.1} parent=63 // pred_check_branch
          %5645 = sbr.rel (%p5643) target = $region68
        $region67: #{tpu_custom_call.1} parent=63 // pred_region
          %s5646 = sand.u32 %s186, 1
          %s5647 = scalar_lea.sflag [#allocation5], %s5646
          %s5648 = sand.u32 %s186, 1
          %s5649 = smul.addr %s5648, 256
          %s5650 = scalar_lea.vmem [#allocation8], %s5649
          %5652 = dma.done %s5647, 4096
        $region68: #{tpu_custom_call.1} parent=63 // pred_fallthru
          _
      $region64: #{tpu_custom_call.1} parent=5 // pred_fallthru
        _
    $region6: #{tpu_custom_call.1} parent=1 // loop_footer
      %s24 = sadd.s32 1, %s20
    $region7: #{tpu_custom_call.1} parent=1 // loop_footer_branch
      %19 = sbr.rel target = $region3
    $region8: #{tpu_custom_call.1} parent=1 // loop_exit
      _
    %5653 = vsyncpa [#allocation4], 1
    %s5654 = scalar_lea.sflag [#allocation4], 1
    %5655 = vsyncpa %s5654, 1
    %5656 = vsyncpa [#allocation7], 1
    %5657 = vsyncpa [#allocation5], 1
    %s5658 = scalar_lea.sflag [#allocation5], 1
    %5659 = vsyncpa %s5658, 1

</llo_original>
